<compile_context>
chip_gen: v6e
topology: v6e:2x2x1
jax: 0.10.0
libtpu: 0.0.40
codegen_flags: <defaults>
</compile_context>

<pallas_src>
import jax
import jax.numpy as jnp
from jax.experimental import pallas as pl
from jax.experimental.pallas import tpu as pltpu


# ---------------------------------------------------------------------------
# Pallas kernel: 6 fused matmul layers (layers 4&5 pre-fused), one batch tile
# per grid step.  Weights/biases have constant index_maps -> VMEM resident.
# ---------------------------------------------------------------------------
def _mlp_kernel(x_ref,
                w1, b1, w2, b2, w3, b3, w45, b45, w6, b6, w7, b7,
                o_ref):
    cdt = w1.dtype  # bf16 feeding the MXU

    def layer(h, w, b, relu=True):
        # MXU matmul with f32 accumulation; bias/ReLU epilogue stays f32
        # (v5e's VPU has no bf16 path; on v6e/v7x it is free under MXU slack).
        y = jnp.dot(h, w[...], preferred_element_type=jnp.float32) + b[...]
        if relu:
            y = jnp.maximum(y, 0.0)
        return y

    h = x_ref[...].astype(cdt)              # in-kernel f32 -> bf16 cast (no host pre-pass)
    h = layer(h, w1, b1).astype(cdt)        # 121 -> 768
    h = layer(h, w2, b2).astype(cdt)        # 768 -> 512
    h = layer(h, w3, b3).astype(cdt)        # 512 -> 256
    h = layer(h, w45, b45).astype(cdt)      # fused: (256 -> 2, no ReLU) then (2 -> 512, ReLU)
    h = layer(h, w6, b6).astype(cdt)        # 512 -> 512
    o_ref[...] = layer(h, w7, b7, relu=False).astype(o_ref.dtype)   # 512 -> 5(->128), bf16


# ---------------------------------------------------------------------------
# Host-side helpers.
# ---------------------------------------------------------------------------
def _round_up(n, m):
    return ((n + m - 1) // m) * m


def _pad_to(a, shape):
    widths = [(0, t - s) for s, t in zip(a.shape, shape)]
    if all(w == (0, 0) for w in widths):
        return a
    return jnp.pad(a, widths)


def _default_batch_tile():
    """v5e: 256-512 row tiles already amortize per-step overhead; v6e/v7x want 1024."""
    try:
        kind = jax.devices()[0].device_kind.lower()
    except Exception:
        kind = ""
    if "v5 lite" in kind or "v5e" in kind or "v5litepod" in kind:
        return 512
    return 1024


def _choose_batch_tile(B, tb_cap):
    tb_cap = min(tb_cap, 2048)            # v7x VMEM re-derivation: keep tiles <= 2048 rows
    if B <= 256:
        # Single small tile; multiple of 16 so bf16 tiles stay fully packed ((16,128) native).
        return _round_up(max(B, 16), 16)
    if B <= 2 * tb_cap:
        # Two tiles (multiples of 256 for the 256-wide MXU) -> both v7x TCs get a grid step.
        return _round_up(pl.cdiv(B, 2), 256)
    return tb_cap                          # large B: >= ~3-4 grid steps, fixed cost amortized


def init_fully_connected_enc_params(key, input_size=121, Lv=(768, 512, 256),
                                    out_size=2, proj_dim=5, Lvpj=(512, 128)):
    """Deterministic PyTorch-Linear-style init (uniform(-1/sqrt(fan_in), +1/sqrt(fan_in))).
    Weights are stored as [in, out] (transposed vs. torch's [out, in])."""
    dims = [
        (input_size, Lv[0]),
        (Lv[0], Lv[1]),
        (Lv[1], Lv[2]),
        (Lv[2], out_size),
        (out_size, Lvpj[0]),   # Projector depth=3: rep_dim -> hidden
        (Lvpj[0], Lvpj[0]),    #                    hidden  -> hidden
        (Lvpj[0], proj_dim),   #                    hidden  -> proj_dim
    ]
    params = []
    keys = jax.random.split(key, 2 * len(dims))
    for i, (fin, fout) in enumerate(dims):
        bound = 1.0 / (fin ** 0.5)
        w = jax.random.uniform(keys[2 * i], (fin, fout), jnp.float32, -bound, bound)
        b = jax.random.uniform(keys[2 * i + 1], (fout,), jnp.float32, -bound, bound)
        params.append((w, b))
    return params


def fully_connected_enc_forward(x, params, proj_dim=5,
                                compute_dtype=jnp.bfloat16, batch_tile=None):
    """x: [B, input_size] float32.  Returns [B, proj_dim] float32."""
    B, input_size = x.shape
    assert len(params) == 7

    # --- Exact algebraic fusion of layer 4 (no ReLU) and layer 5 through the 2-wide bottleneck.
    (w1, b1), (w2, b2), (w3, b3), (w4, b4), (w5, b5), (w6, b6), (w7, b7) = params
    w45 = w4 @ w5                 # [256, 512]   (f32, exact)
    b45 = b4 @ w5 + b5            # [512]
    layers = [(w1, b1), (w2, b2), (w3, b3), (w45, b45), (w6, b6), (w7, b7)]

    # --- Weights -> bf16; biases stay f32.  Only the final 5-wide output dim is padded to
    #     128 lanes (unmasked vst on the output tile).  x / w1 use legal full-dim 121 blocks,
    #     so no 121->128 pad pass is needed anywhere.
    out_p = _round_up(proj_dim, 128)
    wb_args = []
    for li, (w, b) in enumerate(layers):
        fin, fout = w.shape
        fout_p = out_p if li == len(layers) - 1 else fout
        wb_args.append(_pad_to(w, (fin, fout_p)).astype(compute_dtype))
        wb_args.append(_pad_to(b, (fout_p,)).reshape(1, fout_p).astype(jnp.float32))

    # --- Batch tiling.
    tb_cap = batch_tile if batch_tile is not None else _default_batch_tile()
    tb = _choose_batch_tile(B, tb_cap)
    b_pad = _round_up(B, tb)
    # Only the batch dim is ever padded (no feature pad / cast pass over x); no-op when
    # B is already a tile multiple.
    x_p = _pad_to(x, (b_pad, input_size))

    grid = (b_pad // tb,)
    x_spec = pl.BlockSpec((tb, input_size), lambda i: (i, 0))
    out_spec = pl.BlockSpec((tb, out_p), lambda i: (i, 0))
    # Constant index_maps: weights/biases are DMA'd once and stay VMEM-resident across steps.
    const_specs = [pl.BlockSpec(a.shape, lambda i: (0, 0)) for a in wb_args]

    out = pl.pallas_call(
        _mlp_kernel,
        out_shape=jax.ShapeDtypeStruct((b_pad, out_p), compute_dtype),   # bf16 writeback
        grid_spec=pltpu.PrefetchScalarGridSpec(
            num_scalar_prefetch=0,
            grid=grid,
            in_specs=[x_spec] + const_specs,
            out_specs=out_spec,
        ),
        compiler_params=pltpu.CompilerParams(
            dimension_semantics=("parallel",),   # batch tiles independent (v7x: 2 TCs)
            vmem_limit_bytes=48 << 20,           # <= 48 MiB; well under v7x's 64 MiB/TC
        ),
    )(x_p, *wb_args)

    return out[:B, :proj_dim].astype(jnp.float32)


# ---------------------------------------------------------------------------
# Pure-JAX f32 reference (unfused, unpadded) for sanity check.
# ---------------------------------------------------------------------------
def _ref_forward(x, params):
    h = x
    for i, (w, b) in enumerate(params):
        h = h @ w + b
        if i not in (3, 6):   # no ReLU after fcpart's last Linear and proj's last Linear
            h = jnp.maximum(h, 0.0)
    return h


if __name__ == "__main__":
    key = jax.random.PRNGKey(0)
    k_x, k_p, k_x2 = jax.random.split(key, 3)

    input_size, proj_dim = 121, 5
    params = init_fully_connected_enc_params(k_p, input_size=input_size, proj_dim=proj_dim)

    # --- Small single-tile case (B=8 -> one 16-row tile). ---
    B = 8
    x = jax.random.normal(k_x, (B, input_size), dtype=jnp.float32)
    y = jax.block_until_ready(fully_connected_enc_forward(x, params, proj_dim=proj_dim))
    y_ref = _ref_forward(x, params)
    assert y.shape == (B, proj_dim), y.shape
    assert y.dtype == jnp.float32
    # bf16 MXU inputs / bf16 writeback (f32 accumulation) vs pure-f32 reference.
    max_err = float(jnp.max(jnp.abs(y - y_ref)))
    assert jnp.allclose(y, y_ref, atol=5e-2, rtol=5e-2), max_err

    # --- Multi-tile case exercising the grid + batch-pad path (B=384 -> 2 x 256-row tiles). ---
    B2 = 384
    x2 = jax.random.normal(k_x2, (B2, input_size), dtype=jnp.float32)
    y2 = jax.block_until_ready(fully_connected_enc_forward(x2, params, proj_dim=proj_dim))
    y2_ref = _ref_forward(x2, params)
    assert y2.shape == (B2, proj_dim), y2.shape
    max_err2 = float(jnp.max(jnp.abs(y2 - y2_ref)))
    assert jnp.allclose(y2, y2_ref, atol=5e-2, rtol=5e-2), max_err2

    print("KERNEL_OK")
</pallas_src>

<mosaic_0001>
module attributes {stable_mosaic.version = 11 : i64} {
  func.func @_mlp_kernel(%arg0: i32, %arg1: memref<16x121xf32, #tpu.memory_space<vmem>>, %arg2: memref<121x768xbf16, #tpu.memory_space<vmem>>, %arg3: memref<1x768xf32, #tpu.memory_space<vmem>>, %arg4: memref<768x512xbf16, #tpu.memory_space<vmem>>, %arg5: memref<1x512xf32, #tpu.memory_space<vmem>>, %arg6: memref<512x256xbf16, #tpu.memory_space<vmem>>, %arg7: memref<1x256xf32, #tpu.memory_space<vmem>>, %arg8: memref<256x512xbf16, #tpu.memory_space<vmem>>, %arg9: memref<1x512xf32, #tpu.memory_space<vmem>>, %arg10: memref<512x512xbf16, #tpu.memory_space<vmem>>, %arg11: memref<1x512xf32, #tpu.memory_space<vmem>>, %arg12: memref<512x128xbf16, #tpu.memory_space<vmem>>, %arg13: memref<1x128xf32, #tpu.memory_space<vmem>>, %arg14: memref<16x128xbf16, #tpu.memory_space<vmem>>) attributes {dimension_semantics = [#tpu.dimension_semantics<parallel>], iteration_bounds = array<i64: 1>, scalar_prefetch = 0 : i64, scratch_operands = 0 : i64, tpu.core_type = #tpu.core_type<tc>, window_params = [{transform_indices = @transform_0, window_bounds = array<i64: 16, 121>}, {pipeline_mode = #tpu.pipeline_mode<synchronous>, transform_indices = @transform_1, window_bounds = array<i64: 121, 768>}, {pipeline_mode = #tpu.pipeline_mode<synchronous>, transform_indices = @transform_2, window_bounds = array<i64: 1, 768>}, {pipeline_mode = #tpu.pipeline_mode<synchronous>, transform_indices = @transform_3, window_bounds = array<i64: 768, 512>}, {pipeline_mode = #tpu.pipeline_mode<synchronous>, transform_indices = @transform_4, window_bounds = array<i64: 1, 512>}, {pipeline_mode = #tpu.pipeline_mode<synchronous>, transform_indices = @transform_5, window_bounds = array<i64: 512, 256>}, {pipeline_mode = #tpu.pipeline_mode<synchronous>, transform_indices = @transform_6, window_bounds = array<i64: 1, 256>}, {pipeline_mode = #tpu.pipeline_mode<synchronous>, transform_indices = @transform_7, window_bounds = array<i64: 256, 512>}, {pipeline_mode = #tpu.pipeline_mode<synchronous>, transform_indices = @transform_8, window_bounds = array<i64: 1, 512>}, {pipeline_mode = #tpu.pipeline_mode<synchronous>, transform_indices = @transform_9, window_bounds = array<i64: 512, 512>}, {pipeline_mode = #tpu.pipeline_mode<synchronous>, transform_indices = @transform_10, window_bounds = array<i64: 1, 512>}, {pipeline_mode = #tpu.pipeline_mode<synchronous>, transform_indices = @transform_11, window_bounds = array<i64: 512, 128>}, {pipeline_mode = #tpu.pipeline_mode<synchronous>, transform_indices = @transform_12, window_bounds = array<i64: 1, 128>}, {transform_indices = @transform_13, window_bounds = array<i64: 16, 128>}]} {
    %c0 = arith.constant 0 : index
    %c0_0 = arith.constant 0 : index
    %0 = vector.load %arg1[%c0, %c0_0] : memref<16x121xf32, #tpu.memory_space<vmem>>, vector<16x121xf32>
    %1 = arith.truncf %0 : vector<16x121xf32> to vector<16x121xbf16>
    %c0_1 = arith.constant 0 : index
    %c0_2 = arith.constant 0 : index
    %2 = vector.load %arg2[%c0_1, %c0_2] : memref<121x768xbf16, #tpu.memory_space<vmem>>, vector<121x768xbf16>
    %cst = arith.constant dense<0.000000e+00> : vector<16x768xf32>
    %3 = tpu.matmul %1, %2, %cst {dimension_numbers = #tpu.dot_dimension_numbers<[1], [0], [0], [1], [0, 0, 1, 1], [], []>} : vector<16x121xbf16>, vector<121x768xbf16>, vector<16x768xf32> -> vector<16x768xf32>
    %c0_3 = arith.constant 0 : index
    %c0_4 = arith.constant 0 : index
    %4 = vector.load %arg3[%c0_3, %c0_4] : memref<1x768xf32, #tpu.memory_space<vmem>>, vector<1x768xf32>
    %5 = vector.broadcast %4 : vector<1x768xf32> to vector<16x768xf32>
    %6 = arith.addf %3, %5 : vector<16x768xf32>
    %cst_5 = arith.constant 0.000000e+00 : f32
    %7 = vector.broadcast %cst_5 : f32 to vector<16x768xf32>
    %8 = arith.maximumf %6, %7 : vector<16x768xf32>
    %9 = arith.truncf %8 : vector<16x768xf32> to vector<16x768xbf16>
    %c0_6 = arith.constant 0 : index
    %c0_7 = arith.constant 0 : index
    %10 = vector.load %arg4[%c0_6, %c0_7] : memref<768x512xbf16, #tpu.memory_space<vmem>>, vector<768x512xbf16>
    %cst_8 = arith.constant dense<0.000000e+00> : vector<16x512xf32>
    %11 = tpu.matmul %9, %10, %cst_8 {dimension_numbers = #tpu.dot_dimension_numbers<[1], [0], [0], [1], [0, 0, 1, 1], [], []>} : vector<16x768xbf16>, vector<768x512xbf16>, vector<16x512xf32> -> vector<16x512xf32>
    %c0_9 = arith.constant 0 : index
    %c0_10 = arith.constant 0 : index
    %12 = vector.load %arg5[%c0_9, %c0_10] : memref<1x512xf32, #tpu.memory_space<vmem>>, vector<1x512xf32>
    %13 = vector.broadcast %12 : vector<1x512xf32> to vector<16x512xf32>
    %14 = arith.addf %11, %13 : vector<16x512xf32>
    %cst_11 = arith.constant 0.000000e+00 : f32
    %15 = vector.broadcast %cst_11 : f32 to vector<16x512xf32>
    %16 = arith.maximumf %14, %15 : vector<16x512xf32>
    %17 = arith.truncf %16 : vector<16x512xf32> to vector<16x512xbf16>
    %c0_12 = arith.constant 0 : index
    %c0_13 = arith.constant 0 : index
    %18 = vector.load %arg6[%c0_12, %c0_13] : memref<512x256xbf16, #tpu.memory_space<vmem>>, vector<512x256xbf16>
    %cst_14 = arith.constant dense<0.000000e+00> : vector<16x256xf32>
    %19 = tpu.matmul %17, %18, %cst_14 {dimension_numbers = #tpu.dot_dimension_numbers<[1], [0], [0], [1], [0, 0, 1, 1], [], []>} : vector<16x512xbf16>, vector<512x256xbf16>, vector<16x256xf32> -> vector<16x256xf32>
    %c0_15 = arith.constant 0 : index
    %c0_16 = arith.constant 0 : index
    %20 = vector.load %arg7[%c0_15, %c0_16] : memref<1x256xf32, #tpu.memory_space<vmem>>, vector<1x256xf32>
    %21 = vector.broadcast %20 : vector<1x256xf32> to vector<16x256xf32>
    %22 = arith.addf %19, %21 : vector<16x256xf32>
    %cst_17 = arith.constant 0.000000e+00 : f32
    %23 = vector.broadcast %cst_17 : f32 to vector<16x256xf32>
    %24 = arith.maximumf %22, %23 : vector<16x256xf32>
    %25 = arith.truncf %24 : vector<16x256xf32> to vector<16x256xbf16>
    %c0_18 = arith.constant 0 : index
    %c0_19 = arith.constant 0 : index
    %26 = vector.load %arg8[%c0_18, %c0_19] : memref<256x512xbf16, #tpu.memory_space<vmem>>, vector<256x512xbf16>
    %cst_20 = arith.constant dense<0.000000e+00> : vector<16x512xf32>
    %27 = tpu.matmul %25, %26, %cst_20 {dimension_numbers = #tpu.dot_dimension_numbers<[1], [0], [0], [1], [0, 0, 1, 1], [], []>} : vector<16x256xbf16>, vector<256x512xbf16>, vector<16x512xf32> -> vector<16x512xf32>
    %c0_21 = arith.constant 0 : index
    %c0_22 = arith.constant 0 : index
    %28 = vector.load %arg9[%c0_21, %c0_22] : memref<1x512xf32, #tpu.memory_space<vmem>>, vector<1x512xf32>
    %29 = vector.broadcast %28 : vector<1x512xf32> to vector<16x512xf32>
    %30 = arith.addf %27, %29 : vector<16x512xf32>
    %cst_23 = arith.constant 0.000000e+00 : f32
    %31 = vector.broadcast %cst_23 : f32 to vector<16x512xf32>
    %32 = arith.maximumf %30, %31 : vector<16x512xf32>
    %33 = arith.truncf %32 : vector<16x512xf32> to vector<16x512xbf16>
    %c0_24 = arith.constant 0 : index
    %c0_25 = arith.constant 0 : index
    %34 = vector.load %arg10[%c0_24, %c0_25] : memref<512x512xbf16, #tpu.memory_space<vmem>>, vector<512x512xbf16>
    %cst_26 = arith.constant dense<0.000000e+00> : vector<16x512xf32>
    %35 = tpu.matmul %33, %34, %cst_26 {dimension_numbers = #tpu.dot_dimension_numbers<[1], [0], [0], [1], [0, 0, 1, 1], [], []>} : vector<16x512xbf16>, vector<512x512xbf16>, vector<16x512xf32> -> vector<16x512xf32>
    %c0_27 = arith.constant 0 : index
    %c0_28 = arith.constant 0 : index
    %36 = vector.load %arg11[%c0_27, %c0_28] : memref<1x512xf32, #tpu.memory_space<vmem>>, vector<1x512xf32>
    %37 = vector.broadcast %36 : vector<1x512xf32> to vector<16x512xf32>
    %38 = arith.addf %35, %37 : vector<16x512xf32>
    %cst_29 = arith.constant 0.000000e+00 : f32
    %39 = vector.broadcast %cst_29 : f32 to vector<16x512xf32>
    %40 = arith.maximumf %38, %39 : vector<16x512xf32>
    %41 = arith.truncf %40 : vector<16x512xf32> to vector<16x512xbf16>
    %c0_30 = arith.constant 0 : index
    %c0_31 = arith.constant 0 : index
    %42 = vector.load %arg12[%c0_30, %c0_31] : memref<512x128xbf16, #tpu.memory_space<vmem>>, vector<512x128xbf16>
    %cst_32 = arith.constant dense<0.000000e+00> : vector<16x128xf32>
    %43 = tpu.matmul %41, %42, %cst_32 {dimension_numbers = #tpu.dot_dimension_numbers<[1], [0], [0], [1], [0, 0, 1, 1], [], []>} : vector<16x512xbf16>, vector<512x128xbf16>, vector<16x128xf32> -> vector<16x128xf32>
    %c0_33 = arith.constant 0 : index
    %c0_34 = arith.constant 0 : index
    %44 = vector.load %arg13[%c0_33, %c0_34] : memref<1x128xf32, #tpu.memory_space<vmem>>, vector<1x128xf32>
    %45 = vector.broadcast %44 : vector<1x128xf32> to vector<16x128xf32>
    %46 = arith.addf %43, %45 : vector<16x128xf32>
    %47 = arith.truncf %46 : vector<16x128xf32> to vector<16x128xbf16>
    %c0_35 = arith.constant 0 : index
    %c0_36 = arith.constant 0 : index
    %48 = vector.load %arg14[%c0_35, %c0_36] : memref<16x128xbf16, #tpu.memory_space<vmem>>, vector<16x128xbf16>
    tpu.vector_store %arg14[%c0_35, %c0_36], %47 {strides = array<i32>} : memref<16x128xbf16, #tpu.memory_space<vmem>>, vector<16x128xbf16>,
    return
  }
  func.func @transform_0(%arg0: i32) -> (i32, i32) {
    %c0_i32 = arith.constant 0 : i32
    %c0_i32_0 = arith.constant 0 : i32
    return %arg0, %c0_i32 : i32, i32
  }
  func.func @transform_1(%arg0: i32) -> (i32, i32) {
    %c0_i32 = arith.constant 0 : i32
    %c0_i32_0 = arith.constant 0 : i32
    %c0_i32_1 = arith.constant 0 : i32
    return %c0_i32, %c0_i32_0 : i32, i32
  }
  func.func @transform_2(%arg0: i32) -> (i32, i32) {
    %c0_i32 = arith.constant 0 : i32
    %c0_i32_0 = arith.constant 0 : i32
    %c0_i32_1 = arith.constant 0 : i32
    return %c0_i32, %c0_i32_0 : i32, i32
  }
  func.func @transform_3(%arg0: i32) -> (i32, i32) {
    %c0_i32 = arith.constant 0 : i32
    %c0_i32_0 = arith.constant 0 : i32
    %c0_i32_1 = arith.constant 0 : i32
    return %c0_i32, %c0_i32_0 : i32, i32
  }
  func.func @transform_4(%arg0: i32) -> (i32, i32) {
    %c0_i32 = arith.constant 0 : i32
    %c0_i32_0 = arith.constant 0 : i32
    %c0_i32_1 = arith.constant 0 : i32
    return %c0_i32, %c0_i32_0 : i32, i32
  }
  func.func @transform_5(%arg0: i32) -> (i32, i32) {
    %c0_i32 = arith.constant 0 : i32
    %c0_i32_0 = arith.constant 0 : i32
    %c0_i32_1 = arith.constant 0 : i32
    return %c0_i32, %c0_i32_0 : i32, i32
  }
  func.func @transform_6(%arg0: i32) -> (i32, i32) {
    %c0_i32 = arith.constant 0 : i32
    %c0_i32_0 = arith.constant 0 : i32
    %c0_i32_1 = arith.constant 0 : i32
    return %c0_i32, %c0_i32_0 : i32, i32
  }
  func.func @transform_7(%arg0: i32) -> (i32, i32) {
    %c0_i32 = arith.constant 0 : i32
    %c0_i32_0 = arith.constant 0 : i32
    %c0_i32_1 = arith.constant 0 : i32
    return %c0_i32, %c0_i32_0 : i32, i32
  }
  func.func @transform_8(%arg0: i32) -> (i32, i32) {
    %c0_i32 = arith.constant 0 : i32
    %c0_i32_0 = arith.constant 0 : i32
    %c0_i32_1 = arith.constant 0 : i32
    return %c0_i32, %c0_i32_0 : i32, i32
  }
  func.func @transform_9(%arg0: i32) -> (i32, i32) {
    %c0_i32 = arith.constant 0 : i32
    %c0_i32_0 = arith.constant 0 : i32
    %c0_i32_1 = arith.constant 0 : i32
    return %c0_i32, %c0_i32_0 : i32, i32
  }
  func.func @transform_10(%arg0: i32) -> (i32, i32) {
    %c0_i32 = arith.constant 0 : i32
    %c0_i32_0 = arith.constant 0 : i32
    %c0_i32_1 = arith.constant 0 : i32
    return %c0_i32, %c0_i32_0 : i32, i32
  }
  func.func @transform_11(%arg0: i32) -> (i32, i32) {
    %c0_i32 = arith.constant 0 : i32
    %c0_i32_0 = arith.constant 0 : i32
    %c0_i32_1 = arith.constant 0 : i32
    return %c0_i32, %c0_i32_0 : i32, i32
  }
  func.func @transform_12(%arg0: i32) -> (i32, i32) {
    %c0_i32 = arith.constant 0 : i32
    %c0_i32_0 = arith.constant 0 : i32
    %c0_i32_1 = arith.constant 0 : i32
    return %c0_i32, %c0_i32_0 : i32, i32
  }
  func.func @transform_13(%arg0: i32) -> (i32, i32) {
    %c0_i32 = arith.constant 0 : i32
    %c0_i32_0 = arith.constant 0 : i32
    return %arg0, %c0_i32 : i32, i32
  }
}

</mosaic_0001>

<llo_original>
// kernel: tpu_custom_call.1
$region0: #{tpu_custom_call.1}
  #allocation0 [shape = 'u32[]', space=smem, size = 0x4, offset = 0x4, fixed_abs, tag = 'smem constant byte address 0x4 - core index']
  #allocation1 [shape = 'u32[144,128]{1,0:T(1,128)}', space=vmem, size = 0x12000, scoped, tag = 'internal scratch']
  %s0 = inlined_call_operand.hbm [shape: f32[16,121], index: 0, kind: input, shape index: {}]
  %s1 = inlined_call_operand.hbm [shape: bf16[121,768], index: 1, kind: input, shape index: {}]
  %s2 = inlined_call_operand.hbm [shape: f32[1,768], index: 2, kind: input, shape index: {}]
  %s3 = inlined_call_operand.hbm [shape: bf16[768,512], index: 3, kind: input, shape index: {}]
  %s4 = inlined_call_operand.vmem [shape: f32[1,512], index: 4, kind: input, shape index: {}]
  %s5 = inlined_call_operand.hbm [shape: bf16[512,256], index: 5, kind: input, shape index: {}]
  %s6 = inlined_call_operand.hbm [shape: f32[1,256], index: 6, kind: input, shape index: {}]
  %s7 = inlined_call_operand.hbm [shape: bf16[256,512], index: 7, kind: input, shape index: {}]
  %s8 = inlined_call_operand.vmem [shape: f32[1,512], index: 8, kind: input, shape index: {}]
  %s9 = inlined_call_operand.hbm [shape: bf16[512,512], index: 9, kind: input, shape index: {}]
  %s10 = inlined_call_operand.vmem [shape: f32[1,512], index: 10, kind: input, shape index: {}]
  %s11 = inlined_call_operand.hbm [shape: bf16[512,128], index: 11, kind: input, shape index: {}]
  %s12 = inlined_call_operand.vmem [shape: f32[1,128], index: 12, kind: input, shape index: {}]
  %s13 = inlined_call_operand.hbm [shape: bf16[16,128], index: 13, kind: output, shape index: {}]
  %s14 = sld [smem:[#allocation0]]
  $region98: #{tpu_custom_call.1} parent=0
    _
  %s16 = ssub.s32 1, %s14
  %s17 = scalar_select 0, %s16, %s14
  $region1: #{tpu_custom_call.1} parent=0
    #allocation2 [shape = 'u8[8192]{0}', space=vmem, size = 0x2000, scoped, tag = 'input window, operand 0, single buffered']
    #allocation3 [shape = 's32[1]{0}', space=sflag, size = 0x4, scoped, tag = 'scoped memory for tpu_custom_call.1']
    #allocation4 [shape = 's32[1]{0}', space=sflag, size = 0x4, scoped, tag = 'scoped memory for tpu_custom_call.1']
    #allocation5 [shape = 'u8[196608]{0}', space=vmem, size = 0x30000, scoped, tag = 'input window, operand 1, single buffered']
    #allocation6 [shape = 's32[1]{0}', space=sflag, size = 0x4, scoped, tag = 'scoped memory for tpu_custom_call.1']
    #allocation7 [shape = 'u8[3072]{0}', space=vmem, size = 0xc00, scoped, tag = 'input window, operand 2, single buffered']
    #allocation8 [shape = 'u8[786432]{0}', space=vmem, size = 0xc0000, scoped, tag = 'input window, operand 3, single buffered']
    #allocation9 [shape = 's32[1]{0}', space=sflag, size = 0x4, scoped, tag = 'scoped memory for tpu_custom_call.1']
    #allocation10 [shape = 'u8[262144]{0}', space=vmem, size = 0x40000, scoped, tag = 'input window, operand 5, single buffered']
    #allocation11 [shape = 'u8[1024]{0}', space=vmem, size = 0x400, scoped, tag = 'input window, operand 6, single buffered']
    #allocation12 [shape = 's32[1]{0}', space=sflag, size = 0x4, scoped, tag = 'scoped memory for tpu_custom_call.1']
    #allocation13 [shape = 'u8[262144]{0}', space=vmem, size = 0x40000, scoped, tag = 'input window, operand 7, single buffered']
    #allocation14 [shape = 'u8[524288]{0}', space=vmem, size = 0x80000, scoped, tag = 'input window, operand 9, single buffered']
    #allocation15 [shape = 's32[1]{0}', space=sflag, size = 0x4, scoped, tag = 'scoped memory for tpu_custom_call.1']
    #allocation16 [shape = 'u8[131072]{0}', space=vmem, size = 0x20000, scoped, tag = 'input window, operand 11, single buffered']
    #allocation17 [shape = 'u8[4096]{0}', space=vmem, size = 0x1000, scoped, tag = 'output window, operand 0, single buffered']
    %18 = vsyncpa [#allocation3], 0
    %19 = vsyncpa [#allocation6], 0
    %20 = vsyncpa [#allocation9], 0
    %21 = vsyncpa [#allocation12], 0
    %22 = vsyncpa [#allocation15], 0
    %23 = vsyncpa [#allocation4], 0
    // Predicated region
    $region2: #{tpu_custom_call.1} parent=1 // pred_check
      _
    $region3: #{tpu_custom_call.1} parent=1 // pred_check_branch
      %25 = sbr.rel (0) target = $region5
    $region4: #{tpu_custom_call.1} parent=1 // pred_region
      %s27 = ssub.s32 256, 256
      %28 = vsyncadd [#allocation3], %s27
      %s29 = sshll.u32 [#allocation2], 4
      %s30 = int_to_ptr.vmem [resolvable:$true] %s29
      %35 = dma.hbm_to_vmem [thread:$0]  %s0, 256, %s30, [#allocation3], 128, 128, 8
    $region5: #{tpu_custom_call.1} parent=1 // pred_fallthru
      _
    // Predicated region
    $region6: #{tpu_custom_call.1} parent=1 // pred_check
      _
    $region7: #{tpu_custom_call.1} parent=1 // pred_check_branch
      %37 = sbr.rel (0) target = $region9
    $region8: #{tpu_custom_call.1} parent=1 // pred_region
      %s39 = ssub.s32 6144, 6144
      %40 = vsyncadd [#allocation6], %s39
      %s41 = sshll.u32 [#allocation5], 4
      %s42 = int_to_ptr.vmem [resolvable:$true] %s41
      %47 = dma.hbm_to_vmem [thread:$0]  %s1, 6144, %s42, [#allocation6], 384, 384, 24
    $region9: #{tpu_custom_call.1} parent=1 // pred_fallthru
      _
    // Predicated region
    $region10: #{tpu_custom_call.1} parent=1 // pred_check
      _
    $region11: #{tpu_custom_call.1} parent=1 // pred_check_branch
      %49 = sbr.rel (0) target = $region13
    $region12: #{tpu_custom_call.1} parent=1 // pred_region
      %s51 = ssub.s32 96, 96
      %52 = vsyncadd [#allocation6], %s51
      %s54 = sshll.u32 [#allocation7], 4
      %s55 = int_to_ptr.vmem [resolvable:$true] %s54
      %57 = dma.hbm_to_vmem [thread:$0]  %s2, 96, %s55, [#allocation6]
    $region13: #{tpu_custom_call.1} parent=1 // pred_fallthru
      _
    // Predicated region
    $region14: #{tpu_custom_call.1} parent=1 // pred_check
      _
    $region15: #{tpu_custom_call.1} parent=1 // pred_check_branch
      %59 = sbr.rel (0) target = $region17
    $region16: #{tpu_custom_call.1} parent=1 // pred_region
      %s61 = ssub.s32 24576, 24576
      %62 = vsyncadd [#allocation9], %s61
      %s63 = sshll.u32 [#allocation8], 4
      %s64 = int_to_ptr.vmem [resolvable:$true] %s63
      %69 = dma.hbm_to_vmem [thread:$0]  %s3, 24576, %s64, [#allocation9], 256, 256, 16
    $region17: #{tpu_custom_call.1} parent=1 // pred_fallthru
      _
    // Predicated region
    $region18: #{tpu_custom_call.1} parent=1 // pred_check
      _
    $region19: #{tpu_custom_call.1} parent=1 // pred_check_branch
      %71 = sbr.rel (0) target = $region21
    $region20: #{tpu_custom_call.1} parent=1 // pred_region
      _
    $region21: #{tpu_custom_call.1} parent=1 // pred_fallthru
      _
    // Predicated region
    $region22: #{tpu_custom_call.1} parent=1 // pred_check
      _
    $region23: #{tpu_custom_call.1} parent=1 // pred_check_branch
      %73 = sbr.rel (0) target = $region25
    $region24: #{tpu_custom_call.1} parent=1 // pred_region
      %s75 = ssub.s32 8192, 8192
      %76 = vsyncadd [#allocation9], %s75
      %s77 = sshll.u32 [#allocation10], 4
      %s78 = int_to_ptr.vmem [resolvable:$true] %s77
      %83 = dma.hbm_to_vmem [thread:$0]  %s5, 8192, %s78, [#allocation9], 128, 128, 8
    $region25: #{tpu_custom_call.1} parent=1 // pred_fallthru
      _
    // Predicated region
    $region26: #{tpu_custom_call.1} parent=1 // pred_check
      _
    $region27: #{tpu_custom_call.1} parent=1 // pred_check_branch
      %85 = sbr.rel (0) target = $region29
    $region28: #{tpu_custom_call.1} parent=1 // pred_region
      %s87 = ssub.s32 32, 32
      %88 = vsyncadd [#allocation12], %s87
      %s90 = sshll.u32 [#allocation11], 4
      %s91 = int_to_ptr.vmem [resolvable:$true] %s90
      %93 = dma.hbm_to_vmem [thread:$0]  %s6, 32, %s91, [#allocation12]
    $region29: #{tpu_custom_call.1} parent=1 // pred_fallthru
      _
    // Predicated region
    $region30: #{tpu_custom_call.1} parent=1 // pred_check
      _
    $region31: #{tpu_custom_call.1} parent=1 // pred_check_branch
      %95 = sbr.rel (0) target = $region33
    $region32: #{tpu_custom_call.1} parent=1 // pred_region
      %s97 = ssub.s32 8192, 8192
      %98 = vsyncadd [#allocation12], %s97
      %s99 = sshll.u32 [#allocation13], 4
      %s100 = int_to_ptr.vmem [resolvable:$true] %s99
      %105 = dma.hbm_to_vmem [thread:$0]  %s7, 8192, %s100, [#allocation12], 256, 256, 16
    $region33: #{tpu_custom_call.1} parent=1 // pred_fallthru
      _
    // Predicated region
    $region34: #{tpu_custom_call.1} parent=1 // pred_check
      _
    $region35: #{tpu_custom_call.1} parent=1 // pred_check_branch
      %107 = sbr.rel (0) target = $region37
    $region36: #{tpu_custom_call.1} parent=1 // pred_region
      _
    $region37: #{tpu_custom_call.1} parent=1 // pred_fallthru
      _
    // Predicated region
    $region38: #{tpu_custom_call.1} parent=1 // pred_check
      _
    $region39: #{tpu_custom_call.1} parent=1 // pred_check_branch
      %109 = sbr.rel (0) target = $region41
    $region40: #{tpu_custom_call.1} parent=1 // pred_region
      %s111 = ssub.s32 16384, 16384
      %112 = vsyncadd [#allocation15], %s111
      %s113 = sshll.u32 [#allocation14], 4
      %s114 = int_to_ptr.vmem [resolvable:$true] %s113
      %119 = dma.hbm_to_vmem [thread:$0]  %s9, 16384, %s114, [#allocation15], 256, 256, 16
    $region41: #{tpu_custom_call.1} parent=1 // pred_fallthru
      _
    // Predicated region
    $region42: #{tpu_custom_call.1} parent=1 // pred_check
      _
    $region43: #{tpu_custom_call.1} parent=1 // pred_check_branch
      %121 = sbr.rel (0) target = $region45
    $region44: #{tpu_custom_call.1} parent=1 // pred_region
      _
    $region45: #{tpu_custom_call.1} parent=1 // pred_fallthru
      _
    // Predicated region
    $region46: #{tpu_custom_call.1} parent=1 // pred_check
      _
    $region47: #{tpu_custom_call.1} parent=1 // pred_check_branch
      %123 = sbr.rel (0) target = $region49
    $region48: #{tpu_custom_call.1} parent=1 // pred_region
      %s125 = ssub.s32 4096, 4096
      %126 = vsyncadd [#allocation15], %s125
      %s127 = sshll.u32 [#allocation16], 4
      %s128 = int_to_ptr.vmem [resolvable:$true] %s127
      %133 = dma.hbm_to_vmem [thread:$0]  %s11, 4096, %s128, [#allocation15], 64, 64, 4
    $region49: #{tpu_custom_call.1} parent=1 // pred_fallthru
      _
    // Predicated region
    $region50: #{tpu_custom_call.1} parent=1 // pred_check
      _
    $region51: #{tpu_custom_call.1} parent=1 // pred_check_branch
      %135 = sbr.rel (0) target = $region53
    $region52: #{tpu_custom_call.1} parent=1 // pred_region
      _
    $region53: #{tpu_custom_call.1} parent=1 // pred_fallthru
      _
    // Predicated region
    $region54: #{tpu_custom_call.1} parent=1 // pred_check
      _
    $region55: #{tpu_custom_call.1} parent=1 // pred_check_branch
      %137 = sbr.rel (0) target = $region57
    $region56: #{tpu_custom_call.1} parent=1 // pred_region
      %138 = dma.done [#allocation3], 256
    $region57: #{tpu_custom_call.1} parent=1 // pred_fallthru
      _
    // Predicated region
    $region58: #{tpu_custom_call.1} parent=1 // pred_check
      _
    $region59: #{tpu_custom_call.1} parent=1 // pred_check_branch
      %140 = sbr.rel (0) target = $region61
    $region60: #{tpu_custom_call.1} parent=1 // pred_region
      %141 = dma.done [#allocation6], 6144
    $region61: #{tpu_custom_call.1} parent=1 // pred_fallthru
      _
    // Predicated region
    $region62: #{tpu_custom_call.1} parent=1 // pred_check
      _
    $region63: #{tpu_custom_call.1} parent=1 // pred_check_branch
      %143 = sbr.rel (0) target = $region65
    $region64: #{tpu_custom_call.1} parent=1 // pred_region
      %144 = dma.done [#allocation6], 96
    $region65: #{tpu_custom_call.1} parent=1 // pred_fallthru
      _
    // Predicated region
    $region66: #{tpu_custom_call.1} parent=1 // pred_check
      _
    $region67: #{tpu_custom_call.1} parent=1 // pred_check_branch
      %146 = sbr.rel (0) target = $region69
    $region68: #{tpu_custom_call.1} parent=1 // pred_region
      %147 = dma.done [#allocation9], 24576
    $region69: #{tpu_custom_call.1} parent=1 // pred_fallthru
      _
    // Predicated region
    $region70: #{tpu_custom_call.1} parent=1 // pred_check
      _
    $region71: #{tpu_custom_call.1} parent=1 // pred_check_branch
      %149 = sbr.rel (0) target = $region73
    $region72: #{tpu_custom_call.1} parent=1 // pred_region
      %150 = dma.done [#allocation9], 8192
    $region73: #{tpu_custom_call.1} parent=1 // pred_fallthru
      _
    // Predicated region
    $region74: #{tpu_custom_call.1} parent=1 // pred_check
      _
    $region75: #{tpu_custom_call.1} parent=1 // pred_check_branch
      %152 = sbr.rel (0) target = $region77
    $region76: #{tpu_custom_call.1} parent=1 // pred_region
      %153 = dma.done [#allocation12], 32
    $region77: #{tpu_custom_call.1} parent=1 // pred_fallthru
      _
    // Predicated region
    $region78: #{tpu_custom_call.1} parent=1 // pred_check
      _
    $region79: #{tpu_custom_call.1} parent=1 // pred_check_branch
      %155 = sbr.rel (0) target = $region81
    $region80: #{tpu_custom_call.1} parent=1 // pred_region
      %156 = dma.done [#allocation12], 8192
    $region81: #{tpu_custom_call.1} parent=1 // pred_fallthru
      _
    // Predicated region
    $region82: #{tpu_custom_call.1} parent=1 // pred_check
      _
    $region83: #{tpu_custom_call.1} parent=1 // pred_check_branch
      %158 = sbr.rel (0) target = $region85
    $region84: #{tpu_custom_call.1} parent=1 // pred_region
      %159 = dma.done [#allocation15], 16384
    $region85: #{tpu_custom_call.1} parent=1 // pred_fallthru
      _
    // Predicated region
    $region86: #{tpu_custom_call.1} parent=1 // pred_check
      _
    $region87: #{tpu_custom_call.1} parent=1 // pred_check_branch
      %161 = sbr.rel (0) target = $region89
    $region88: #{tpu_custom_call.1} parent=1 // pred_region
      %162 = dma.done [#allocation15], 4096
    $region89: #{tpu_custom_call.1} parent=1 // pred_fallthru
      _
    %v164 = vld [vmem:[#allocation2] sm:$0xff]
    %v165 = vld [vmem:[#allocation2 + $0x8] sm:$0xff]
    %v166 = vpack.c.bf16 %v165, %v164
    %v167 = vld [vmem:[#allocation5] sm:$0xff]
    %v168 = vld [vmem:[#allocation5 + $0x8] sm:$0xff]
    %v169 = vld [vmem:[#allocation5 + $0x10] sm:$0xff]
    %v170 = vld [vmem:[#allocation5 + $0x18] sm:$0xff]
    %v171 = vld [vmem:[#allocation5 + $0x20] sm:$0xff]
    %v172 = vld [vmem:[#allocation5 + $0x28] sm:$0xff]
    %v173 = vld [vmem:[#allocation5 + $0x30] sm:$0xff]
    %v174 = vld [vmem:[#allocation5 + $0x38] sm:$0xff]
    %v175 = vld [vmem:[#allocation5 + $0x40] sm:$0xff]
    %v176 = vld [vmem:[#allocation5 + $0x48] sm:$0xff]
    %v177 = vld [vmem:[#allocation5 + $0x50] sm:$0xff]
    %v178 = vld [vmem:[#allocation5 + $0x58] sm:$0xff]
    %v179 = vld [vmem:[#allocation5 + $0x60] sm:$0xff]
    %v180 = vld [vmem:[#allocation5 + $0x68] sm:$0xff]
    %v181 = vld [vmem:[#allocation5 + $0x70] sm:$0xff]
    %v182 = vld [vmem:[#allocation5 + $0x78] sm:$0xff]
    %v183 = vld [vmem:[#allocation5 + $0x80] sm:$0xff]
    %v184 = vld [vmem:[#allocation5 + $0x88] sm:$0xff]
    %v185 = vld [vmem:[#allocation5 + $0x90] sm:$0xff]
    %v186 = vld [vmem:[#allocation5 + $0x98] sm:$0xff]
    %v187 = vld [vmem:[#allocation5 + $0xa0] sm:$0xff]
    %v188 = vld [vmem:[#allocation5 + $0xa8] sm:$0xff]
    %v189 = vld [vmem:[#allocation5 + $0xb0] sm:$0xff]
    %v190 = vld [vmem:[#allocation5 + $0xb8] sm:$0xff]
    %v191 = vld [vmem:[#allocation5 + $0xc0] sm:$0xff]
    %v192 = vld [vmem:[#allocation5 + $0xc8] sm:$0xff]
    %v193 = vld [vmem:[#allocation5 + $0xd0] sm:$0xff]
    %v194 = vld [vmem:[#allocation5 + $0xd8] sm:$0xff]
    %v195 = vld [vmem:[#allocation5 + $0xe0] sm:$0xff]
    %v196 = vld [vmem:[#allocation5 + $0xe8] sm:$0xff]
    %v197 = vld [vmem:[#allocation5 + $0xf0] sm:$0xff]
    %v198 = vld [vmem:[#allocation5 + $0xf8] sm:$0xff]
    %v199 = vld [vmem:[#allocation5 + $0x100] sm:$0xff]
    %v200 = vld [vmem:[#allocation5 + $0x108] sm:$0xff]
    %v201 = vld [vmem:[#allocation5 + $0x110] sm:$0xff]
    %v202 = vld [vmem:[#allocation5 + $0x118] sm:$0xff]
    %v203 = vld [vmem:[#allocation5 + $0x120] sm:$0xff]
    %v204 = vld [vmem:[#allocation5 + $0x128] sm:$0xff]
    %v205 = vld [vmem:[#allocation5 + $0x130] sm:$0xff]
    %v206 = vld [vmem:[#allocation5 + $0x138] sm:$0xff]
    %v207 = vld [vmem:[#allocation5 + $0x140] sm:$0xff]
    %v208 = vld [vmem:[#allocation5 + $0x148] sm:$0xff]
    %v209 = vld [vmem:[#allocation5 + $0x150] sm:$0xff]
    %v210 = vld [vmem:[#allocation5 + $0x158] sm:$0xff]
    %v211 = vld [vmem:[#allocation5 + $0x160] sm:$0xff]
    %v212 = vld [vmem:[#allocation5 + $0x168] sm:$0x11]
    %v213 = vld [vmem:[#allocation5 + $0x170] sm:$0x11]
    %v214 = vld [vmem:[#allocation5 + $0x178] sm:$0x11]
    %v215 = vld [vmem:[#allocation7] sm:$0x3f]
    %v217 = vlaneseq
    %v218 = vshrl.u32 %v217, 7
    %v219 = vsub.s32 0, %v218
    %v220 = vrot.slane %v215, %v219
    %v221 = vlaneseq
    %v222 = vshrl.u32 %v221, 7
    %v223 = vsub.s32 1, %v222
    %v224 = vrot.slane %v215, %v223
    %v225 = vlaneseq
    %v226 = vshrl.u32 %v225, 7
    %v227 = vsub.s32 2, %v226
    %v228 = vrot.slane %v215, %v227
    %v229 = vlaneseq
    %v230 = vshrl.u32 %v229, 7
    %v231 = vsub.s32 3, %v230
    %v232 = vrot.slane %v215, %v231
    %v233 = vlaneseq
    %v234 = vshrl.u32 %v233, 7
    %v235 = vsub.s32 4, %v234
    %v236 = vrot.slane %v215, %v235
    %v237 = vlaneseq
    %v238 = vshrl.u32 %v237, 7
    %v239 = vsub.s32 5, %v238
    %v240 = vrot.slane %v215, %v239
    %v295 = vunpack.c.l.b16 %v167
    %v296 = vunpack.c.h.b16 %v167
    %v297 = vunpack.c.l.b16 %v168
    %v298 = vunpack.c.h.b16 %v168
    %v299 = vunpack.c.l.b16 %v169
    %v300 = vunpack.c.h.b16 %v169
    %v301 = vunpack.c.l.b16 %v170
    %v302 = vunpack.c.h.b16 %v170
    %v303 = vunpack.c.l.b16 %v171
    %v304 = vunpack.c.h.b16 %v171
    %v305 = vunpack.c.l.b16 %v172
    %v306 = vunpack.c.h.b16 %v172
    %v307 = vunpack.c.l.b16 %v173
    %v308 = vunpack.c.h.b16 %v173
    %v309 = vunpack.c.l.b16 %v174
    %v310 = vunpack.c.h.b16 %v174
    %v311 = vunpack.c.l.b16 %v175
    %v312 = vunpack.c.h.b16 %v175
    %v313 = vunpack.c.l.b16 %v176
    %v314 = vunpack.c.h.b16 %v176
    %v315 = vunpack.c.l.b16 %v177
    %v316 = vunpack.c.h.b16 %v177
    %v317 = vunpack.c.l.b16 %v178
    %v318 = vunpack.c.h.b16 %v178
    %v319 = vunpack.c.l.b16 %v179
    %v320 = vunpack.c.h.b16 %v179
    %v321 = vunpack.c.l.b16 %v180
    %v322 = vunpack.c.h.b16 %v180
    %v323 = vunpack.c.l.b16 %v181
    %v324 = vunpack.c.h.b16 %v181
    %v325 = vunpack.c.l.b16 %v182
    %v326 = vunpack.c.h.b16 %v182
    %v327 = vunpack.c.l.b16 %v183
    %v328 = vunpack.c.h.b16 %v183
    %v329 = vunpack.c.l.b16 %v184
    %v330 = vunpack.c.h.b16 %v184
    %v331 = vunpack.c.l.b16 %v185
    %v332 = vunpack.c.h.b16 %v185
    %v333 = vunpack.c.l.b16 %v186
    %v334 = vunpack.c.h.b16 %v186
    %v335 = vunpack.c.l.b16 %v187
    %v336 = vunpack.c.h.b16 %v187
    %v337 = vunpack.c.l.b16 %v188
    %v338 = vunpack.c.h.b16 %v188
    %v339 = vunpack.c.l.b16 %v189
    %v340 = vunpack.c.h.b16 %v189
    %v341 = vunpack.c.l.b16 %v190
    %v342 = vunpack.c.h.b16 %v190
    %v343 = vunpack.c.l.b16 %v191
    %v344 = vunpack.c.h.b16 %v191
    %v345 = vunpack.c.l.b16 %v192
    %v346 = vunpack.c.h.b16 %v192
    %v347 = vunpack.c.l.b16 %v193
    %v348 = vunpack.c.h.b16 %v193
    %v349 = vunpack.c.l.b16 %v194
    %v350 = vunpack.c.h.b16 %v194
    %v351 = vunpack.c.l.b16 %v195
    %v352 = vunpack.c.h.b16 %v195
    %v353 = vunpack.c.l.b16 %v196
    %v354 = vunpack.c.h.b16 %v196
    %v355 = vunpack.c.l.b16 %v197
    %v356 = vunpack.c.h.b16 %v197
    %v357 = vunpack.c.l.b16 %v198
    %v358 = vunpack.c.h.b16 %v198
    %v359 = vunpack.c.l.b16 %v199
    %v360 = vunpack.c.h.b16 %v199
    %v361 = vunpack.c.l.b16 %v200
    %v362 = vunpack.c.h.b16 %v200
    %v363 = vunpack.c.l.b16 %v201
    %v364 = vunpack.c.h.b16 %v201
    %v365 = vunpack.c.l.b16 %v202
    %v366 = vunpack.c.h.b16 %v202
    %v367 = vunpack.c.l.b16 %v203
    %v368 = vunpack.c.h.b16 %v203
    %v369 = vunpack.c.l.b16 %v204
    %v370 = vunpack.c.h.b16 %v204
    %v371 = vunpack.c.l.b16 %v205
    %v372 = vunpack.c.h.b16 %v205
    %v373 = vunpack.c.l.b16 %v206
    %v374 = vunpack.c.h.b16 %v206
    %v375 = vunpack.c.l.b16 %v207
    %v376 = vunpack.c.h.b16 %v207
    %v377 = vunpack.c.l.b16 %v208
    %v378 = vunpack.c.h.b16 %v208
    %v379 = vunpack.c.l.b16 %v209
    %v380 = vunpack.c.h.b16 %v209
    %v381 = vunpack.c.l.b16 %v210
    %v382 = vunpack.c.h.b16 %v210
    %v383 = vunpack.c.l.b16 %v211
    %v384 = vunpack.c.h.b16 %v211
    %v385 = vunpack.c.l.b16 %v212
    %v386 = vunpack.c.h.b16 %v212
    %v387 = vunpack.c.l.b16 %v213
    %v388 = vunpack.c.h.b16 %v213
    %v389 = vunpack.c.l.b16 %v214
    %v390 = vunpack.c.h.b16 %v214
    %v391 = vpack.c.b16 %v301, %v295
    %v392 = vpack.c.b16 %v302, %v296
    %v393 = vpack.c.b16 %v303, %v297
    %v394 = vpack.c.b16 %v304, %v298
    %v395 = vpack.c.b16 %v305, %v299
    %v396 = vpack.c.b16 %v306, %v300
    %v397 = vpack.c.b16 %v313, %v307
    %v398 = vpack.c.b16 %v314, %v308
    %v399 = vpack.c.b16 %v315, %v309
    %v400 = vpack.c.b16 %v316, %v310
    %v401 = vpack.c.b16 %v317, %v311
    %v402 = vpack.c.b16 %v318, %v312
    %v403 = vpack.c.b16 %v325, %v319
    %v404 = vpack.c.b16 %v326, %v320
    %v405 = vpack.c.b16 %v327, %v321
    %v406 = vpack.c.b16 %v328, %v322
    %v407 = vpack.c.b16 %v329, %v323
    %v408 = vpack.c.b16 %v330, %v324
    %v409 = vpack.c.b16 %v337, %v331
    %v410 = vpack.c.b16 %v338, %v332
    %v411 = vpack.c.b16 %v339, %v333
    %v412 = vpack.c.b16 %v340, %v334
    %v413 = vpack.c.b16 %v341, %v335
    %v414 = vpack.c.b16 %v342, %v336
    %v415 = vpack.c.b16 %v349, %v343
    %v416 = vpack.c.b16 %v350, %v344
    %v417 = vpack.c.b16 %v351, %v345
    %v418 = vpack.c.b16 %v352, %v346
    %v419 = vpack.c.b16 %v353, %v347
    %v420 = vpack.c.b16 %v354, %v348
    %v421 = vpack.c.b16 %v361, %v355
    %v422 = vpack.c.b16 %v362, %v356
    %v423 = vpack.c.b16 %v363, %v357
    %v424 = vpack.c.b16 %v364, %v358
    %v425 = vpack.c.b16 %v365, %v359
    %v426 = vpack.c.b16 %v366, %v360
    %v427 = vpack.c.b16 %v373, %v367
    %v428 = vpack.c.b16 %v374, %v368
    %v429 = vpack.c.b16 %v375, %v369
    %v430 = vpack.c.b16 %v376, %v370
    %v431 = vpack.c.b16 %v377, %v371
    %v432 = vpack.c.b16 %v378, %v372
    %v433 = vpack.c.b16 %v385, %v379
    %v434 = vpack.c.b16 %v386, %v380
    %v435 = vpack.c.b16 %v387, %v381
    %v436 = vpack.c.b16 %v388, %v382
    %v437 = vpack.c.b16 %v389, %v383
    %v438 = vpack.c.b16 %v390, %v384
    %vm481 = vcmask 990208
    %v483 = vsel %vm481, %v166, 0
    %vm485 = vcmask 1043456
    %vm486 = vcmask 1044480
    %v487 = vsel %vm485, 4294967295, 65535
    %v488 = vsel %vm486, %v487, 0
    %v490 = vand.u32 %v433, %v488
    %v493 = vand.u32 %v434, %v488
    %v496 = vand.u32 %v435, %v488
    %v499 = vand.u32 %v436, %v488
    %v502 = vand.u32 %v437, %v488
    %v505 = vand.u32 %v438, %v488
    %507 = vmatprep.subr.bf16.mxu0 %v493
    %508 = vmatpush1.bf16.msra.mxu0 %v490
    %509 = vmatprep.subr.bf16.mxu0 %v428
    %510 = vmatpush1.bf16.msra.mxu0 %v427
    %511 = vmatprep.subr.bf16.mxu0 %v422
    %512 = vmatpush1.bf16.msra.mxu0 %v421
    %513 = vmatprep.subr.bf16.mxu0 %v416
    %514 = vmatpush1.bf16.msra.mxu0 %v415
    %515 = vmatprep.subr.bf16.mxu0 %v410
    %516 = vmatpush1.bf16.msra.mxu0 %v409
    %517 = vmatprep.subr.bf16.mxu0 %v404
    %518 = vmatpush1.bf16.msra.mxu0 %v403
    %519 = vmatprep.subr.bf16.mxu0 %v398
    %520 = vmatpush1.bf16.msra.mxu0 %v397
    %521 = vmatprep.subr.bf16.mxu0 %v392
    %522 = vmatpush1.bf16.msra.mxu0 %v391
    %523 = vmatprep.subr.bf16.mxu0 0
    %524 = vmatpush2.bf16.msra.mxu0 0
    %525 = vmatprep.subr.bf16.mxu0 0
    %526 = vmatpush2.bf16.msra.mxu0 0
    %527 = vmatprep.subr.bf16.mxu0 0
    %528 = vmatpush2.bf16.msra.mxu0 0
    %529 = vmatprep.subr.bf16.mxu0 0
    %530 = vmatpush2.bf16.msra.mxu0 0
    %531 = vmatprep.subr.bf16.mxu0 0
    %532 = vmatpush2.bf16.msra.mxu0 0
    %533 = vmatprep.subr.bf16.mxu0 0
    %534 = vmatpush2.bf16.msra.mxu0 0
    %535 = vmatprep.subr.bf16.mxu0 0
    %536 = vmatpush2.bf16.msra.mxu0 0
    %537 = vmatprep.subr.bf16.mxu0 0
    %538 = vmatpush2.bf16.msra.mxu0 0
    %539 = vmatprep.mubr.bf16.mxu0 0
    %540 = vmatmul.mubr.bf16.gmra.mxu0 %v483
    %v541 = vpop.f32.mrf.mxu0
    %v542 = vadd.f32 %v220, %v541
    %v543 = vpop.f32.mrf.mxu0
    %v544 = vadd.f32 %v224, %v543
    %v545 = vpop.f32.mrf.mxu0
    %v546 = vadd.f32 %v220, %v545
    %v547 = vpop.f32.mrf.mxu0
    %v548 = vadd.f32 %v224, %v547
    %549 = vdwg.mxu0
    %550 = vmatprep.subr.bf16.mxu0 %v499
    %551 = vmatpush1.bf16.msra.mxu0 %v496
    %552 = vmatprep.subr.bf16.mxu0 %v430
    %553 = vmatpush1.bf16.msra.mxu0 %v429
    %554 = vmatprep.subr.bf16.mxu0 %v424
    %555 = vmatpush1.bf16.msra.mxu0 %v423
    %556 = vmatprep.subr.bf16.mxu0 %v418
    %557 = vmatpush1.bf16.msra.mxu0 %v417
    %558 = vmatprep.subr.bf16.mxu0 %v412
    %559 = vmatpush1.bf16.msra.mxu0 %v411
    %560 = vmatprep.subr.bf16.mxu0 %v406
    %561 = vmatpush1.bf16.msra.mxu0 %v405
    %562 = vmatprep.subr.bf16.mxu0 %v400
    %563 = vmatpush1.bf16.msra.mxu0 %v399
    %564 = vmatprep.subr.bf16.mxu0 %v394
    %565 = vmatpush1.bf16.msra.mxu0 %v393
    %566 = vmatprep.subr.bf16.mxu0 0
    %567 = vmatpush2.bf16.msra.mxu0 0
    %568 = vmatprep.subr.bf16.mxu0 0
    %569 = vmatpush2.bf16.msra.mxu0 0
    %570 = vmatprep.subr.bf16.mxu0 0
    %571 = vmatpush2.bf16.msra.mxu0 0
    %572 = vmatprep.subr.bf16.mxu0 0
    %573 = vmatpush2.bf16.msra.mxu0 0
    %574 = vmatprep.subr.bf16.mxu0 0
    %575 = vmatpush2.bf16.msra.mxu0 0
    %576 = vmatprep.subr.bf16.mxu0 0
    %577 = vmatpush2.bf16.msra.mxu0 0
    %578 = vmatprep.subr.bf16.mxu0 0
    %579 = vmatpush2.bf16.msra.mxu0 0
    %580 = vmatprep.subr.bf16.mxu0 0
    %581 = vmatpush2.bf16.msra.mxu0 0
    %582 = vmatprep.mubr.bf16.mxu0 0
    %583 = vmatmul.mubr.bf16.gmra.mxu0 %v483
    %v584 = vpop.f32.mrf.mxu0
    %v585 = vadd.f32 %v228, %v584
    %v586 = vpop.f32.mrf.mxu0
    %v587 = vadd.f32 %v232, %v586
    %v588 = vpop.f32.mrf.mxu0
    %v589 = vadd.f32 %v228, %v588
    %v590 = vpop.f32.mrf.mxu0
    %v591 = vadd.f32 %v232, %v590
    %592 = vdwg.mxu0
    %593 = vmatprep.subr.bf16.mxu0 %v505
    %594 = vmatpush1.bf16.msra.mxu0 %v502
    %595 = vmatprep.subr.bf16.mxu0 %v432
    %596 = vmatpush1.bf16.msra.mxu0 %v431
    %597 = vmatprep.subr.bf16.mxu0 %v426
    %598 = vmatpush1.bf16.msra.mxu0 %v425
    %599 = vmatprep.subr.bf16.mxu0 %v420
    %600 = vmatpush1.bf16.msra.mxu0 %v419
    %601 = vmatprep.subr.bf16.mxu0 %v414
    %602 = vmatpush1.bf16.msra.mxu0 %v413
    %603 = vmatprep.subr.bf16.mxu0 %v408
    %604 = vmatpush1.bf16.msra.mxu0 %v407
    %605 = vmatprep.subr.bf16.mxu0 %v402
    %606 = vmatpush1.bf16.msra.mxu0 %v401
    %607 = vmatprep.subr.bf16.mxu0 %v396
    %608 = vmatpush1.bf16.msra.mxu0 %v395
    %609 = vmatprep.subr.bf16.mxu0 0
    %610 = vmatpush2.bf16.msra.mxu0 0
    %611 = vmatprep.subr.bf16.mxu0 0
    %612 = vmatpush2.bf16.msra.mxu0 0
    %613 = vmatprep.subr.bf16.mxu0 0
    %614 = vmatpush2.bf16.msra.mxu0 0
    %615 = vmatprep.subr.bf16.mxu0 0
    %616 = vmatpush2.bf16.msra.mxu0 0
    %617 = vmatprep.subr.bf16.mxu0 0
    %618 = vmatpush2.bf16.msra.mxu0 0
    %619 = vmatprep.subr.bf16.mxu0 0
    %620 = vmatpush2.bf16.msra.mxu0 0
    %621 = vmatprep.subr.bf16.mxu0 0
    %622 = vmatpush2.bf16.msra.mxu0 0
    %623 = vmatprep.subr.bf16.mxu0 0
    %624 = vmatpush2.bf16.msra.mxu0 0
    %625 = vmatprep.mubr.bf16.mxu0 0
    %626 = vmatmul.mubr.bf16.gmra.mxu0 %v483
    %v627 = vpop.f32.mrf.mxu0
    %v628 = vadd.f32 %v236, %v627
    %v629 = vpop.f32.mrf.mxu0
    %v630 = vadd.f32 %v240, %v629
    %v631 = vpop.f32.mrf.mxu0
    %v632 = vadd.f32 %v236, %v631
    %v633 = vpop.f32.mrf.mxu0
    %v634 = vadd.f32 %v240, %v633
    %635 = vdwg.mxu0
    %v636 = vmax.f32 %v542, 0.0
    %v637 = vmax.f32 %v544, 0.0
    %v638 = vmax.f32 %v585, 0.0
    %v639 = vmax.f32 %v587, 0.0
    %v640 = vmax.f32 %v628, 0.0
    %v641 = vmax.f32 %v630, 0.0
    %v642 = vmax.f32 %v546, 0.0
    %v643 = vmax.f32 %v548, 0.0
    %v644 = vmax.f32 %v589, 0.0
    %v645 = vmax.f32 %v591, 0.0
    %v646 = vmax.f32 %v632, 0.0
    %v647 = vmax.f32 %v634, 0.0
    %v648 = vpack.c.bf16 %v642, %v636
    %v649 = vpack.c.bf16 %v643, %v637
    %v650 = vpack.c.bf16 %v644, %v638
    %v651 = vpack.c.bf16 %v645, %v639
    %v652 = vpack.c.bf16 %v646, %v640
    %v653 = vpack.c.bf16 %v647, %v641
    %v654 = vld [vmem:[#allocation8] sm:$0xff]
    %v655 = vld [vmem:[#allocation8 + $0x8] sm:$0xff]
    %v656 = vld [vmem:[#allocation8 + $0x10] sm:$0xff]
    %v657 = vld [vmem:[#allocation8 + $0x18] sm:$0xff]
    %v658 = vld [vmem:[#allocation8 + $0x20] sm:$0xff]
    %v659 = vld [vmem:[#allocation8 + $0x28] sm:$0xff]
    %v660 = vld [vmem:[#allocation8 + $0x30] sm:$0xff]
    %v661 = vld [vmem:[#allocation8 + $0x38] sm:$0xff]
    %v662 = vld [vmem:[#allocation8 + $0x40] sm:$0xff]
    %v663 = vld [vmem:[#allocation8 + $0x48] sm:$0xff]
    %v664 = vld [vmem:[#allocation8 + $0x50] sm:$0xff]
    %v665 = vld [vmem:[#allocation8 + $0x58] sm:$0xff]
    %v666 = vld [vmem:[#allocation8 + $0x60] sm:$0xff]
    %v667 = vld [vmem:[#allocation8 + $0x68] sm:$0xff]
    %v668 = vld [vmem:[#allocation8 + $0x70] sm:$0xff]
    %v669 = vld [vmem:[#allocation8 + $0x78] sm:$0xff]
    %v670 = vld [vmem:[#allocation8 + $0x80] sm:$0xff]
    %v671 = vld [vmem:[#allocation8 + $0x88] sm:$0xff]
    %v672 = vld [vmem:[#allocation8 + $0x90] sm:$0xff]
    %v673 = vld [vmem:[#allocation8 + $0x98] sm:$0xff]
    %v674 = vld [vmem:[#allocation8 + $0xa0] sm:$0xff]
    %v675 = vld [vmem:[#allocation8 + $0xa8] sm:$0xff]
    %v676 = vld [vmem:[#allocation8 + $0xb0] sm:$0xff]
    %v677 = vld [vmem:[#allocation8 + $0xb8] sm:$0xff]
    %v678 = vld [vmem:[#allocation8 + $0xc0] sm:$0xff]
    %v679 = vld [vmem:[#allocation8 + $0xc8] sm:$0xff]
    %v680 = vld [vmem:[#allocation8 + $0xd0] sm:$0xff]
    %v681 = vld [vmem:[#allocation8 + $0xd8] sm:$0xff]
    %v682 = vld [vmem:[#allocation8 + $0xe0] sm:$0xff]
    %v683 = vld [vmem:[#allocation8 + $0xe8] sm:$0xff]
    %v684 = vld [vmem:[#allocation8 + $0xf0] sm:$0xff]
    %v685 = vld [vmem:[#allocation8 + $0xf8] sm:$0xff]
    %v686 = vld [vmem:[#allocation8 + $0x100] sm:$0xff]
    %v687 = vld [vmem:[#allocation8 + $0x108] sm:$0xff]
    %v688 = vld [vmem:[#allocation8 + $0x110] sm:$0xff]
    %v689 = vld [vmem:[#allocation8 + $0x118] sm:$0xff]
    %v690 = vld [vmem:[#allocation8 + $0x120] sm:$0xff]
    %v691 = vld [vmem:[#allocation8 + $0x128] sm:$0xff]
    %v692 = vld [vmem:[#allocation8 + $0x130] sm:$0xff]
    %v693 = vld [vmem:[#allocation8 + $0x138] sm:$0xff]
    %v694 = vld [vmem:[#allocation8 + $0x140] sm:$0xff]
    %v695 = vld [vmem:[#allocation8 + $0x148] sm:$0xff]
    %v696 = vld [vmem:[#allocation8 + $0x150] sm:$0xff]
    %v697 = vld [vmem:[#allocation8 + $0x158] sm:$0xff]
    %v698 = vld [vmem:[#allocation8 + $0x160] sm:$0xff]
    %v699 = vld [vmem:[#allocation8 + $0x168] sm:$0xff]
    %v700 = vld [vmem:[#allocation8 + $0x170] sm:$0xff]
    %v701 = vld [vmem:[#allocation8 + $0x178] sm:$0xff]
    %v702 = vld [vmem:[#allocation8 + $0x180] sm:$0xff]
    %v703 = vld [vmem:[#allocation8 + $0x188] sm:$0xff]
    %v704 = vld [vmem:[#allocation8 + $0x190] sm:$0xff]
    %v705 = vld [vmem:[#allocation8 + $0x198] sm:$0xff]
    %v706 = vld [vmem:[#allocation8 + $0x1a0] sm:$0xff]
    %v707 = vld [vmem:[#allocation8 + $0x1a8] sm:$0xff]
    %v708 = vld [vmem:[#allocation8 + $0x1b0] sm:$0xff]
    %v709 = vld [vmem:[#allocation8 + $0x1b8] sm:$0xff]
    %v710 = vld [vmem:[#allocation8 + $0x1c0] sm:$0xff]
    %v711 = vld [vmem:[#allocation8 + $0x1c8] sm:$0xff]
    %v712 = vld [vmem:[#allocation8 + $0x1d0] sm:$0xff]
    %v713 = vld [vmem:[#allocation8 + $0x1d8] sm:$0xff]
    %v714 = vld [vmem:[#allocation8 + $0x1e0] sm:$0xff]
    %v715 = vld [vmem:[#allocation8 + $0x1e8] sm:$0xff]
    %v716 = vld [vmem:[#allocation8 + $0x1f0] sm:$0xff]
    %v717 = vld [vmem:[#allocation8 + $0x1f8] sm:$0xff]
    %v718 = vld [vmem:[#allocation8 + $0x200] sm:$0xff]
    %v719 = vld [vmem:[#allocation8 + $0x208] sm:$0xff]
    %v720 = vld [vmem:[#allocation8 + $0x210] sm:$0xff]
    %v721 = vld [vmem:[#allocation8 + $0x218] sm:$0xff]
    %v722 = vld [vmem:[#allocation8 + $0x220] sm:$0xff]
    %v723 = vld [vmem:[#allocation8 + $0x228] sm:$0xff]
    %v724 = vld [vmem:[#allocation8 + $0x230] sm:$0xff]
    %v725 = vld [vmem:[#allocation8 + $0x238] sm:$0xff]
    %v726 = vld [vmem:[#allocation8 + $0x240] sm:$0xff]
    %v727 = vld [vmem:[#allocation8 + $0x248] sm:$0xff]
    %v728 = vld [vmem:[#allocation8 + $0x250] sm:$0xff]
    %v729 = vld [vmem:[#allocation8 + $0x258] sm:$0xff]
    %v730 = vld [vmem:[#allocation8 + $0x260] sm:$0xff]
    %v731 = vld [vmem:[#allocation8 + $0x268] sm:$0xff]
    %v732 = vld [vmem:[#allocation8 + $0x270] sm:$0xff]
    %v733 = vld [vmem:[#allocation8 + $0x278] sm:$0xff]
    %v734 = vld [vmem:[#allocation8 + $0x280] sm:$0xff]
    %v735 = vld [vmem:[#allocation8 + $0x288] sm:$0xff]
    %v736 = vld [vmem:[#allocation8 + $0x290] sm:$0xff]
    %v737 = vld [vmem:[#allocation8 + $0x298] sm:$0xff]
    %v738 = vld [vmem:[#allocation8 + $0x2a0] sm:$0xff]
    %v739 = vld [vmem:[#allocation8 + $0x2a8] sm:$0xff]
    %v740 = vld [vmem:[#allocation8 + $0x2b0] sm:$0xff]
    %v741 = vld [vmem:[#allocation8 + $0x2b8] sm:$0xff]
    %v742 = vld [vmem:[#allocation8 + $0x2c0] sm:$0xff]
    %v743 = vld [vmem:[#allocation8 + $0x2c8] sm:$0xff]
    %v744 = vld [vmem:[#allocation8 + $0x2d0] sm:$0xff]
    %v745 = vld [vmem:[#allocation8 + $0x2d8] sm:$0xff]
    %v746 = vld [vmem:[#allocation8 + $0x2e0] sm:$0xff]
    %v747 = vld [vmem:[#allocation8 + $0x2e8] sm:$0xff]
    %v748 = vld [vmem:[#allocation8 + $0x2f0] sm:$0xff]
    %v749 = vld [vmem:[#allocation8 + $0x2f8] sm:$0xff]
    %v750 = vld [vmem:[#allocation8 + $0x300] sm:$0xff]
    %v751 = vld [vmem:[#allocation8 + $0x308] sm:$0xff]
    %v752 = vld [vmem:[#allocation8 + $0x310] sm:$0xff]
    %v753 = vld [vmem:[#allocation8 + $0x318] sm:$0xff]
    %v754 = vld [vmem:[#allocation8 + $0x320] sm:$0xff]
    %v755 = vld [vmem:[#allocation8 + $0x328] sm:$0xff]
    %v756 = vld [vmem:[#allocation8 + $0x330] sm:$0xff]
    %v757 = vld [vmem:[#allocation8 + $0x338] sm:$0xff]
    %v758 = vld [vmem:[#allocation8 + $0x340] sm:$0xff]
    %v759 = vld [vmem:[#allocation8 + $0x348] sm:$0xff]
    %v760 = vld [vmem:[#allocation8 + $0x350] sm:$0xff]
    %v761 = vld [vmem:[#allocation8 + $0x358] sm:$0xff]
    %v762 = vld [vmem:[#allocation8 + $0x360] sm:$0xff]
    %v763 = vld [vmem:[#allocation8 + $0x368] sm:$0xff]
    %v764 = vld [vmem:[#allocation8 + $0x370] sm:$0xff]
    %v765 = vld [vmem:[#allocation8 + $0x378] sm:$0xff]
    %v766 = vld [vmem:[#allocation8 + $0x380] sm:$0xff]
    %v767 = vld [vmem:[#allocation8 + $0x388] sm:$0xff]
    %v768 = vld [vmem:[#allocation8 + $0x390] sm:$0xff]
    %v769 = vld [vmem:[#allocation8 + $0x398] sm:$0xff]
    %v770 = vld [vmem:[#allocation8 + $0x3a0] sm:$0xff]
    %v771 = vld [vmem:[#allocation8 + $0x3a8] sm:$0xff]
    %v772 = vld [vmem:[#allocation8 + $0x3b0] sm:$0xff]
    %v773 = vld [vmem:[#allocation8 + $0x3b8] sm:$0xff]
    %v774 = vld [vmem:[#allocation8 + $0x3c0] sm:$0xff]
    %v775 = vld [vmem:[#allocation8 + $0x3c8] sm:$0xff]
    %v776 = vld [vmem:[#allocation8 + $0x3d0] sm:$0xff]
    %v777 = vld [vmem:[#allocation8 + $0x3d8] sm:$0xff]
    %v778 = vld [vmem:[#allocation8 + $0x3e0] sm:$0xff]
    %v779 = vld [vmem:[#allocation8 + $0x3e8] sm:$0xff]
    %v780 = vld [vmem:[#allocation8 + $0x3f0] sm:$0xff]
    %v781 = vld [vmem:[#allocation8 + $0x3f8] sm:$0xff]
    %v782 = vld [vmem:[#allocation8 + $0x400] sm:$0xff]
    %v783 = vld [vmem:[#allocation8 + $0x408] sm:$0xff]
    %v784 = vld [vmem:[#allocation8 + $0x410] sm:$0xff]
    %v785 = vld [vmem:[#allocation8 + $0x418] sm:$0xff]
    %v786 = vld [vmem:[#allocation8 + $0x420] sm:$0xff]
    %v787 = vld [vmem:[#allocation8 + $0x428] sm:$0xff]
    %v788 = vld [vmem:[#allocation8 + $0x430] sm:$0xff]
    %v789 = vld [vmem:[#allocation8 + $0x438] sm:$0xff]
    %v790 = vld [vmem:[#allocation8 + $0x440] sm:$0xff]
    %v791 = vld [vmem:[#allocation8 + $0x448] sm:$0xff]
    %v792 = vld [vmem:[#allocation8 + $0x450] sm:$0xff]
    %v793 = vld [vmem:[#allocation8 + $0x458] sm:$0xff]
    %v794 = vld [vmem:[#allocation8 + $0x460] sm:$0xff]
    %v795 = vld [vmem:[#allocation8 + $0x468] sm:$0xff]
    %v796 = vld [vmem:[#allocation8 + $0x470] sm:$0xff]
    %v797 = vld [vmem:[#allocation8 + $0x478] sm:$0xff]
    %v798 = vld [vmem:[#allocation8 + $0x480] sm:$0xff]
    %v799 = vld [vmem:[#allocation8 + $0x488] sm:$0xff]
    %v800 = vld [vmem:[#allocation8 + $0x490] sm:$0xff]
    %v801 = vld [vmem:[#allocation8 + $0x498] sm:$0xff]
    %v802 = vld [vmem:[#allocation8 + $0x4a0] sm:$0xff]
    %v803 = vld [vmem:[#allocation8 + $0x4a8] sm:$0xff]
    %v804 = vld [vmem:[#allocation8 + $0x4b0] sm:$0xff]
    %v805 = vld [vmem:[#allocation8 + $0x4b8] sm:$0xff]
    %v806 = vld [vmem:[#allocation8 + $0x4c0] sm:$0xff]
    %v807 = vld [vmem:[#allocation8 + $0x4c8] sm:$0xff]
    %v808 = vld [vmem:[#allocation8 + $0x4d0] sm:$0xff]
    %v809 = vld [vmem:[#allocation8 + $0x4d8] sm:$0xff]
    %v810 = vld [vmem:[#allocation8 + $0x4e0] sm:$0xff]
    %v811 = vld [vmem:[#allocation8 + $0x4e8] sm:$0xff]
    %v812 = vld [vmem:[#allocation8 + $0x4f0] sm:$0xff]
    %v813 = vld [vmem:[#allocation8 + $0x4f8] sm:$0xff]
    %v814 = vld [vmem:[#allocation8 + $0x500] sm:$0xff]
    %v815 = vld [vmem:[#allocation8 + $0x508] sm:$0xff]
    %v816 = vld [vmem:[#allocation8 + $0x510] sm:$0xff]
    %v817 = vld [vmem:[#allocation8 + $0x518] sm:$0xff]
    %v818 = vld [vmem:[#allocation8 + $0x520] sm:$0xff]
    %v819 = vld [vmem:[#allocation8 + $0x528] sm:$0xff]
    %v820 = vld [vmem:[#allocation8 + $0x530] sm:$0xff]
    %v821 = vld [vmem:[#allocation8 + $0x538] sm:$0xff]
    %v822 = vld [vmem:[#allocation8 + $0x540] sm:$0xff]
    %v823 = vld [vmem:[#allocation8 + $0x548] sm:$0xff]
    %v824 = vld [vmem:[#allocation8 + $0x550] sm:$0xff]
    %v825 = vld [vmem:[#allocation8 + $0x558] sm:$0xff]
    %v826 = vld [vmem:[#allocation8 + $0x560] sm:$0xff]
    %v827 = vld [vmem:[#allocation8 + $0x568] sm:$0xff]
    %v828 = vld [vmem:[#allocation8 + $0x570] sm:$0xff]
    %v829 = vld [vmem:[#allocation8 + $0x578] sm:$0xff]
    %v830 = vld [vmem:[#allocation8 + $0x580] sm:$0xff]
    %v831 = vld [vmem:[#allocation8 + $0x588] sm:$0xff]
    %v832 = vld [vmem:[#allocation8 + $0x590] sm:$0xff]
    %v833 = vld [vmem:[#allocation8 + $0x598] sm:$0xff]
    %v834 = vld [vmem:[#allocation8 + $0x5a0] sm:$0xff]
    %v835 = vld [vmem:[#allocation8 + $0x5a8] sm:$0xff]
    %v836 = vld [vmem:[#allocation8 + $0x5b0] sm:$0xff]
    %v837 = vld [vmem:[#allocation8 + $0x5b8] sm:$0xff]
    %v838 = vld [vmem:[#allocation8 + $0x5c0] sm:$0xff]
    %v839 = vld [vmem:[#allocation8 + $0x5c8] sm:$0xff]
    %v840 = vld [vmem:[#allocation8 + $0x5d0] sm:$0xff]
    %v841 = vld [vmem:[#allocation8 + $0x5d8] sm:$0xff]
    %v842 = vld [vmem:[#allocation8 + $0x5e0] sm:$0xff]
    %v843 = vld [vmem:[#allocation8 + $0x5e8] sm:$0xff]
    %v844 = vld [vmem:[#allocation8 + $0x5f0] sm:$0xff]
    %v845 = vld [vmem:[#allocation8 + $0x5f8] sm:$0xff]
    %v846 = vld [vmem:[%s4] sm:$0xf]
    %v848 = vlaneseq
    %v849 = vshrl.u32 %v848, 7
    %v850 = vsub.s32 0, %v849
    %v851 = vrot.slane %v846, %v850
    %v852 = vlaneseq
    %v853 = vshrl.u32 %v852, 7
    %v854 = vsub.s32 1, %v853
    %v855 = vrot.slane %v846, %v854
    %v856 = vlaneseq
    %v857 = vshrl.u32 %v856, 7
    %v858 = vsub.s32 2, %v857
    %v859 = vrot.slane %v846, %v858
    %v860 = vlaneseq
    %v861 = vshrl.u32 %v860, 7
    %v862 = vsub.s32 3, %v861
    %v863 = vrot.slane %v846, %v862
    %v1060 = vunpack.c.l.b16 %v654
    %v1061 = vunpack.c.h.b16 %v654
    %v1062 = vunpack.c.l.b16 %v655
    %v1063 = vunpack.c.h.b16 %v655
    %v1064 = vunpack.c.l.b16 %v656
    %v1065 = vunpack.c.h.b16 %v656
    %v1066 = vunpack.c.l.b16 %v657
    %v1067 = vunpack.c.h.b16 %v657
    %v1068 = vunpack.c.l.b16 %v658
    %v1069 = vunpack.c.h.b16 %v658
    %v1070 = vunpack.c.l.b16 %v659
    %v1071 = vunpack.c.h.b16 %v659
    %v1072 = vunpack.c.l.b16 %v660
    %v1073 = vunpack.c.h.b16 %v660
    %v1074 = vunpack.c.l.b16 %v661
    %v1075 = vunpack.c.h.b16 %v661
    %v1076 = vunpack.c.l.b16 %v662
    %v1077 = vunpack.c.h.b16 %v662
    %v1078 = vunpack.c.l.b16 %v663
    %v1079 = vunpack.c.h.b16 %v663
    %v1080 = vunpack.c.l.b16 %v664
    %v1081 = vunpack.c.h.b16 %v664
    %v1082 = vunpack.c.l.b16 %v665
    %v1083 = vunpack.c.h.b16 %v665
    %v1084 = vunpack.c.l.b16 %v666
    %v1085 = vunpack.c.h.b16 %v666
    %v1086 = vunpack.c.l.b16 %v667
    %v1087 = vunpack.c.h.b16 %v667
    %v1088 = vunpack.c.l.b16 %v668
    %v1089 = vunpack.c.h.b16 %v668
    %v1090 = vunpack.c.l.b16 %v669
    %v1091 = vunpack.c.h.b16 %v669
    %v1092 = vunpack.c.l.b16 %v670
    %v1093 = vunpack.c.h.b16 %v670
    %v1094 = vunpack.c.l.b16 %v671
    %v1095 = vunpack.c.h.b16 %v671
    %v1096 = vunpack.c.l.b16 %v672
    %v1097 = vunpack.c.h.b16 %v672
    %v1098 = vunpack.c.l.b16 %v673
    %v1099 = vunpack.c.h.b16 %v673
    %v1100 = vunpack.c.l.b16 %v674
    %v1101 = vunpack.c.h.b16 %v674
    %v1102 = vunpack.c.l.b16 %v675
    %v1103 = vunpack.c.h.b16 %v675
    %v1104 = vunpack.c.l.b16 %v676
    %v1105 = vunpack.c.h.b16 %v676
    %v1106 = vunpack.c.l.b16 %v677
    %v1107 = vunpack.c.h.b16 %v677
    %v1108 = vunpack.c.l.b16 %v678
    %v1109 = vunpack.c.h.b16 %v678
    %v1110 = vunpack.c.l.b16 %v679
    %v1111 = vunpack.c.h.b16 %v679
    %v1112 = vunpack.c.l.b16 %v680
    %v1113 = vunpack.c.h.b16 %v680
    %v1114 = vunpack.c.l.b16 %v681
    %v1115 = vunpack.c.h.b16 %v681
    %v1116 = vunpack.c.l.b16 %v682
    %v1117 = vunpack.c.h.b16 %v682
    %v1118 = vunpack.c.l.b16 %v683
    %v1119 = vunpack.c.h.b16 %v683
    %v1120 = vunpack.c.l.b16 %v684
    %v1121 = vunpack.c.h.b16 %v684
    %v1122 = vunpack.c.l.b16 %v685
    %v1123 = vunpack.c.h.b16 %v685
    %v1124 = vunpack.c.l.b16 %v686
    %v1125 = vunpack.c.h.b16 %v686
    %v1126 = vunpack.c.l.b16 %v687
    %v1127 = vunpack.c.h.b16 %v687
    %v1128 = vunpack.c.l.b16 %v688
    %v1129 = vunpack.c.h.b16 %v688
    %v1130 = vunpack.c.l.b16 %v689
    %v1131 = vunpack.c.h.b16 %v689
    %v1132 = vunpack.c.l.b16 %v690
    %v1133 = vunpack.c.h.b16 %v690
    %v1134 = vunpack.c.l.b16 %v691
    %v1135 = vunpack.c.h.b16 %v691
    %v1136 = vunpack.c.l.b16 %v692
    %v1137 = vunpack.c.h.b16 %v692
    %v1138 = vunpack.c.l.b16 %v693
    %v1139 = vunpack.c.h.b16 %v693
    %v1140 = vunpack.c.l.b16 %v694
    %v1141 = vunpack.c.h.b16 %v694
    %v1142 = vunpack.c.l.b16 %v695
    %v1143 = vunpack.c.h.b16 %v695
    %v1144 = vunpack.c.l.b16 %v696
    %v1145 = vunpack.c.h.b16 %v696
    %v1146 = vunpack.c.l.b16 %v697
    %v1147 = vunpack.c.h.b16 %v697
    %v1148 = vunpack.c.l.b16 %v698
    %v1149 = vunpack.c.h.b16 %v698
    %v1150 = vunpack.c.l.b16 %v699
    %v1151 = vunpack.c.h.b16 %v699
    %v1152 = vunpack.c.l.b16 %v700
    %v1153 = vunpack.c.h.b16 %v700
    %v1154 = vunpack.c.l.b16 %v701
    %v1155 = vunpack.c.h.b16 %v701
    %v1156 = vunpack.c.l.b16 %v702
    %v1157 = vunpack.c.h.b16 %v702
    %v1158 = vunpack.c.l.b16 %v703
    %v1159 = vunpack.c.h.b16 %v703
    %v1160 = vunpack.c.l.b16 %v704
    %v1161 = vunpack.c.h.b16 %v704
    %v1162 = vunpack.c.l.b16 %v705
    %v1163 = vunpack.c.h.b16 %v705
    %v1164 = vunpack.c.l.b16 %v706
    %v1165 = vunpack.c.h.b16 %v706
    %v1166 = vunpack.c.l.b16 %v707
    %v1167 = vunpack.c.h.b16 %v707
    %v1168 = vunpack.c.l.b16 %v708
    %v1169 = vunpack.c.h.b16 %v708
    %v1170 = vunpack.c.l.b16 %v709
    %v1171 = vunpack.c.h.b16 %v709
    %v1172 = vunpack.c.l.b16 %v710
    %v1173 = vunpack.c.h.b16 %v710
    %v1174 = vunpack.c.l.b16 %v711
    %v1175 = vunpack.c.h.b16 %v711
    %v1176 = vunpack.c.l.b16 %v712
    %v1177 = vunpack.c.h.b16 %v712
    %v1178 = vunpack.c.l.b16 %v713
    %v1179 = vunpack.c.h.b16 %v713
    %v1180 = vunpack.c.l.b16 %v714
    %v1181 = vunpack.c.h.b16 %v714
    %v1182 = vunpack.c.l.b16 %v715
    %v1183 = vunpack.c.h.b16 %v715
    %v1184 = vunpack.c.l.b16 %v716
    %v1185 = vunpack.c.h.b16 %v716
    %v1186 = vunpack.c.l.b16 %v717
    %v1187 = vunpack.c.h.b16 %v717
    %v1188 = vunpack.c.l.b16 %v718
    %v1189 = vunpack.c.h.b16 %v718
    %v1190 = vunpack.c.l.b16 %v719
    %v1191 = vunpack.c.h.b16 %v719
    %v1192 = vunpack.c.l.b16 %v720
    %v1193 = vunpack.c.h.b16 %v720
    %v1194 = vunpack.c.l.b16 %v721
    %v1195 = vunpack.c.h.b16 %v721
    %v1196 = vunpack.c.l.b16 %v722
    %v1197 = vunpack.c.h.b16 %v722
    %v1198 = vunpack.c.l.b16 %v723
    %v1199 = vunpack.c.h.b16 %v723
    %v1200 = vunpack.c.l.b16 %v724
    %v1201 = vunpack.c.h.b16 %v724
    %v1202 = vunpack.c.l.b16 %v725
    %v1203 = vunpack.c.h.b16 %v725
    %v1204 = vunpack.c.l.b16 %v726
    %v1205 = vunpack.c.h.b16 %v726
    %v1206 = vunpack.c.l.b16 %v727
    %v1207 = vunpack.c.h.b16 %v727
    %v1208 = vunpack.c.l.b16 %v728
    %v1209 = vunpack.c.h.b16 %v728
    %v1210 = vunpack.c.l.b16 %v729
    %v1211 = vunpack.c.h.b16 %v729
    %v1212 = vunpack.c.l.b16 %v730
    %v1213 = vunpack.c.h.b16 %v730
    %v1214 = vunpack.c.l.b16 %v731
    %v1215 = vunpack.c.h.b16 %v731
    %v1216 = vunpack.c.l.b16 %v732
    %v1217 = vunpack.c.h.b16 %v732
    %v1218 = vunpack.c.l.b16 %v733
    %v1219 = vunpack.c.h.b16 %v733
    %v1220 = vunpack.c.l.b16 %v734
    %v1221 = vunpack.c.h.b16 %v734
    %v1222 = vunpack.c.l.b16 %v735
    %v1223 = vunpack.c.h.b16 %v735
    %v1224 = vunpack.c.l.b16 %v736
    %v1225 = vunpack.c.h.b16 %v736
    %v1226 = vunpack.c.l.b16 %v737
    %v1227 = vunpack.c.h.b16 %v737
    %v1228 = vunpack.c.l.b16 %v738
    %v1229 = vunpack.c.h.b16 %v738
    %v1230 = vunpack.c.l.b16 %v739
    %v1231 = vunpack.c.h.b16 %v739
    %v1232 = vunpack.c.l.b16 %v740
    %v1233 = vunpack.c.h.b16 %v740
    %v1234 = vunpack.c.l.b16 %v741
    %v1235 = vunpack.c.h.b16 %v741
    %v1236 = vunpack.c.l.b16 %v742
    %v1237 = vunpack.c.h.b16 %v742
    %v1238 = vunpack.c.l.b16 %v743
    %v1239 = vunpack.c.h.b16 %v743
    %v1240 = vunpack.c.l.b16 %v744
    %v1241 = vunpack.c.h.b16 %v744
    %v1242 = vunpack.c.l.b16 %v745
    %v1243 = vunpack.c.h.b16 %v745
    %v1244 = vunpack.c.l.b16 %v746
    %v1245 = vunpack.c.h.b16 %v746
    %v1246 = vunpack.c.l.b16 %v747
    %v1247 = vunpack.c.h.b16 %v747
    %v1248 = vunpack.c.l.b16 %v748
    %v1249 = vunpack.c.h.b16 %v748
    %v1250 = vunpack.c.l.b16 %v749
    %v1251 = vunpack.c.h.b16 %v749
    %v1252 = vunpack.c.l.b16 %v750
    %v1253 = vunpack.c.h.b16 %v750
    %v1254 = vunpack.c.l.b16 %v751
    %v1255 = vunpack.c.h.b16 %v751
    %v1256 = vunpack.c.l.b16 %v752
    %v1257 = vunpack.c.h.b16 %v752
    %v1258 = vunpack.c.l.b16 %v753
    %v1259 = vunpack.c.h.b16 %v753
    %v1260 = vunpack.c.l.b16 %v754
    %v1261 = vunpack.c.h.b16 %v754
    %v1262 = vunpack.c.l.b16 %v755
    %v1263 = vunpack.c.h.b16 %v755
    %v1264 = vunpack.c.l.b16 %v756
    %v1265 = vunpack.c.h.b16 %v756
    %v1266 = vunpack.c.l.b16 %v757
    %v1267 = vunpack.c.h.b16 %v757
    %v1268 = vunpack.c.l.b16 %v758
    %v1269 = vunpack.c.h.b16 %v758
    %v1270 = vunpack.c.l.b16 %v759
    %v1271 = vunpack.c.h.b16 %v759
    %v1272 = vunpack.c.l.b16 %v760
    %v1273 = vunpack.c.h.b16 %v760
    %v1274 = vunpack.c.l.b16 %v761
    %v1275 = vunpack.c.h.b16 %v761
    %v1276 = vunpack.c.l.b16 %v762
    %v1277 = vunpack.c.h.b16 %v762
    %v1278 = vunpack.c.l.b16 %v763
    %v1279 = vunpack.c.h.b16 %v763
    %v1280 = vunpack.c.l.b16 %v764
    %v1281 = vunpack.c.h.b16 %v764
    %v1282 = vunpack.c.l.b16 %v765
    %v1283 = vunpack.c.h.b16 %v765
    %v1284 = vunpack.c.l.b16 %v766
    %v1285 = vunpack.c.h.b16 %v766
    %v1286 = vunpack.c.l.b16 %v767
    %v1287 = vunpack.c.h.b16 %v767
    %v1288 = vunpack.c.l.b16 %v768
    %v1289 = vunpack.c.h.b16 %v768
    %v1290 = vunpack.c.l.b16 %v769
    %v1291 = vunpack.c.h.b16 %v769
    %v1292 = vunpack.c.l.b16 %v770
    %v1293 = vunpack.c.h.b16 %v770
    %v1294 = vunpack.c.l.b16 %v771
    %v1295 = vunpack.c.h.b16 %v771
    %v1296 = vunpack.c.l.b16 %v772
    %v1297 = vunpack.c.h.b16 %v772
    %v1298 = vunpack.c.l.b16 %v773
    %v1299 = vunpack.c.h.b16 %v773
    %v1300 = vunpack.c.l.b16 %v774
    %v1301 = vunpack.c.h.b16 %v774
    %v1302 = vunpack.c.l.b16 %v775
    %v1303 = vunpack.c.h.b16 %v775
    %v1304 = vunpack.c.l.b16 %v776
    %v1305 = vunpack.c.h.b16 %v776
    %v1306 = vunpack.c.l.b16 %v777
    %v1307 = vunpack.c.h.b16 %v777
    %v1308 = vunpack.c.l.b16 %v778
    %v1309 = vunpack.c.h.b16 %v778
    %v1310 = vunpack.c.l.b16 %v779
    %v1311 = vunpack.c.h.b16 %v779
    %v1312 = vunpack.c.l.b16 %v780
    %v1313 = vunpack.c.h.b16 %v780
    %v1314 = vunpack.c.l.b16 %v781
    %v1315 = vunpack.c.h.b16 %v781
    %v1316 = vunpack.c.l.b16 %v782
    %v1317 = vunpack.c.h.b16 %v782
    %v1318 = vunpack.c.l.b16 %v783
    %v1319 = vunpack.c.h.b16 %v783
    %v1320 = vunpack.c.l.b16 %v784
    %v1321 = vunpack.c.h.b16 %v784
    %v1322 = vunpack.c.l.b16 %v785
    %v1323 = vunpack.c.h.b16 %v785
    %v1324 = vunpack.c.l.b16 %v786
    %v1325 = vunpack.c.h.b16 %v786
    %v1326 = vunpack.c.l.b16 %v787
    %v1327 = vunpack.c.h.b16 %v787
    %v1328 = vunpack.c.l.b16 %v788
    %v1329 = vunpack.c.h.b16 %v788
    %v1330 = vunpack.c.l.b16 %v789
    %v1331 = vunpack.c.h.b16 %v789
    %v1332 = vunpack.c.l.b16 %v790
    %v1333 = vunpack.c.h.b16 %v790
    %v1334 = vunpack.c.l.b16 %v791
    %v1335 = vunpack.c.h.b16 %v791
    %v1336 = vunpack.c.l.b16 %v792
    %v1337 = vunpack.c.h.b16 %v792
    %v1338 = vunpack.c.l.b16 %v793
    %v1339 = vunpack.c.h.b16 %v793
    %v1340 = vunpack.c.l.b16 %v794
    %v1341 = vunpack.c.h.b16 %v794
    %v1342 = vunpack.c.l.b16 %v795
    %v1343 = vunpack.c.h.b16 %v795
    %v1344 = vunpack.c.l.b16 %v796
    %v1345 = vunpack.c.h.b16 %v796
    %v1346 = vunpack.c.l.b16 %v797
    %v1347 = vunpack.c.h.b16 %v797
    %v1348 = vunpack.c.l.b16 %v798
    %v1349 = vunpack.c.h.b16 %v798
    %v1350 = vunpack.c.l.b16 %v799
    %v1351 = vunpack.c.h.b16 %v799
    %v1352 = vunpack.c.l.b16 %v800
    %v1353 = vunpack.c.h.b16 %v800
    %v1354 = vunpack.c.l.b16 %v801
    %v1355 = vunpack.c.h.b16 %v801
    %v1356 = vunpack.c.l.b16 %v802
    %v1357 = vunpack.c.h.b16 %v802
    %v1358 = vunpack.c.l.b16 %v803
    %v1359 = vunpack.c.h.b16 %v803
    %v1360 = vunpack.c.l.b16 %v804
    %v1361 = vunpack.c.h.b16 %v804
    %v1362 = vunpack.c.l.b16 %v805
    %v1363 = vunpack.c.h.b16 %v805
    %v1364 = vunpack.c.l.b16 %v806
    %v1365 = vunpack.c.h.b16 %v806
    %v1366 = vunpack.c.l.b16 %v807
    %v1367 = vunpack.c.h.b16 %v807
    %v1368 = vunpack.c.l.b16 %v808
    %v1369 = vunpack.c.h.b16 %v808
    %v1370 = vunpack.c.l.b16 %v809
    %v1371 = vunpack.c.h.b16 %v809
    %v1372 = vunpack.c.l.b16 %v810
    %v1373 = vunpack.c.h.b16 %v810
    %v1374 = vunpack.c.l.b16 %v811
    %v1375 = vunpack.c.h.b16 %v811
    %v1376 = vunpack.c.l.b16 %v812
    %v1377 = vunpack.c.h.b16 %v812
    %v1378 = vunpack.c.l.b16 %v813
    %v1379 = vunpack.c.h.b16 %v813
    %v1380 = vunpack.c.l.b16 %v814
    %v1381 = vunpack.c.h.b16 %v814
    %v1382 = vunpack.c.l.b16 %v815
    %v1383 = vunpack.c.h.b16 %v815
    %v1384 = vunpack.c.l.b16 %v816
    %v1385 = vunpack.c.h.b16 %v816
    %v1386 = vunpack.c.l.b16 %v817
    %v1387 = vunpack.c.h.b16 %v817
    %v1388 = vunpack.c.l.b16 %v818
    %v1389 = vunpack.c.h.b16 %v818
    %v1390 = vunpack.c.l.b16 %v819
    %v1391 = vunpack.c.h.b16 %v819
    %v1392 = vunpack.c.l.b16 %v820
    %v1393 = vunpack.c.h.b16 %v820
    %v1394 = vunpack.c.l.b16 %v821
    %v1395 = vunpack.c.h.b16 %v821
    %v1396 = vunpack.c.l.b16 %v822
    %v1397 = vunpack.c.h.b16 %v822
    %v1398 = vunpack.c.l.b16 %v823
    %v1399 = vunpack.c.h.b16 %v823
    %v1400 = vunpack.c.l.b16 %v824
    %v1401 = vunpack.c.h.b16 %v824
    %v1402 = vunpack.c.l.b16 %v825
    %v1403 = vunpack.c.h.b16 %v825
    %v1404 = vunpack.c.l.b16 %v826
    %v1405 = vunpack.c.h.b16 %v826
    %v1406 = vunpack.c.l.b16 %v827
    %v1407 = vunpack.c.h.b16 %v827
    %v1408 = vunpack.c.l.b16 %v828
    %v1409 = vunpack.c.h.b16 %v828
    %v1410 = vunpack.c.l.b16 %v829
    %v1411 = vunpack.c.h.b16 %v829
    %v1412 = vunpack.c.l.b16 %v830
    %v1413 = vunpack.c.h.b16 %v830
    %v1414 = vunpack.c.l.b16 %v831
    %v1415 = vunpack.c.h.b16 %v831
    %v1416 = vunpack.c.l.b16 %v832
    %v1417 = vunpack.c.h.b16 %v832
    %v1418 = vunpack.c.l.b16 %v833
    %v1419 = vunpack.c.h.b16 %v833
    %v1420 = vunpack.c.l.b16 %v834
    %v1421 = vunpack.c.h.b16 %v834
    %v1422 = vunpack.c.l.b16 %v835
    %v1423 = vunpack.c.h.b16 %v835
    %v1424 = vunpack.c.l.b16 %v836
    %v1425 = vunpack.c.h.b16 %v836
    %v1426 = vunpack.c.l.b16 %v837
    %v1427 = vunpack.c.h.b16 %v837
    %v1428 = vunpack.c.l.b16 %v838
    %v1429 = vunpack.c.h.b16 %v838
    %v1430 = vunpack.c.l.b16 %v839
    %v1431 = vunpack.c.h.b16 %v839
    %v1432 = vunpack.c.l.b16 %v840
    %v1433 = vunpack.c.h.b16 %v840
    %v1434 = vunpack.c.l.b16 %v841
    %v1435 = vunpack.c.h.b16 %v841
    %v1436 = vunpack.c.l.b16 %v842
    %v1437 = vunpack.c.h.b16 %v842
    %v1438 = vunpack.c.l.b16 %v843
    %v1439 = vunpack.c.h.b16 %v843
    %v1440 = vunpack.c.l.b16 %v844
    %v1441 = vunpack.c.h.b16 %v844
    %v1442 = vunpack.c.l.b16 %v845
    %v1443 = vunpack.c.h.b16 %v845
    %v1444 = vpack.c.b16 %v1064, %v1060
    %v1445 = vpack.c.b16 %v1065, %v1061
    %v1446 = vpack.c.b16 %v1066, %v1062
    %v1447 = vpack.c.b16 %v1067, %v1063
    %v1448 = vpack.c.b16 %v1072, %v1068
    %v1449 = vpack.c.b16 %v1073, %v1069
    %v1450 = vpack.c.b16 %v1074, %v1070
    %v1451 = vpack.c.b16 %v1075, %v1071
    %v1452 = vpack.c.b16 %v1080, %v1076
    %v1453 = vpack.c.b16 %v1081, %v1077
    %v1454 = vpack.c.b16 %v1082, %v1078
    %v1455 = vpack.c.b16 %v1083, %v1079
    %v1456 = vpack.c.b16 %v1088, %v1084
    %v1457 = vpack.c.b16 %v1089, %v1085
    %v1458 = vpack.c.b16 %v1090, %v1086
    %v1459 = vpack.c.b16 %v1091, %v1087
    %v1460 = vpack.c.b16 %v1096, %v1092
    %v1461 = vpack.c.b16 %v1097, %v1093
    %v1462 = vpack.c.b16 %v1098, %v1094
    %v1463 = vpack.c.b16 %v1099, %v1095
    %v1464 = vpack.c.b16 %v1104, %v1100
    %v1465 = vpack.c.b16 %v1105, %v1101
    %v1466 = vpack.c.b16 %v1106, %v1102
    %v1467 = vpack.c.b16 %v1107, %v1103
    %v1468 = vpack.c.b16 %v1112, %v1108
    %v1469 = vpack.c.b16 %v1113, %v1109
    %v1470 = vpack.c.b16 %v1114, %v1110
    %v1471 = vpack.c.b16 %v1115, %v1111
    %v1472 = vpack.c.b16 %v1120, %v1116
    %v1473 = vpack.c.b16 %v1121, %v1117
    %v1474 = vpack.c.b16 %v1122, %v1118
    %v1475 = vpack.c.b16 %v1123, %v1119
    %v1476 = vpack.c.b16 %v1128, %v1124
    %v1477 = vpack.c.b16 %v1129, %v1125
    %v1478 = vpack.c.b16 %v1130, %v1126
    %v1479 = vpack.c.b16 %v1131, %v1127
    %v1480 = vpack.c.b16 %v1136, %v1132
    %v1481 = vpack.c.b16 %v1137, %v1133
    %v1482 = vpack.c.b16 %v1138, %v1134
    %v1483 = vpack.c.b16 %v1139, %v1135
    %v1484 = vpack.c.b16 %v1144, %v1140
    %v1485 = vpack.c.b16 %v1145, %v1141
    %v1486 = vpack.c.b16 %v1146, %v1142
    %v1487 = vpack.c.b16 %v1147, %v1143
    %v1488 = vpack.c.b16 %v1152, %v1148
    %v1489 = vpack.c.b16 %v1153, %v1149
    %v1490 = vpack.c.b16 %v1154, %v1150
    %v1491 = vpack.c.b16 %v1155, %v1151
    %v1492 = vpack.c.b16 %v1160, %v1156
    %v1493 = vpack.c.b16 %v1161, %v1157
    %v1494 = vpack.c.b16 %v1162, %v1158
    %v1495 = vpack.c.b16 %v1163, %v1159
    %v1496 = vpack.c.b16 %v1168, %v1164
    %v1497 = vpack.c.b16 %v1169, %v1165
    %v1498 = vpack.c.b16 %v1170, %v1166
    %v1499 = vpack.c.b16 %v1171, %v1167
    %v1500 = vpack.c.b16 %v1176, %v1172
    %v1501 = vpack.c.b16 %v1177, %v1173
    %v1502 = vpack.c.b16 %v1178, %v1174
    %v1503 = vpack.c.b16 %v1179, %v1175
    %v1504 = vpack.c.b16 %v1184, %v1180
    %v1505 = vpack.c.b16 %v1185, %v1181
    %v1506 = vpack.c.b16 %v1186, %v1182
    %v1507 = vpack.c.b16 %v1187, %v1183
    %v1508 = vpack.c.b16 %v1192, %v1188
    %v1509 = vpack.c.b16 %v1193, %v1189
    %v1510 = vpack.c.b16 %v1194, %v1190
    %v1511 = vpack.c.b16 %v1195, %v1191
    %v1512 = vpack.c.b16 %v1200, %v1196
    %v1513 = vpack.c.b16 %v1201, %v1197
    %v1514 = vpack.c.b16 %v1202, %v1198
    %v1515 = vpack.c.b16 %v1203, %v1199
    %v1516 = vpack.c.b16 %v1208, %v1204
    %v1517 = vpack.c.b16 %v1209, %v1205
    %v1518 = vpack.c.b16 %v1210, %v1206
    %v1519 = vpack.c.b16 %v1211, %v1207
    %v1520 = vpack.c.b16 %v1216, %v1212
    %v1521 = vpack.c.b16 %v1217, %v1213
    %v1522 = vpack.c.b16 %v1218, %v1214
    %v1523 = vpack.c.b16 %v1219, %v1215
    %v1524 = vpack.c.b16 %v1224, %v1220
    %v1525 = vpack.c.b16 %v1225, %v1221
    %v1526 = vpack.c.b16 %v1226, %v1222
    %v1527 = vpack.c.b16 %v1227, %v1223
    %v1528 = vpack.c.b16 %v1232, %v1228
    %v1529 = vpack.c.b16 %v1233, %v1229
    %v1530 = vpack.c.b16 %v1234, %v1230
    %v1531 = vpack.c.b16 %v1235, %v1231
    %v1532 = vpack.c.b16 %v1240, %v1236
    %v1533 = vpack.c.b16 %v1241, %v1237
    %v1534 = vpack.c.b16 %v1242, %v1238
    %v1535 = vpack.c.b16 %v1243, %v1239
    %v1536 = vpack.c.b16 %v1248, %v1244
    %v1537 = vpack.c.b16 %v1249, %v1245
    %v1538 = vpack.c.b16 %v1250, %v1246
    %v1539 = vpack.c.b16 %v1251, %v1247
    %v1540 = vpack.c.b16 %v1256, %v1252
    %v1541 = vpack.c.b16 %v1257, %v1253
    %v1542 = vpack.c.b16 %v1258, %v1254
    %v1543 = vpack.c.b16 %v1259, %v1255
    %v1544 = vpack.c.b16 %v1264, %v1260
    %v1545 = vpack.c.b16 %v1265, %v1261
    %v1546 = vpack.c.b16 %v1266, %v1262
    %v1547 = vpack.c.b16 %v1267, %v1263
    %v1548 = vpack.c.b16 %v1272, %v1268
    %v1549 = vpack.c.b16 %v1273, %v1269
    %v1550 = vpack.c.b16 %v1274, %v1270
    %v1551 = vpack.c.b16 %v1275, %v1271
    %v1552 = vpack.c.b16 %v1280, %v1276
    %v1553 = vpack.c.b16 %v1281, %v1277
    %v1554 = vpack.c.b16 %v1282, %v1278
    %v1555 = vpack.c.b16 %v1283, %v1279
    %v1556 = vpack.c.b16 %v1288, %v1284
    %v1557 = vpack.c.b16 %v1289, %v1285
    %v1558 = vpack.c.b16 %v1290, %v1286
    %v1559 = vpack.c.b16 %v1291, %v1287
    %v1560 = vpack.c.b16 %v1296, %v1292
    %v1561 = vpack.c.b16 %v1297, %v1293
    %v1562 = vpack.c.b16 %v1298, %v1294
    %v1563 = vpack.c.b16 %v1299, %v1295
    %v1564 = vpack.c.b16 %v1304, %v1300
    %v1565 = vpack.c.b16 %v1305, %v1301
    %v1566 = vpack.c.b16 %v1306, %v1302
    %v1567 = vpack.c.b16 %v1307, %v1303
    %v1568 = vpack.c.b16 %v1312, %v1308
    %v1569 = vpack.c.b16 %v1313, %v1309
    %v1570 = vpack.c.b16 %v1314, %v1310
    %v1571 = vpack.c.b16 %v1315, %v1311
    %v1572 = vpack.c.b16 %v1320, %v1316
    %v1573 = vpack.c.b16 %v1321, %v1317
    %v1574 = vpack.c.b16 %v1322, %v1318
    %v1575 = vpack.c.b16 %v1323, %v1319
    %v1576 = vpack.c.b16 %v1328, %v1324
    %v1577 = vpack.c.b16 %v1329, %v1325
    %v1578 = vpack.c.b16 %v1330, %v1326
    %v1579 = vpack.c.b16 %v1331, %v1327
    %v1580 = vpack.c.b16 %v1336, %v1332
    %v1581 = vpack.c.b16 %v1337, %v1333
    %v1582 = vpack.c.b16 %v1338, %v1334
    %v1583 = vpack.c.b16 %v1339, %v1335
    %v1584 = vpack.c.b16 %v1344, %v1340
    %v1585 = vpack.c.b16 %v1345, %v1341
    %v1586 = vpack.c.b16 %v1346, %v1342
    %v1587 = vpack.c.b16 %v1347, %v1343
    %v1588 = vpack.c.b16 %v1352, %v1348
    %v1589 = vpack.c.b16 %v1353, %v1349
    %v1590 = vpack.c.b16 %v1354, %v1350
    %v1591 = vpack.c.b16 %v1355, %v1351
    %v1592 = vpack.c.b16 %v1360, %v1356
    %v1593 = vpack.c.b16 %v1361, %v1357
    %v1594 = vpack.c.b16 %v1362, %v1358
    %v1595 = vpack.c.b16 %v1363, %v1359
    %v1596 = vpack.c.b16 %v1368, %v1364
    %v1597 = vpack.c.b16 %v1369, %v1365
    %v1598 = vpack.c.b16 %v1370, %v1366
    %v1599 = vpack.c.b16 %v1371, %v1367
    %v1600 = vpack.c.b16 %v1376, %v1372
    %v1601 = vpack.c.b16 %v1377, %v1373
    %v1602 = vpack.c.b16 %v1378, %v1374
    %v1603 = vpack.c.b16 %v1379, %v1375
    %v1604 = vpack.c.b16 %v1384, %v1380
    %v1605 = vpack.c.b16 %v1385, %v1381
    %v1606 = vpack.c.b16 %v1386, %v1382
    %v1607 = vpack.c.b16 %v1387, %v1383
    %v1608 = vpack.c.b16 %v1392, %v1388
    %v1609 = vpack.c.b16 %v1393, %v1389
    %v1610 = vpack.c.b16 %v1394, %v1390
    %v1611 = vpack.c.b16 %v1395, %v1391
    %v1612 = vpack.c.b16 %v1400, %v1396
    %v1613 = vpack.c.b16 %v1401, %v1397
    %v1614 = vpack.c.b16 %v1402, %v1398
    %v1615 = vpack.c.b16 %v1403, %v1399
    %v1616 = vpack.c.b16 %v1408, %v1404
    %v1617 = vpack.c.b16 %v1409, %v1405
    %v1618 = vpack.c.b16 %v1410, %v1406
    %v1619 = vpack.c.b16 %v1411, %v1407
    %v1620 = vpack.c.b16 %v1416, %v1412
    %v1621 = vpack.c.b16 %v1417, %v1413
    %v1622 = vpack.c.b16 %v1418, %v1414
    %v1623 = vpack.c.b16 %v1419, %v1415
    %v1624 = vpack.c.b16 %v1424, %v1420
    %v1625 = vpack.c.b16 %v1425, %v1421
    %v1626 = vpack.c.b16 %v1426, %v1422
    %v1627 = vpack.c.b16 %v1427, %v1423
    %v1628 = vpack.c.b16 %v1432, %v1428
    %v1629 = vpack.c.b16 %v1433, %v1429
    %v1630 = vpack.c.b16 %v1434, %v1430
    %v1631 = vpack.c.b16 %v1435, %v1431
    %v1632 = vpack.c.b16 %v1440, %v1436
    %v1633 = vpack.c.b16 %v1441, %v1437
    %v1634 = vpack.c.b16 %v1442, %v1438
    %v1635 = vpack.c.b16 %v1443, %v1439
    %1828 = vmatprep.subr.bf16.mxu0 %v1473
    %1829 = vmatpush1.bf16.msra.mxu0 %v1472
    %1830 = vmatprep.subr.bf16.mxu0 %v1469
    %1831 = vmatpush1.bf16.msra.mxu0 %v1468
    %1832 = vmatprep.subr.bf16.mxu0 %v1465
    %1833 = vmatpush1.bf16.msra.mxu0 %v1464
    %1834 = vmatprep.subr.bf16.mxu0 %v1461
    %1835 = vmatpush1.bf16.msra.mxu0 %v1460
    %1836 = vmatprep.subr.bf16.mxu0 %v1457
    %1837 = vmatpush1.bf16.msra.mxu0 %v1456
    %1838 = vmatprep.subr.bf16.mxu0 %v1453
    %1839 = vmatpush1.bf16.msra.mxu0 %v1452
    %1840 = vmatprep.subr.bf16.mxu0 %v1449
    %1841 = vmatpush1.bf16.msra.mxu0 %v1448
    %1842 = vmatprep.subr.bf16.mxu0 %v1445
    %1843 = vmatpush1.bf16.msra.mxu0 %v1444
    %1844 = vmatprep.subr.bf16.mxu0 %v1505
    %1845 = vmatpush2.bf16.msra.mxu0 %v1504
    %1846 = vmatprep.subr.bf16.mxu0 %v1501
    %1847 = vmatpush2.bf16.msra.mxu0 %v1500
    %1848 = vmatprep.subr.bf16.mxu0 %v1497
    %1849 = vmatpush2.bf16.msra.mxu0 %v1496
    %1850 = vmatprep.subr.bf16.mxu0 %v1493
    %1851 = vmatpush2.bf16.msra.mxu0 %v1492
    %1852 = vmatprep.subr.bf16.mxu0 %v1489
    %1853 = vmatpush2.bf16.msra.mxu0 %v1488
    %1854 = vmatprep.subr.bf16.mxu0 %v1485
    %1855 = vmatpush2.bf16.msra.mxu0 %v1484
    %1856 = vmatprep.subr.bf16.mxu0 %v1481
    %1857 = vmatpush2.bf16.msra.mxu0 %v1480
    %1858 = vmatprep.subr.bf16.mxu0 %v1477
    %1859 = vmatpush2.bf16.msra.mxu0 %v1476
    %1860 = vmatprep.mubr.bf16.mxu0 %v649
    %1861 = vmatmul.mubr.bf16.gmra.mxu0 %v648
    %v1862 = vpop.f32.mrf.mxu0
    %v1863 = vadd.f32 %v851, %v1862
    %v1864 = vpop.f32.mrf.mxu0
    %v1865 = vadd.f32 %v855, %v1864
    %v1866 = vpop.f32.mrf.mxu0
    %v1867 = vadd.f32 %v851, %v1866
    %v1868 = vpop.f32.mrf.mxu0
    %v1869 = vadd.f32 %v855, %v1868
    %1870 = vdwg.mxu0
    %1871 = vmatprep.subr.bf16.mxu0 %v1537
    %1872 = vmatpush1.bf16.msra.mxu0 %v1536
    %1873 = vmatprep.subr.bf16.mxu0 %v1533
    %1874 = vmatpush1.bf16.msra.mxu0 %v1532
    %1875 = vmatprep.subr.bf16.mxu0 %v1529
    %1876 = vmatpush1.bf16.msra.mxu0 %v1528
    %1877 = vmatprep.subr.bf16.mxu0 %v1525
    %1878 = vmatpush1.bf16.msra.mxu0 %v1524
    %1879 = vmatprep.subr.bf16.mxu0 %v1521
    %1880 = vmatpush1.bf16.msra.mxu0 %v1520
    %1881 = vmatprep.subr.bf16.mxu0 %v1517
    %1882 = vmatpush1.bf16.msra.mxu0 %v1516
    %1883 = vmatprep.subr.bf16.mxu0 %v1513
    %1884 = vmatpush1.bf16.msra.mxu0 %v1512
    %1885 = vmatprep.subr.bf16.mxu0 %v1509
    %1886 = vmatpush1.bf16.msra.mxu0 %v1508
    %1887 = vmatprep.subr.bf16.mxu0 %v1569
    %1888 = vmatpush2.bf16.msra.mxu0 %v1568
    %1889 = vmatprep.subr.bf16.mxu0 %v1565
    %1890 = vmatpush2.bf16.msra.mxu0 %v1564
    %1891 = vmatprep.subr.bf16.mxu0 %v1561
    %1892 = vmatpush2.bf16.msra.mxu0 %v1560
    %1893 = vmatprep.subr.bf16.mxu0 %v1557
    %1894 = vmatpush2.bf16.msra.mxu0 %v1556
    %1895 = vmatprep.subr.bf16.mxu0 %v1553
    %1896 = vmatpush2.bf16.msra.mxu0 %v1552
    %1897 = vmatprep.subr.bf16.mxu0 %v1549
    %1898 = vmatpush2.bf16.msra.mxu0 %v1548
    %1899 = vmatprep.subr.bf16.mxu0 %v1545
    %1900 = vmatpush2.bf16.msra.mxu0 %v1544
    %1901 = vmatprep.subr.bf16.mxu0 %v1541
    %1902 = vmatpush2.bf16.msra.mxu0 %v1540
    %1903 = vmatprep.mubr.bf16.mxu0 %v651
    %1904 = vmatmul.mubr.bf16.gmra.mxu0 %v650
    %v1905 = vpop.f32.mrf.mxu0
    %v1906 = vadd.f32 %v1863, %v1905
    %v1907 = vpop.f32.mrf.mxu0
    %v1908 = vadd.f32 %v1865, %v1907
    %v1909 = vpop.f32.mrf.mxu0
    %v1910 = vadd.f32 %v1867, %v1909
    %v1911 = vpop.f32.mrf.mxu0
    %v1912 = vadd.f32 %v1869, %v1911
    %1913 = vdwg.mxu0
    %1914 = vmatprep.subr.bf16.mxu0 %v1601
    %1915 = vmatpush1.bf16.msra.mxu0 %v1600
    %1916 = vmatprep.subr.bf16.mxu0 %v1597
    %1917 = vmatpush1.bf16.msra.mxu0 %v1596
    %1918 = vmatprep.subr.bf16.mxu0 %v1593
    %1919 = vmatpush1.bf16.msra.mxu0 %v1592
    %1920 = vmatprep.subr.bf16.mxu0 %v1589
    %1921 = vmatpush1.bf16.msra.mxu0 %v1588
    %1922 = vmatprep.subr.bf16.mxu0 %v1585
    %1923 = vmatpush1.bf16.msra.mxu0 %v1584
    %1924 = vmatprep.subr.bf16.mxu0 %v1581
    %1925 = vmatpush1.bf16.msra.mxu0 %v1580
    %1926 = vmatprep.subr.bf16.mxu0 %v1577
    %1927 = vmatpush1.bf16.msra.mxu0 %v1576
    %1928 = vmatprep.subr.bf16.mxu0 %v1573
    %1929 = vmatpush1.bf16.msra.mxu0 %v1572
    %1930 = vmatprep.subr.bf16.mxu0 %v1633
    %1931 = vmatpush2.bf16.msra.mxu0 %v1632
    %1932 = vmatprep.subr.bf16.mxu0 %v1629
    %1933 = vmatpush2.bf16.msra.mxu0 %v1628
    %1934 = vmatprep.subr.bf16.mxu0 %v1625
    %1935 = vmatpush2.bf16.msra.mxu0 %v1624
    %1936 = vmatprep.subr.bf16.mxu0 %v1621
    %1937 = vmatpush2.bf16.msra.mxu0 %v1620
    %1938 = vmatprep.subr.bf16.mxu0 %v1617
    %1939 = vmatpush2.bf16.msra.mxu0 %v1616
    %1940 = vmatprep.subr.bf16.mxu0 %v1613
    %1941 = vmatpush2.bf16.msra.mxu0 %v1612
    %1942 = vmatprep.subr.bf16.mxu0 %v1609
    %1943 = vmatpush2.bf16.msra.mxu0 %v1608
    %1944 = vmatprep.subr.bf16.mxu0 %v1605
    %1945 = vmatpush2.bf16.msra.mxu0 %v1604
    %1946 = vmatprep.mubr.bf16.mxu0 %v653
    %1947 = vmatmul.mubr.bf16.gmra.mxu0 %v652
    %v1948 = vpop.f32.mrf.mxu0
    %v1949 = vadd.f32 %v1906, %v1948
    %v1950 = vpop.f32.mrf.mxu0
    %v1951 = vadd.f32 %v1908, %v1950
    %v1952 = vpop.f32.mrf.mxu0
    %v1953 = vadd.f32 %v1910, %v1952
    %v1954 = vpop.f32.mrf.mxu0
    %v1955 = vadd.f32 %v1912, %v1954
    %1956 = vdwg.mxu0
    %1957 = vmatprep.subr.bf16.mxu0 %v1475
    %1958 = vmatpush1.bf16.msra.mxu0 %v1474
    %1959 = vmatprep.subr.bf16.mxu0 %v1471
    %1960 = vmatpush1.bf16.msra.mxu0 %v1470
    %1961 = vmatprep.subr.bf16.mxu0 %v1467
    %1962 = vmatpush1.bf16.msra.mxu0 %v1466
    %1963 = vmatprep.subr.bf16.mxu0 %v1463
    %1964 = vmatpush1.bf16.msra.mxu0 %v1462
    %1965 = vmatprep.subr.bf16.mxu0 %v1459
    %1966 = vmatpush1.bf16.msra.mxu0 %v1458
    %1967 = vmatprep.subr.bf16.mxu0 %v1455
    %1968 = vmatpush1.bf16.msra.mxu0 %v1454
    %1969 = vmatprep.subr.bf16.mxu0 %v1451
    %1970 = vmatpush1.bf16.msra.mxu0 %v1450
    %1971 = vmatprep.subr.bf16.mxu0 %v1447
    %1972 = vmatpush1.bf16.msra.mxu0 %v1446
    %1973 = vmatprep.subr.bf16.mxu0 %v1507
    %1974 = vmatpush2.bf16.msra.mxu0 %v1506
    %1975 = vmatprep.subr.bf16.mxu0 %v1503
    %1976 = vmatpush2.bf16.msra.mxu0 %v1502
    %1977 = vmatprep.subr.bf16.mxu0 %v1499
    %1978 = vmatpush2.bf16.msra.mxu0 %v1498
    %1979 = vmatprep.subr.bf16.mxu0 %v1495
    %1980 = vmatpush2.bf16.msra.mxu0 %v1494
    %1981 = vmatprep.subr.bf16.mxu0 %v1491
    %1982 = vmatpush2.bf16.msra.mxu0 %v1490
    %1983 = vmatprep.subr.bf16.mxu0 %v1487
    %1984 = vmatpush2.bf16.msra.mxu0 %v1486
    %1985 = vmatprep.subr.bf16.mxu0 %v1483
    %1986 = vmatpush2.bf16.msra.mxu0 %v1482
    %1987 = vmatprep.subr.bf16.mxu0 %v1479
    %1988 = vmatpush2.bf16.msra.mxu0 %v1478
    %1989 = vmatprep.mubr.bf16.mxu0 %v649
    %1990 = vmatmul.mubr.bf16.gmra.mxu0 %v648
    %v1991 = vpop.f32.mrf.mxu0
    %v1992 = vadd.f32 %v859, %v1991
    %v1993 = vpop.f32.mrf.mxu0
    %v1994 = vadd.f32 %v863, %v1993
    %v1995 = vpop.f32.mrf.mxu0
    %v1996 = vadd.f32 %v859, %v1995
    %v1997 = vpop.f32.mrf.mxu0
    %v1998 = vadd.f32 %v863, %v1997
    %1999 = vdwg.mxu0
    %2000 = vmatprep.subr.bf16.mxu0 %v1539
    %2001 = vmatpush1.bf16.msra.mxu0 %v1538
    %2002 = vmatprep.subr.bf16.mxu0 %v1535
    %2003 = vmatpush1.bf16.msra.mxu0 %v1534
    %2004 = vmatprep.subr.bf16.mxu0 %v1531
    %2005 = vmatpush1.bf16.msra.mxu0 %v1530
    %2006 = vmatprep.subr.bf16.mxu0 %v1527
    %2007 = vmatpush1.bf16.msra.mxu0 %v1526
    %2008 = vmatprep.subr.bf16.mxu0 %v1523
    %2009 = vmatpush1.bf16.msra.mxu0 %v1522
    %2010 = vmatprep.subr.bf16.mxu0 %v1519
    %2011 = vmatpush1.bf16.msra.mxu0 %v1518
    %2012 = vmatprep.subr.bf16.mxu0 %v1515
    %2013 = vmatpush1.bf16.msra.mxu0 %v1514
    %2014 = vmatprep.subr.bf16.mxu0 %v1511
    %2015 = vmatpush1.bf16.msra.mxu0 %v1510
    %2016 = vmatprep.subr.bf16.mxu0 %v1571
    %2017 = vmatpush2.bf16.msra.mxu0 %v1570
    %2018 = vmatprep.subr.bf16.mxu0 %v1567
    %2019 = vmatpush2.bf16.msra.mxu0 %v1566
    %2020 = vmatprep.subr.bf16.mxu0 %v1563
    %2021 = vmatpush2.bf16.msra.mxu0 %v1562
    %2022 = vmatprep.subr.bf16.mxu0 %v1559
    %2023 = vmatpush2.bf16.msra.mxu0 %v1558
    %2024 = vmatprep.subr.bf16.mxu0 %v1555
    %2025 = vmatpush2.bf16.msra.mxu0 %v1554
    %2026 = vmatprep.subr.bf16.mxu0 %v1551
    %2027 = vmatpush2.bf16.msra.mxu0 %v1550
    %2028 = vmatprep.subr.bf16.mxu0 %v1547
    %2029 = vmatpush2.bf16.msra.mxu0 %v1546
    %2030 = vmatprep.subr.bf16.mxu0 %v1543
    %2031 = vmatpush2.bf16.msra.mxu0 %v1542
    %2032 = vmatprep.mubr.bf16.mxu0 %v651
    %2033 = vmatmul.mubr.bf16.gmra.mxu0 %v650
    %v2034 = vpop.f32.mrf.mxu0
    %v2035 = vadd.f32 %v1992, %v2034
    %v2036 = vpop.f32.mrf.mxu0
    %v2037 = vadd.f32 %v1994, %v2036
    %v2038 = vpop.f32.mrf.mxu0
    %v2039 = vadd.f32 %v1996, %v2038
    %v2040 = vpop.f32.mrf.mxu0
    %v2041 = vadd.f32 %v1998, %v2040
    %2042 = vdwg.mxu0
    %2043 = vmatprep.subr.bf16.mxu0 %v1603
    %2044 = vmatpush1.bf16.msra.mxu0 %v1602
    %2045 = vmatprep.subr.bf16.mxu0 %v1599
    %2046 = vmatpush1.bf16.msra.mxu0 %v1598
    %2047 = vmatprep.subr.bf16.mxu0 %v1595
    %2048 = vmatpush1.bf16.msra.mxu0 %v1594
    %2049 = vmatprep.subr.bf16.mxu0 %v1591
    %2050 = vmatpush1.bf16.msra.mxu0 %v1590
    %2051 = vmatprep.subr.bf16.mxu0 %v1587
    %2052 = vmatpush1.bf16.msra.mxu0 %v1586
    %2053 = vmatprep.subr.bf16.mxu0 %v1583
    %2054 = vmatpush1.bf16.msra.mxu0 %v1582
    %2055 = vmatprep.subr.bf16.mxu0 %v1579
    %2056 = vmatpush1.bf16.msra.mxu0 %v1578
    %2057 = vmatprep.subr.bf16.mxu0 %v1575
    %2058 = vmatpush1.bf16.msra.mxu0 %v1574
    %2059 = vmatprep.subr.bf16.mxu0 %v1635
    %2060 = vmatpush2.bf16.msra.mxu0 %v1634
    %2061 = vmatprep.subr.bf16.mxu0 %v1631
    %2062 = vmatpush2.bf16.msra.mxu0 %v1630
    %2063 = vmatprep.subr.bf16.mxu0 %v1627
    %2064 = vmatpush2.bf16.msra.mxu0 %v1626
    %2065 = vmatprep.subr.bf16.mxu0 %v1623
    %2066 = vmatpush2.bf16.msra.mxu0 %v1622
    %2067 = vmatprep.subr.bf16.mxu0 %v1619
    %2068 = vmatpush2.bf16.msra.mxu0 %v1618
    %2069 = vmatprep.subr.bf16.mxu0 %v1615
    %2070 = vmatpush2.bf16.msra.mxu0 %v1614
    %2071 = vmatprep.subr.bf16.mxu0 %v1611
    %2072 = vmatpush2.bf16.msra.mxu0 %v1610
    %2073 = vmatprep.subr.bf16.mxu0 %v1607
    %2074 = vmatpush2.bf16.msra.mxu0 %v1606
    %2075 = vmatprep.mubr.bf16.mxu0 %v653
    %2076 = vmatmul.mubr.bf16.gmra.mxu0 %v652
    %v2077 = vpop.f32.mrf.mxu0
    %v2078 = vadd.f32 %v2035, %v2077
    %v2079 = vpop.f32.mrf.mxu0
    %v2080 = vadd.f32 %v2037, %v2079
    %v2081 = vpop.f32.mrf.mxu0
    %v2082 = vadd.f32 %v2039, %v2081
    %v2083 = vpop.f32.mrf.mxu0
    %v2084 = vadd.f32 %v2041, %v2083
    %2085 = vdwg.mxu0
    %v2086 = vmax.f32 %v1949, 0.0
    %v2087 = vmax.f32 %v1951, 0.0
    %v2088 = vmax.f32 %v2078, 0.0
    %v2089 = vmax.f32 %v2080, 0.0
    %v2090 = vmax.f32 %v1953, 0.0
    %v2091 = vmax.f32 %v1955, 0.0
    %v2092 = vmax.f32 %v2082, 0.0
    %v2093 = vmax.f32 %v2084, 0.0
    %v2094 = vpack.c.bf16 %v2090, %v2086
    %v2095 = vpack.c.bf16 %v2091, %v2087
    %v2096 = vpack.c.bf16 %v2092, %v2088
    %v2097 = vpack.c.bf16 %v2093, %v2089
    %v2098 = vld [vmem:[#allocation10] sm:$0xff]
    %v2099 = vld [vmem:[#allocation10 + $0x8] sm:$0xff]
    %v2100 = vld [vmem:[#allocation10 + $0x10] sm:$0xff]
    %v2101 = vld [vmem:[#allocation10 + $0x18] sm:$0xff]
    %v2102 = vld [vmem:[#allocation10 + $0x20] sm:$0xff]
    %v2103 = vld [vmem:[#allocation10 + $0x28] sm:$0xff]
    %v2104 = vld [vmem:[#allocation10 + $0x30] sm:$0xff]
    %v2105 = vld [vmem:[#allocation10 + $0x38] sm:$0xff]
    %v2106 = vld [vmem:[#allocation10 + $0x40] sm:$0xff]
    %v2107 = vld [vmem:[#allocation10 + $0x48] sm:$0xff]
    %v2108 = vld [vmem:[#allocation10 + $0x50] sm:$0xff]
    %v2109 = vld [vmem:[#allocation10 + $0x58] sm:$0xff]
    %v2110 = vld [vmem:[#allocation10 + $0x60] sm:$0xff]
    %v2111 = vld [vmem:[#allocation10 + $0x68] sm:$0xff]
    %v2112 = vld [vmem:[#allocation10 + $0x70] sm:$0xff]
    %v2113 = vld [vmem:[#allocation10 + $0x78] sm:$0xff]
    %v2114 = vld [vmem:[#allocation10 + $0x80] sm:$0xff]
    %v2115 = vld [vmem:[#allocation10 + $0x88] sm:$0xff]
    %v2116 = vld [vmem:[#allocation10 + $0x90] sm:$0xff]
    %v2117 = vld [vmem:[#allocation10 + $0x98] sm:$0xff]
    %v2118 = vld [vmem:[#allocation10 + $0xa0] sm:$0xff]
    %v2119 = vld [vmem:[#allocation10 + $0xa8] sm:$0xff]
    %v2120 = vld [vmem:[#allocation10 + $0xb0] sm:$0xff]
    %v2121 = vld [vmem:[#allocation10 + $0xb8] sm:$0xff]
    %v2122 = vld [vmem:[#allocation10 + $0xc0] sm:$0xff]
    %v2123 = vld [vmem:[#allocation10 + $0xc8] sm:$0xff]
    %v2124 = vld [vmem:[#allocation10 + $0xd0] sm:$0xff]
    %v2125 = vld [vmem:[#allocation10 + $0xd8] sm:$0xff]
    %v2126 = vld [vmem:[#allocation10 + $0xe0] sm:$0xff]
    %v2127 = vld [vmem:[#allocation10 + $0xe8] sm:$0xff]
    %v2128 = vld [vmem:[#allocation10 + $0xf0] sm:$0xff]
    %v2129 = vld [vmem:[#allocation10 + $0xf8] sm:$0xff]
    %v2130 = vld [vmem:[#allocation10 + $0x100] sm:$0xff]
    %v2131 = vld [vmem:[#allocation10 + $0x108] sm:$0xff]
    %v2132 = vld [vmem:[#allocation10 + $0x110] sm:$0xff]
    %v2133 = vld [vmem:[#allocation10 + $0x118] sm:$0xff]
    %v2134 = vld [vmem:[#allocation10 + $0x120] sm:$0xff]
    %v2135 = vld [vmem:[#allocation10 + $0x128] sm:$0xff]
    %v2136 = vld [vmem:[#allocation10 + $0x130] sm:$0xff]
    %v2137 = vld [vmem:[#allocation10 + $0x138] sm:$0xff]
    %v2138 = vld [vmem:[#allocation10 + $0x140] sm:$0xff]
    %v2139 = vld [vmem:[#allocation10 + $0x148] sm:$0xff]
    %v2140 = vld [vmem:[#allocation10 + $0x150] sm:$0xff]
    %v2141 = vld [vmem:[#allocation10 + $0x158] sm:$0xff]
    %v2142 = vld [vmem:[#allocation10 + $0x160] sm:$0xff]
    %v2143 = vld [vmem:[#allocation10 + $0x168] sm:$0xff]
    %v2144 = vld [vmem:[#allocation10 + $0x170] sm:$0xff]
    %v2145 = vld [vmem:[#allocation10 + $0x178] sm:$0xff]
    %v2146 = vld [vmem:[#allocation10 + $0x180] sm:$0xff]
    %v2147 = vld [vmem:[#allocation10 + $0x188] sm:$0xff]
    %v2148 = vld [vmem:[#allocation10 + $0x190] sm:$0xff]
    %v2149 = vld [vmem:[#allocation10 + $0x198] sm:$0xff]
    %v2150 = vld [vmem:[#allocation10 + $0x1a0] sm:$0xff]
    %v2151 = vld [vmem:[#allocation10 + $0x1a8] sm:$0xff]
    %v2152 = vld [vmem:[#allocation10 + $0x1b0] sm:$0xff]
    %v2153 = vld [vmem:[#allocation10 + $0x1b8] sm:$0xff]
    %v2154 = vld [vmem:[#allocation10 + $0x1c0] sm:$0xff]
    %v2155 = vld [vmem:[#allocation10 + $0x1c8] sm:$0xff]
    %v2156 = vld [vmem:[#allocation10 + $0x1d0] sm:$0xff]
    %v2157 = vld [vmem:[#allocation10 + $0x1d8] sm:$0xff]
    %v2158 = vld [vmem:[#allocation10 + $0x1e0] sm:$0xff]
    %v2159 = vld [vmem:[#allocation10 + $0x1e8] sm:$0xff]
    %v2160 = vld [vmem:[#allocation10 + $0x1f0] sm:$0xff]
    %v2161 = vld [vmem:[#allocation10 + $0x1f8] sm:$0xff]
    %v2162 = vld [vmem:[#allocation11] sm:$0x3]
    %v2164 = vlaneseq
    %v2165 = vshrl.u32 %v2164, 7
    %v2166 = vsub.s32 0, %v2165
    %v2167 = vrot.slane %v2162, %v2166
    %v2168 = vlaneseq
    %v2169 = vshrl.u32 %v2168, 7
    %v2170 = vsub.s32 1, %v2169
    %v2171 = vrot.slane %v2162, %v2170
    %v2238 = vunpack.c.l.b16 %v2098
    %v2239 = vunpack.c.h.b16 %v2098
    %v2240 = vunpack.c.l.b16 %v2099
    %v2241 = vunpack.c.h.b16 %v2099
    %v2242 = vunpack.c.l.b16 %v2100
    %v2243 = vunpack.c.h.b16 %v2100
    %v2244 = vunpack.c.l.b16 %v2101
    %v2245 = vunpack.c.h.b16 %v2101
    %v2246 = vunpack.c.l.b16 %v2102
    %v2247 = vunpack.c.h.b16 %v2102
    %v2248 = vunpack.c.l.b16 %v2103
    %v2249 = vunpack.c.h.b16 %v2103
    %v2250 = vunpack.c.l.b16 %v2104
    %v2251 = vunpack.c.h.b16 %v2104
    %v2252 = vunpack.c.l.b16 %v2105
    %v2253 = vunpack.c.h.b16 %v2105
    %v2254 = vunpack.c.l.b16 %v2106
    %v2255 = vunpack.c.h.b16 %v2106
    %v2256 = vunpack.c.l.b16 %v2107
    %v2257 = vunpack.c.h.b16 %v2107
    %v2258 = vunpack.c.l.b16 %v2108
    %v2259 = vunpack.c.h.b16 %v2108
    %v2260 = vunpack.c.l.b16 %v2109
    %v2261 = vunpack.c.h.b16 %v2109
    %v2262 = vunpack.c.l.b16 %v2110
    %v2263 = vunpack.c.h.b16 %v2110
    %v2264 = vunpack.c.l.b16 %v2111
    %v2265 = vunpack.c.h.b16 %v2111
    %v2266 = vunpack.c.l.b16 %v2112
    %v2267 = vunpack.c.h.b16 %v2112
    %v2268 = vunpack.c.l.b16 %v2113
    %v2269 = vunpack.c.h.b16 %v2113
    %v2270 = vunpack.c.l.b16 %v2114
    %v2271 = vunpack.c.h.b16 %v2114
    %v2272 = vunpack.c.l.b16 %v2115
    %v2273 = vunpack.c.h.b16 %v2115
    %v2274 = vunpack.c.l.b16 %v2116
    %v2275 = vunpack.c.h.b16 %v2116
    %v2276 = vunpack.c.l.b16 %v2117
    %v2277 = vunpack.c.h.b16 %v2117
    %v2278 = vunpack.c.l.b16 %v2118
    %v2279 = vunpack.c.h.b16 %v2118
    %v2280 = vunpack.c.l.b16 %v2119
    %v2281 = vunpack.c.h.b16 %v2119
    %v2282 = vunpack.c.l.b16 %v2120
    %v2283 = vunpack.c.h.b16 %v2120
    %v2284 = vunpack.c.l.b16 %v2121
    %v2285 = vunpack.c.h.b16 %v2121
    %v2286 = vunpack.c.l.b16 %v2122
    %v2287 = vunpack.c.h.b16 %v2122
    %v2288 = vunpack.c.l.b16 %v2123
    %v2289 = vunpack.c.h.b16 %v2123
    %v2290 = vunpack.c.l.b16 %v2124
    %v2291 = vunpack.c.h.b16 %v2124
    %v2292 = vunpack.c.l.b16 %v2125
    %v2293 = vunpack.c.h.b16 %v2125
    %v2294 = vunpack.c.l.b16 %v2126
    %v2295 = vunpack.c.h.b16 %v2126
    %v2296 = vunpack.c.l.b16 %v2127
    %v2297 = vunpack.c.h.b16 %v2127
    %v2298 = vunpack.c.l.b16 %v2128
    %v2299 = vunpack.c.h.b16 %v2128
    %v2300 = vunpack.c.l.b16 %v2129
    %v2301 = vunpack.c.h.b16 %v2129
    %v2302 = vunpack.c.l.b16 %v2130
    %v2303 = vunpack.c.h.b16 %v2130
    %v2304 = vunpack.c.l.b16 %v2131
    %v2305 = vunpack.c.h.b16 %v2131
    %v2306 = vunpack.c.l.b16 %v2132
    %v2307 = vunpack.c.h.b16 %v2132
    %v2308 = vunpack.c.l.b16 %v2133
    %v2309 = vunpack.c.h.b16 %v2133
    %v2310 = vunpack.c.l.b16 %v2134
    %v2311 = vunpack.c.h.b16 %v2134
    %v2312 = vunpack.c.l.b16 %v2135
    %v2313 = vunpack.c.h.b16 %v2135
    %v2314 = vunpack.c.l.b16 %v2136
    %v2315 = vunpack.c.h.b16 %v2136
    %v2316 = vunpack.c.l.b16 %v2137
    %v2317 = vunpack.c.h.b16 %v2137
    %v2318 = vunpack.c.l.b16 %v2138
    %v2319 = vunpack.c.h.b16 %v2138
    %v2320 = vunpack.c.l.b16 %v2139
    %v2321 = vunpack.c.h.b16 %v2139
    %v2322 = vunpack.c.l.b16 %v2140
    %v2323 = vunpack.c.h.b16 %v2140
    %v2324 = vunpack.c.l.b16 %v2141
    %v2325 = vunpack.c.h.b16 %v2141
    %v2326 = vunpack.c.l.b16 %v2142
    %v2327 = vunpack.c.h.b16 %v2142
    %v2328 = vunpack.c.l.b16 %v2143
    %v2329 = vunpack.c.h.b16 %v2143
    %v2330 = vunpack.c.l.b16 %v2144
    %v2331 = vunpack.c.h.b16 %v2144
    %v2332 = vunpack.c.l.b16 %v2145
    %v2333 = vunpack.c.h.b16 %v2145
    %v2334 = vunpack.c.l.b16 %v2146
    %v2335 = vunpack.c.h.b16 %v2146
    %v2336 = vunpack.c.l.b16 %v2147
    %v2337 = vunpack.c.h.b16 %v2147
    %v2338 = vunpack.c.l.b16 %v2148
    %v2339 = vunpack.c.h.b16 %v2148
    %v2340 = vunpack.c.l.b16 %v2149
    %v2341 = vunpack.c.h.b16 %v2149
    %v2342 = vunpack.c.l.b16 %v2150
    %v2343 = vunpack.c.h.b16 %v2150
    %v2344 = vunpack.c.l.b16 %v2151
    %v2345 = vunpack.c.h.b16 %v2151
    %v2346 = vunpack.c.l.b16 %v2152
    %v2347 = vunpack.c.h.b16 %v2152
    %v2348 = vunpack.c.l.b16 %v2153
    %v2349 = vunpack.c.h.b16 %v2153
    %v2350 = vunpack.c.l.b16 %v2154
    %v2351 = vunpack.c.h.b16 %v2154
    %v2352 = vunpack.c.l.b16 %v2155
    %v2353 = vunpack.c.h.b16 %v2155
    %v2354 = vunpack.c.l.b16 %v2156
    %v2355 = vunpack.c.h.b16 %v2156
    %v2356 = vunpack.c.l.b16 %v2157
    %v2357 = vunpack.c.h.b16 %v2157
    %v2358 = vunpack.c.l.b16 %v2158
    %v2359 = vunpack.c.h.b16 %v2158
    %v2360 = vunpack.c.l.b16 %v2159
    %v2361 = vunpack.c.h.b16 %v2159
    %v2362 = vunpack.c.l.b16 %v2160
    %v2363 = vunpack.c.h.b16 %v2160
    %v2364 = vunpack.c.l.b16 %v2161
    %v2365 = vunpack.c.h.b16 %v2161
    %v2366 = vpack.c.b16 %v2240, %v2238
    %v2367 = vpack.c.b16 %v2241, %v2239
    %v2368 = vpack.c.b16 %v2244, %v2242
    %v2369 = vpack.c.b16 %v2245, %v2243
    %v2370 = vpack.c.b16 %v2248, %v2246
    %v2371 = vpack.c.b16 %v2249, %v2247
    %v2372 = vpack.c.b16 %v2252, %v2250
    %v2373 = vpack.c.b16 %v2253, %v2251
    %v2374 = vpack.c.b16 %v2256, %v2254
    %v2375 = vpack.c.b16 %v2257, %v2255
    %v2376 = vpack.c.b16 %v2260, %v2258
    %v2377 = vpack.c.b16 %v2261, %v2259
    %v2378 = vpack.c.b16 %v2264, %v2262
    %v2379 = vpack.c.b16 %v2265, %v2263
    %v2380 = vpack.c.b16 %v2268, %v2266
    %v2381 = vpack.c.b16 %v2269, %v2267
    %v2382 = vpack.c.b16 %v2272, %v2270
    %v2383 = vpack.c.b16 %v2273, %v2271
    %v2384 = vpack.c.b16 %v2276, %v2274
    %v2385 = vpack.c.b16 %v2277, %v2275
    %v2386 = vpack.c.b16 %v2280, %v2278
    %v2387 = vpack.c.b16 %v2281, %v2279
    %v2388 = vpack.c.b16 %v2284, %v2282
    %v2389 = vpack.c.b16 %v2285, %v2283
    %v2390 = vpack.c.b16 %v2288, %v2286
    %v2391 = vpack.c.b16 %v2289, %v2287
    %v2392 = vpack.c.b16 %v2292, %v2290
    %v2393 = vpack.c.b16 %v2293, %v2291
    %v2394 = vpack.c.b16 %v2296, %v2294
    %v2395 = vpack.c.b16 %v2297, %v2295
    %v2396 = vpack.c.b16 %v2300, %v2298
    %v2397 = vpack.c.b16 %v2301, %v2299
    %v2398 = vpack.c.b16 %v2304, %v2302
    %v2399 = vpack.c.b16 %v2305, %v2303
    %v2400 = vpack.c.b16 %v2308, %v2306
    %v2401 = vpack.c.b16 %v2309, %v2307
    %v2402 = vpack.c.b16 %v2312, %v2310
    %v2403 = vpack.c.b16 %v2313, %v2311
    %v2404 = vpack.c.b16 %v2316, %v2314
    %v2405 = vpack.c.b16 %v2317, %v2315
    %v2406 = vpack.c.b16 %v2320, %v2318
    %v2407 = vpack.c.b16 %v2321, %v2319
    %v2408 = vpack.c.b16 %v2324, %v2322
    %v2409 = vpack.c.b16 %v2325, %v2323
    %v2410 = vpack.c.b16 %v2328, %v2326
    %v2411 = vpack.c.b16 %v2329, %v2327
    %v2412 = vpack.c.b16 %v2332, %v2330
    %v2413 = vpack.c.b16 %v2333, %v2331
    %v2414 = vpack.c.b16 %v2336, %v2334
    %v2415 = vpack.c.b16 %v2337, %v2335
    %v2416 = vpack.c.b16 %v2340, %v2338
    %v2417 = vpack.c.b16 %v2341, %v2339
    %v2418 = vpack.c.b16 %v2344, %v2342
    %v2419 = vpack.c.b16 %v2345, %v2343
    %v2420 = vpack.c.b16 %v2348, %v2346
    %v2421 = vpack.c.b16 %v2349, %v2347
    %v2422 = vpack.c.b16 %v2352, %v2350
    %v2423 = vpack.c.b16 %v2353, %v2351
    %v2424 = vpack.c.b16 %v2356, %v2354
    %v2425 = vpack.c.b16 %v2357, %v2355
    %v2426 = vpack.c.b16 %v2360, %v2358
    %v2427 = vpack.c.b16 %v2361, %v2359
    %v2428 = vpack.c.b16 %v2364, %v2362
    %v2429 = vpack.c.b16 %v2365, %v2363
    %2494 = vmatprep.subr.bf16.mxu0 %v2381
    %2495 = vmatpush1.bf16.msra.mxu0 %v2380
    %2496 = vmatprep.subr.bf16.mxu0 %v2379
    %2497 = vmatpush1.bf16.msra.mxu0 %v2378
    %2498 = vmatprep.subr.bf16.mxu0 %v2377
    %2499 = vmatpush1.bf16.msra.mxu0 %v2376
    %2500 = vmatprep.subr.bf16.mxu0 %v2375
    %2501 = vmatpush1.bf16.msra.mxu0 %v2374
    %2502 = vmatprep.subr.bf16.mxu0 %v2373
    %2503 = vmatpush1.bf16.msra.mxu0 %v2372
    %2504 = vmatprep.subr.bf16.mxu0 %v2371
    %2505 = vmatpush1.bf16.msra.mxu0 %v2370
    %2506 = vmatprep.subr.bf16.mxu0 %v2369
    %2507 = vmatpush1.bf16.msra.mxu0 %v2368
    %2508 = vmatprep.subr.bf16.mxu0 %v2367
    %2509 = vmatpush1.bf16.msra.mxu0 %v2366
    %2510 = vmatprep.subr.bf16.mxu0 %v2397
    %2511 = vmatpush2.bf16.msra.mxu0 %v2396
    %2512 = vmatprep.subr.bf16.mxu0 %v2395
    %2513 = vmatpush2.bf16.msra.mxu0 %v2394
    %2514 = vmatprep.subr.bf16.mxu0 %v2393
    %2515 = vmatpush2.bf16.msra.mxu0 %v2392
    %2516 = vmatprep.subr.bf16.mxu0 %v2391
    %2517 = vmatpush2.bf16.msra.mxu0 %v2390
    %2518 = vmatprep.subr.bf16.mxu0 %v2389
    %2519 = vmatpush2.bf16.msra.mxu0 %v2388
    %2520 = vmatprep.subr.bf16.mxu0 %v2387
    %2521 = vmatpush2.bf16.msra.mxu0 %v2386
    %2522 = vmatprep.subr.bf16.mxu0 %v2385
    %2523 = vmatpush2.bf16.msra.mxu0 %v2384
    %2524 = vmatprep.subr.bf16.mxu0 %v2383
    %2525 = vmatpush2.bf16.msra.mxu0 %v2382
    %2526 = vmatprep.mubr.bf16.mxu0 %v2095
    %2527 = vmatmul.mubr.bf16.gmra.mxu0 %v2094
    %v2528 = vpop.f32.mrf.mxu0
    %v2529 = vadd.f32 %v2167, %v2528
    %v2530 = vpop.f32.mrf.mxu0
    %v2531 = vadd.f32 %v2171, %v2530
    %v2532 = vpop.f32.mrf.mxu0
    %v2533 = vadd.f32 %v2167, %v2532
    %v2534 = vpop.f32.mrf.mxu0
    %v2535 = vadd.f32 %v2171, %v2534
    %2536 = vdwg.mxu0
    %2537 = vmatprep.subr.bf16.mxu0 %v2413
    %2538 = vmatpush1.bf16.msra.mxu0 %v2412
    %2539 = vmatprep.subr.bf16.mxu0 %v2411
    %2540 = vmatpush1.bf16.msra.mxu0 %v2410
    %2541 = vmatprep.subr.bf16.mxu0 %v2409
    %2542 = vmatpush1.bf16.msra.mxu0 %v2408
    %2543 = vmatprep.subr.bf16.mxu0 %v2407
    %2544 = vmatpush1.bf16.msra.mxu0 %v2406
    %2545 = vmatprep.subr.bf16.mxu0 %v2405
    %2546 = vmatpush1.bf16.msra.mxu0 %v2404
    %2547 = vmatprep.subr.bf16.mxu0 %v2403
    %2548 = vmatpush1.bf16.msra.mxu0 %v2402
    %2549 = vmatprep.subr.bf16.mxu0 %v2401
    %2550 = vmatpush1.bf16.msra.mxu0 %v2400
    %2551 = vmatprep.subr.bf16.mxu0 %v2399
    %2552 = vmatpush1.bf16.msra.mxu0 %v2398
    %2553 = vmatprep.subr.bf16.mxu0 %v2429
    %2554 = vmatpush2.bf16.msra.mxu0 %v2428
    %2555 = vmatprep.subr.bf16.mxu0 %v2427
    %2556 = vmatpush2.bf16.msra.mxu0 %v2426
    %2557 = vmatprep.subr.bf16.mxu0 %v2425
    %2558 = vmatpush2.bf16.msra.mxu0 %v2424
    %2559 = vmatprep.subr.bf16.mxu0 %v2423
    %2560 = vmatpush2.bf16.msra.mxu0 %v2422
    %2561 = vmatprep.subr.bf16.mxu0 %v2421
    %2562 = vmatpush2.bf16.msra.mxu0 %v2420
    %2563 = vmatprep.subr.bf16.mxu0 %v2419
    %2564 = vmatpush2.bf16.msra.mxu0 %v2418
    %2565 = vmatprep.subr.bf16.mxu0 %v2417
    %2566 = vmatpush2.bf16.msra.mxu0 %v2416
    %2567 = vmatprep.subr.bf16.mxu0 %v2415
    %2568 = vmatpush2.bf16.msra.mxu0 %v2414
    %2569 = vmatprep.mubr.bf16.mxu0 %v2097
    %2570 = vmatmul.mubr.bf16.gmra.mxu0 %v2096
    %v2571 = vpop.f32.mrf.mxu0
    %v2572 = vadd.f32 %v2529, %v2571
    %v2573 = vpop.f32.mrf.mxu0
    %v2574 = vadd.f32 %v2531, %v2573
    %v2575 = vpop.f32.mrf.mxu0
    %v2576 = vadd.f32 %v2533, %v2575
    %v2577 = vpop.f32.mrf.mxu0
    %v2578 = vadd.f32 %v2535, %v2577
    %2579 = vdwg.mxu0
    %v2580 = vmax.f32 %v2572, 0.0
    %v2581 = vmax.f32 %v2574, 0.0
    %v2582 = vmax.f32 %v2576, 0.0
    %v2583 = vmax.f32 %v2578, 0.0
    %v2584 = vpack.c.bf16 %v2582, %v2580
    %v2585 = vpack.c.bf16 %v2583, %v2581
    %v2586 = vld [vmem:[#allocation13] sm:$0xff]
    %v2587 = vld [vmem:[#allocation13 + $0x8] sm:$0xff]
    %v2588 = vld [vmem:[#allocation13 + $0x10] sm:$0xff]
    %v2589 = vld [vmem:[#allocation13 + $0x18] sm:$0xff]
    %v2590 = vld [vmem:[#allocation13 + $0x20] sm:$0xff]
    %v2591 = vld [vmem:[#allocation13 + $0x28] sm:$0xff]
    %v2592 = vld [vmem:[#allocation13 + $0x30] sm:$0xff]
    %v2593 = vld [vmem:[#allocation13 + $0x38] sm:$0xff]
    %v2594 = vld [vmem:[#allocation13 + $0x40] sm:$0xff]
    %v2595 = vld [vmem:[#allocation13 + $0x48] sm:$0xff]
    %v2596 = vld [vmem:[#allocation13 + $0x50] sm:$0xff]
    %v2597 = vld [vmem:[#allocation13 + $0x58] sm:$0xff]
    %v2598 = vld [vmem:[#allocation13 + $0x60] sm:$0xff]
    %v2599 = vld [vmem:[#allocation13 + $0x68] sm:$0xff]
    %v2600 = vld [vmem:[#allocation13 + $0x70] sm:$0xff]
    %v2601 = vld [vmem:[#allocation13 + $0x78] sm:$0xff]
    %v2602 = vld [vmem:[#allocation13 + $0x80] sm:$0xff]
    %v2603 = vld [vmem:[#allocation13 + $0x88] sm:$0xff]
    %v2604 = vld [vmem:[#allocation13 + $0x90] sm:$0xff]
    %v2605 = vld [vmem:[#allocation13 + $0x98] sm:$0xff]
    %v2606 = vld [vmem:[#allocation13 + $0xa0] sm:$0xff]
    %v2607 = vld [vmem:[#allocation13 + $0xa8] sm:$0xff]
    %v2608 = vld [vmem:[#allocation13 + $0xb0] sm:$0xff]
    %v2609 = vld [vmem:[#allocation13 + $0xb8] sm:$0xff]
    %v2610 = vld [vmem:[#allocation13 + $0xc0] sm:$0xff]
    %v2611 = vld [vmem:[#allocation13 + $0xc8] sm:$0xff]
    %v2612 = vld [vmem:[#allocation13 + $0xd0] sm:$0xff]
    %v2613 = vld [vmem:[#allocation13 + $0xd8] sm:$0xff]
    %v2614 = vld [vmem:[#allocation13 + $0xe0] sm:$0xff]
    %v2615 = vld [vmem:[#allocation13 + $0xe8] sm:$0xff]
    %v2616 = vld [vmem:[#allocation13 + $0xf0] sm:$0xff]
    %v2617 = vld [vmem:[#allocation13 + $0xf8] sm:$0xff]
    %v2618 = vld [vmem:[#allocation13 + $0x100] sm:$0xff]
    %v2619 = vld [vmem:[#allocation13 + $0x108] sm:$0xff]
    %v2620 = vld [vmem:[#allocation13 + $0x110] sm:$0xff]
    %v2621 = vld [vmem:[#allocation13 + $0x118] sm:$0xff]
    %v2622 = vld [vmem:[#allocation13 + $0x120] sm:$0xff]
    %v2623 = vld [vmem:[#allocation13 + $0x128] sm:$0xff]
    %v2624 = vld [vmem:[#allocation13 + $0x130] sm:$0xff]
    %v2625 = vld [vmem:[#allocation13 + $0x138] sm:$0xff]
    %v2626 = vld [vmem:[#allocation13 + $0x140] sm:$0xff]
    %v2627 = vld [vmem:[#allocation13 + $0x148] sm:$0xff]
    %v2628 = vld [vmem:[#allocation13 + $0x150] sm:$0xff]
    %v2629 = vld [vmem:[#allocation13 + $0x158] sm:$0xff]
    %v2630 = vld [vmem:[#allocation13 + $0x160] sm:$0xff]
    %v2631 = vld [vmem:[#allocation13 + $0x168] sm:$0xff]
    %v2632 = vld [vmem:[#allocation13 + $0x170] sm:$0xff]
    %v2633 = vld [vmem:[#allocation13 + $0x178] sm:$0xff]
    %v2634 = vld [vmem:[#allocation13 + $0x180] sm:$0xff]
    %v2635 = vld [vmem:[#allocation13 + $0x188] sm:$0xff]
    %v2636 = vld [vmem:[#allocation13 + $0x190] sm:$0xff]
    %v2637 = vld [vmem:[#allocation13 + $0x198] sm:$0xff]
    %v2638 = vld [vmem:[#allocation13 + $0x1a0] sm:$0xff]
    %v2639 = vld [vmem:[#allocation13 + $0x1a8] sm:$0xff]
    %v2640 = vld [vmem:[#allocation13 + $0x1b0] sm:$0xff]
    %v2641 = vld [vmem:[#allocation13 + $0x1b8] sm:$0xff]
    %v2642 = vld [vmem:[#allocation13 + $0x1c0] sm:$0xff]
    %v2643 = vld [vmem:[#allocation13 + $0x1c8] sm:$0xff]
    %v2644 = vld [vmem:[#allocation13 + $0x1d0] sm:$0xff]
    %v2645 = vld [vmem:[#allocation13 + $0x1d8] sm:$0xff]
    %v2646 = vld [vmem:[#allocation13 + $0x1e0] sm:$0xff]
    %v2647 = vld [vmem:[#allocation13 + $0x1e8] sm:$0xff]
    %v2648 = vld [vmem:[#allocation13 + $0x1f0] sm:$0xff]
    %v2649 = vld [vmem:[#allocation13 + $0x1f8] sm:$0xff]
    %v2650 = vld [vmem:[%s8] sm:$0xf]
    %v2652 = vlaneseq
    %v2653 = vshrl.u32 %v2652, 7
    %v2654 = vsub.s32 0, %v2653
    %v2655 = vrot.slane %v2650, %v2654
    %v2656 = vlaneseq
    %v2657 = vshrl.u32 %v2656, 7
    %v2658 = vsub.s32 1, %v2657
    %v2659 = vrot.slane %v2650, %v2658
    %v2660 = vlaneseq
    %v2661 = vshrl.u32 %v2660, 7
    %v2662 = vsub.s32 2, %v2661
    %v2663 = vrot.slane %v2650, %v2662
    %v2664 = vlaneseq
    %v2665 = vshrl.u32 %v2664, 7
    %v2666 = vsub.s32 3, %v2665
    %v2667 = vrot.slane %v2650, %v2666
    %v2736 = vunpack.c.l.b16 %v2586
    %v2737 = vunpack.c.h.b16 %v2586
    %v2738 = vunpack.c.l.b16 %v2587
    %v2739 = vunpack.c.h.b16 %v2587
    %v2740 = vunpack.c.l.b16 %v2588
    %v2741 = vunpack.c.h.b16 %v2588
    %v2742 = vunpack.c.l.b16 %v2589
    %v2743 = vunpack.c.h.b16 %v2589
    %v2744 = vunpack.c.l.b16 %v2590
    %v2745 = vunpack.c.h.b16 %v2590
    %v2746 = vunpack.c.l.b16 %v2591
    %v2747 = vunpack.c.h.b16 %v2591
    %v2748 = vunpack.c.l.b16 %v2592
    %v2749 = vunpack.c.h.b16 %v2592
    %v2750 = vunpack.c.l.b16 %v2593
    %v2751 = vunpack.c.h.b16 %v2593
    %v2752 = vunpack.c.l.b16 %v2594
    %v2753 = vunpack.c.h.b16 %v2594
    %v2754 = vunpack.c.l.b16 %v2595
    %v2755 = vunpack.c.h.b16 %v2595
    %v2756 = vunpack.c.l.b16 %v2596
    %v2757 = vunpack.c.h.b16 %v2596
    %v2758 = vunpack.c.l.b16 %v2597
    %v2759 = vunpack.c.h.b16 %v2597
    %v2760 = vunpack.c.l.b16 %v2598
    %v2761 = vunpack.c.h.b16 %v2598
    %v2762 = vunpack.c.l.b16 %v2599
    %v2763 = vunpack.c.h.b16 %v2599
    %v2764 = vunpack.c.l.b16 %v2600
    %v2765 = vunpack.c.h.b16 %v2600
    %v2766 = vunpack.c.l.b16 %v2601
    %v2767 = vunpack.c.h.b16 %v2601
    %v2768 = vunpack.c.l.b16 %v2602
    %v2769 = vunpack.c.h.b16 %v2602
    %v2770 = vunpack.c.l.b16 %v2603
    %v2771 = vunpack.c.h.b16 %v2603
    %v2772 = vunpack.c.l.b16 %v2604
    %v2773 = vunpack.c.h.b16 %v2604
    %v2774 = vunpack.c.l.b16 %v2605
    %v2775 = vunpack.c.h.b16 %v2605
    %v2776 = vunpack.c.l.b16 %v2606
    %v2777 = vunpack.c.h.b16 %v2606
    %v2778 = vunpack.c.l.b16 %v2607
    %v2779 = vunpack.c.h.b16 %v2607
    %v2780 = vunpack.c.l.b16 %v2608
    %v2781 = vunpack.c.h.b16 %v2608
    %v2782 = vunpack.c.l.b16 %v2609
    %v2783 = vunpack.c.h.b16 %v2609
    %v2784 = vunpack.c.l.b16 %v2610
    %v2785 = vunpack.c.h.b16 %v2610
    %v2786 = vunpack.c.l.b16 %v2611
    %v2787 = vunpack.c.h.b16 %v2611
    %v2788 = vunpack.c.l.b16 %v2612
    %v2789 = vunpack.c.h.b16 %v2612
    %v2790 = vunpack.c.l.b16 %v2613
    %v2791 = vunpack.c.h.b16 %v2613
    %v2792 = vunpack.c.l.b16 %v2614
    %v2793 = vunpack.c.h.b16 %v2614
    %v2794 = vunpack.c.l.b16 %v2615
    %v2795 = vunpack.c.h.b16 %v2615
    %v2796 = vunpack.c.l.b16 %v2616
    %v2797 = vunpack.c.h.b16 %v2616
    %v2798 = vunpack.c.l.b16 %v2617
    %v2799 = vunpack.c.h.b16 %v2617
    %v2800 = vunpack.c.l.b16 %v2618
    %v2801 = vunpack.c.h.b16 %v2618
    %v2802 = vunpack.c.l.b16 %v2619
    %v2803 = vunpack.c.h.b16 %v2619
    %v2804 = vunpack.c.l.b16 %v2620
    %v2805 = vunpack.c.h.b16 %v2620
    %v2806 = vunpack.c.l.b16 %v2621
    %v2807 = vunpack.c.h.b16 %v2621
    %v2808 = vunpack.c.l.b16 %v2622
    %v2809 = vunpack.c.h.b16 %v2622
    %v2810 = vunpack.c.l.b16 %v2623
    %v2811 = vunpack.c.h.b16 %v2623
    %v2812 = vunpack.c.l.b16 %v2624
    %v2813 = vunpack.c.h.b16 %v2624
    %v2814 = vunpack.c.l.b16 %v2625
    %v2815 = vunpack.c.h.b16 %v2625
    %v2816 = vunpack.c.l.b16 %v2626
    %v2817 = vunpack.c.h.b16 %v2626
    %v2818 = vunpack.c.l.b16 %v2627
    %v2819 = vunpack.c.h.b16 %v2627
    %v2820 = vunpack.c.l.b16 %v2628
    %v2821 = vunpack.c.h.b16 %v2628
    %v2822 = vunpack.c.l.b16 %v2629
    %v2823 = vunpack.c.h.b16 %v2629
    %v2824 = vunpack.c.l.b16 %v2630
    %v2825 = vunpack.c.h.b16 %v2630
    %v2826 = vunpack.c.l.b16 %v2631
    %v2827 = vunpack.c.h.b16 %v2631
    %v2828 = vunpack.c.l.b16 %v2632
    %v2829 = vunpack.c.h.b16 %v2632
    %v2830 = vunpack.c.l.b16 %v2633
    %v2831 = vunpack.c.h.b16 %v2633
    %v2832 = vunpack.c.l.b16 %v2634
    %v2833 = vunpack.c.h.b16 %v2634
    %v2834 = vunpack.c.l.b16 %v2635
    %v2835 = vunpack.c.h.b16 %v2635
    %v2836 = vunpack.c.l.b16 %v2636
    %v2837 = vunpack.c.h.b16 %v2636
    %v2838 = vunpack.c.l.b16 %v2637
    %v2839 = vunpack.c.h.b16 %v2637
    %v2840 = vunpack.c.l.b16 %v2638
    %v2841 = vunpack.c.h.b16 %v2638
    %v2842 = vunpack.c.l.b16 %v2639
    %v2843 = vunpack.c.h.b16 %v2639
    %v2844 = vunpack.c.l.b16 %v2640
    %v2845 = vunpack.c.h.b16 %v2640
    %v2846 = vunpack.c.l.b16 %v2641
    %v2847 = vunpack.c.h.b16 %v2641
    %v2848 = vunpack.c.l.b16 %v2642
    %v2849 = vunpack.c.h.b16 %v2642
    %v2850 = vunpack.c.l.b16 %v2643
    %v2851 = vunpack.c.h.b16 %v2643
    %v2852 = vunpack.c.l.b16 %v2644
    %v2853 = vunpack.c.h.b16 %v2644
    %v2854 = vunpack.c.l.b16 %v2645
    %v2855 = vunpack.c.h.b16 %v2645
    %v2856 = vunpack.c.l.b16 %v2646
    %v2857 = vunpack.c.h.b16 %v2646
    %v2858 = vunpack.c.l.b16 %v2647
    %v2859 = vunpack.c.h.b16 %v2647
    %v2860 = vunpack.c.l.b16 %v2648
    %v2861 = vunpack.c.h.b16 %v2648
    %v2862 = vunpack.c.l.b16 %v2649
    %v2863 = vunpack.c.h.b16 %v2649
    %v2864 = vpack.c.b16 %v2740, %v2736
    %v2865 = vpack.c.b16 %v2741, %v2737
    %v2866 = vpack.c.b16 %v2742, %v2738
    %v2867 = vpack.c.b16 %v2743, %v2739
    %v2868 = vpack.c.b16 %v2748, %v2744
    %v2869 = vpack.c.b16 %v2749, %v2745
    %v2870 = vpack.c.b16 %v2750, %v2746
    %v2871 = vpack.c.b16 %v2751, %v2747
    %v2872 = vpack.c.b16 %v2756, %v2752
    %v2873 = vpack.c.b16 %v2757, %v2753
    %v2874 = vpack.c.b16 %v2758, %v2754
    %v2875 = vpack.c.b16 %v2759, %v2755
    %v2876 = vpack.c.b16 %v2764, %v2760
    %v2877 = vpack.c.b16 %v2765, %v2761
    %v2878 = vpack.c.b16 %v2766, %v2762
    %v2879 = vpack.c.b16 %v2767, %v2763
    %v2880 = vpack.c.b16 %v2772, %v2768
    %v2881 = vpack.c.b16 %v2773, %v2769
    %v2882 = vpack.c.b16 %v2774, %v2770
    %v2883 = vpack.c.b16 %v2775, %v2771
    %v2884 = vpack.c.b16 %v2780, %v2776
    %v2885 = vpack.c.b16 %v2781, %v2777
    %v2886 = vpack.c.b16 %v2782, %v2778
    %v2887 = vpack.c.b16 %v2783, %v2779
    %v2888 = vpack.c.b16 %v2788, %v2784
    %v2889 = vpack.c.b16 %v2789, %v2785
    %v2890 = vpack.c.b16 %v2790, %v2786
    %v2891 = vpack.c.b16 %v2791, %v2787
    %v2892 = vpack.c.b16 %v2796, %v2792
    %v2893 = vpack.c.b16 %v2797, %v2793
    %v2894 = vpack.c.b16 %v2798, %v2794
    %v2895 = vpack.c.b16 %v2799, %v2795
    %v2896 = vpack.c.b16 %v2804, %v2800
    %v2897 = vpack.c.b16 %v2805, %v2801
    %v2898 = vpack.c.b16 %v2806, %v2802
    %v2899 = vpack.c.b16 %v2807, %v2803
    %v2900 = vpack.c.b16 %v2812, %v2808
    %v2901 = vpack.c.b16 %v2813, %v2809
    %v2902 = vpack.c.b16 %v2814, %v2810
    %v2903 = vpack.c.b16 %v2815, %v2811
    %v2904 = vpack.c.b16 %v2820, %v2816
    %v2905 = vpack.c.b16 %v2821, %v2817
    %v2906 = vpack.c.b16 %v2822, %v2818
    %v2907 = vpack.c.b16 %v2823, %v2819
    %v2908 = vpack.c.b16 %v2828, %v2824
    %v2909 = vpack.c.b16 %v2829, %v2825
    %v2910 = vpack.c.b16 %v2830, %v2826
    %v2911 = vpack.c.b16 %v2831, %v2827
    %v2912 = vpack.c.b16 %v2836, %v2832
    %v2913 = vpack.c.b16 %v2837, %v2833
    %v2914 = vpack.c.b16 %v2838, %v2834
    %v2915 = vpack.c.b16 %v2839, %v2835
    %v2916 = vpack.c.b16 %v2844, %v2840
    %v2917 = vpack.c.b16 %v2845, %v2841
    %v2918 = vpack.c.b16 %v2846, %v2842
    %v2919 = vpack.c.b16 %v2847, %v2843
    %v2920 = vpack.c.b16 %v2852, %v2848
    %v2921 = vpack.c.b16 %v2853, %v2849
    %v2922 = vpack.c.b16 %v2854, %v2850
    %v2923 = vpack.c.b16 %v2855, %v2851
    %v2924 = vpack.c.b16 %v2860, %v2856
    %v2925 = vpack.c.b16 %v2861, %v2857
    %v2926 = vpack.c.b16 %v2862, %v2858
    %v2927 = vpack.c.b16 %v2863, %v2859
    %2992 = vmatprep.subr.bf16.mxu0 %v2893
    %2993 = vmatpush1.bf16.msra.mxu0 %v2892
    %2994 = vmatprep.subr.bf16.mxu0 %v2889
    %2995 = vmatpush1.bf16.msra.mxu0 %v2888
    %2996 = vmatprep.subr.bf16.mxu0 %v2885
    %2997 = vmatpush1.bf16.msra.mxu0 %v2884
    %2998 = vmatprep.subr.bf16.mxu0 %v2881
    %2999 = vmatpush1.bf16.msra.mxu0 %v2880
    %3000 = vmatprep.subr.bf16.mxu0 %v2877
    %3001 = vmatpush1.bf16.msra.mxu0 %v2876
    %3002 = vmatprep.subr.bf16.mxu0 %v2873
    %3003 = vmatpush1.bf16.msra.mxu0 %v2872
    %3004 = vmatprep.subr.bf16.mxu0 %v2869
    %3005 = vmatpush1.bf16.msra.mxu0 %v2868
    %3006 = vmatprep.subr.bf16.mxu0 %v2865
    %3007 = vmatpush1.bf16.msra.mxu0 %v2864
    %3008 = vmatprep.subr.bf16.mxu0 %v2925
    %3009 = vmatpush2.bf16.msra.mxu0 %v2924
    %3010 = vmatprep.subr.bf16.mxu0 %v2921
    %3011 = vmatpush2.bf16.msra.mxu0 %v2920
    %3012 = vmatprep.subr.bf16.mxu0 %v2917
    %3013 = vmatpush2.bf16.msra.mxu0 %v2916
    %3014 = vmatprep.subr.bf16.mxu0 %v2913
    %3015 = vmatpush2.bf16.msra.mxu0 %v2912
    %3016 = vmatprep.subr.bf16.mxu0 %v2909
    %3017 = vmatpush2.bf16.msra.mxu0 %v2908
    %3018 = vmatprep.subr.bf16.mxu0 %v2905
    %3019 = vmatpush2.bf16.msra.mxu0 %v2904
    %3020 = vmatprep.subr.bf16.mxu0 %v2901
    %3021 = vmatpush2.bf16.msra.mxu0 %v2900
    %3022 = vmatprep.subr.bf16.mxu0 %v2897
    %3023 = vmatpush2.bf16.msra.mxu0 %v2896
    %3024 = vmatprep.mubr.bf16.mxu0 %v2585
    %3025 = vmatmul.mubr.bf16.gmra.mxu0 %v2584
    %v3026 = vpop.f32.mrf.mxu0
    %v3027 = vadd.f32 %v2655, %v3026
    %v3028 = vpop.f32.mrf.mxu0
    %v3029 = vadd.f32 %v2659, %v3028
    %v3030 = vpop.f32.mrf.mxu0
    %v3031 = vadd.f32 %v2655, %v3030
    %v3032 = vpop.f32.mrf.mxu0
    %v3033 = vadd.f32 %v2659, %v3032
    %3034 = vdwg.mxu0
    %3035 = vmatprep.subr.bf16.mxu0 %v2895
    %3036 = vmatpush1.bf16.msra.mxu0 %v2894
    %3037 = vmatprep.subr.bf16.mxu0 %v2891
    %3038 = vmatpush1.bf16.msra.mxu0 %v2890
    %3039 = vmatprep.subr.bf16.mxu0 %v2887
    %3040 = vmatpush1.bf16.msra.mxu0 %v2886
    %3041 = vmatprep.subr.bf16.mxu0 %v2883
    %3042 = vmatpush1.bf16.msra.mxu0 %v2882
    %3043 = vmatprep.subr.bf16.mxu0 %v2879
    %3044 = vmatpush1.bf16.msra.mxu0 %v2878
    %3045 = vmatprep.subr.bf16.mxu0 %v2875
    %3046 = vmatpush1.bf16.msra.mxu0 %v2874
    %3047 = vmatprep.subr.bf16.mxu0 %v2871
    %3048 = vmatpush1.bf16.msra.mxu0 %v2870
    %3049 = vmatprep.subr.bf16.mxu0 %v2867
    %3050 = vmatpush1.bf16.msra.mxu0 %v2866
    %3051 = vmatprep.subr.bf16.mxu0 %v2927
    %3052 = vmatpush2.bf16.msra.mxu0 %v2926
    %3053 = vmatprep.subr.bf16.mxu0 %v2923
    %3054 = vmatpush2.bf16.msra.mxu0 %v2922
    %3055 = vmatprep.subr.bf16.mxu0 %v2919
    %3056 = vmatpush2.bf16.msra.mxu0 %v2918
    %3057 = vmatprep.subr.bf16.mxu0 %v2915
    %3058 = vmatpush2.bf16.msra.mxu0 %v2914
    %3059 = vmatprep.subr.bf16.mxu0 %v2911
    %3060 = vmatpush2.bf16.msra.mxu0 %v2910
    %3061 = vmatprep.subr.bf16.mxu0 %v2907
    %3062 = vmatpush2.bf16.msra.mxu0 %v2906
    %3063 = vmatprep.subr.bf16.mxu0 %v2903
    %3064 = vmatpush2.bf16.msra.mxu0 %v2902
    %3065 = vmatprep.subr.bf16.mxu0 %v2899
    %3066 = vmatpush2.bf16.msra.mxu0 %v2898
    %3067 = vmatprep.mubr.bf16.mxu0 %v2585
    %3068 = vmatmul.mubr.bf16.gmra.mxu0 %v2584
    %v3069 = vpop.f32.mrf.mxu0
    %v3070 = vadd.f32 %v2663, %v3069
    %v3071 = vpop.f32.mrf.mxu0
    %v3072 = vadd.f32 %v2667, %v3071
    %v3073 = vpop.f32.mrf.mxu0
    %v3074 = vadd.f32 %v2663, %v3073
    %v3075 = vpop.f32.mrf.mxu0
    %v3076 = vadd.f32 %v2667, %v3075
    %3077 = vdwg.mxu0
    %v3078 = vmax.f32 %v3027, 0.0
    %v3079 = vmax.f32 %v3029, 0.0
    %v3080 = vmax.f32 %v3070, 0.0
    %v3081 = vmax.f32 %v3072, 0.0
    %v3082 = vmax.f32 %v3031, 0.0
    %v3083 = vmax.f32 %v3033, 0.0
    %v3084 = vmax.f32 %v3074, 0.0
    %v3085 = vmax.f32 %v3076, 0.0
    %v3086 = vpack.c.bf16 %v3082, %v3078
    %v3087 = vpack.c.bf16 %v3083, %v3079
    %v3088 = vpack.c.bf16 %v3084, %v3080
    %v3089 = vpack.c.bf16 %v3085, %v3081
    %v3090 = vld [vmem:[#allocation14] sm:$0xff]
    %v3091 = vld [vmem:[#allocation14 + $0x8] sm:$0xff]
    %v3092 = vld [vmem:[#allocation14 + $0x10] sm:$0xff]
    %v3093 = vld [vmem:[#allocation14 + $0x18] sm:$0xff]
    %v3094 = vld [vmem:[#allocation14 + $0x20] sm:$0xff]
    %v3095 = vld [vmem:[#allocation14 + $0x28] sm:$0xff]
    %v3096 = vld [vmem:[#allocation14 + $0x30] sm:$0xff]
    %v3097 = vld [vmem:[#allocation14 + $0x38] sm:$0xff]
    %v3098 = vld [vmem:[#allocation14 + $0x40] sm:$0xff]
    %v3099 = vld [vmem:[#allocation14 + $0x48] sm:$0xff]
    %v3100 = vld [vmem:[#allocation14 + $0x50] sm:$0xff]
    %v3101 = vld [vmem:[#allocation14 + $0x58] sm:$0xff]
    %v3102 = vld [vmem:[#allocation14 + $0x60] sm:$0xff]
    %v3103 = vld [vmem:[#allocation14 + $0x68] sm:$0xff]
    %v3104 = vld [vmem:[#allocation14 + $0x70] sm:$0xff]
    %v3105 = vld [vmem:[#allocation14 + $0x78] sm:$0xff]
    %v3106 = vld [vmem:[#allocation14 + $0x80] sm:$0xff]
    %v3107 = vld [vmem:[#allocation14 + $0x88] sm:$0xff]
    %v3108 = vld [vmem:[#allocation14 + $0x90] sm:$0xff]
    %v3109 = vld [vmem:[#allocation14 + $0x98] sm:$0xff]
    %v3110 = vld [vmem:[#allocation14 + $0xa0] sm:$0xff]
    %v3111 = vld [vmem:[#allocation14 + $0xa8] sm:$0xff]
    %v3112 = vld [vmem:[#allocation14 + $0xb0] sm:$0xff]
    %v3113 = vld [vmem:[#allocation14 + $0xb8] sm:$0xff]
    %v3114 = vld [vmem:[#allocation14 + $0xc0] sm:$0xff]
    %v3115 = vld [vmem:[#allocation14 + $0xc8] sm:$0xff]
    %v3116 = vld [vmem:[#allocation14 + $0xd0] sm:$0xff]
    %v3117 = vld [vmem:[#allocation14 + $0xd8] sm:$0xff]
    %v3118 = vld [vmem:[#allocation14 + $0xe0] sm:$0xff]
    %v3119 = vld [vmem:[#allocation14 + $0xe8] sm:$0xff]
    %v3120 = vld [vmem:[#allocation14 + $0xf0] sm:$0xff]
    %v3121 = vld [vmem:[#allocation14 + $0xf8] sm:$0xff]
    %v3122 = vld [vmem:[#allocation14 + $0x100] sm:$0xff]
    %v3123 = vld [vmem:[#allocation14 + $0x108] sm:$0xff]
    %v3124 = vld [vmem:[#allocation14 + $0x110] sm:$0xff]
    %v3125 = vld [vmem:[#allocation14 + $0x118] sm:$0xff]
    %v3126 = vld [vmem:[#allocation14 + $0x120] sm:$0xff]
    %v3127 = vld [vmem:[#allocation14 + $0x128] sm:$0xff]
    %v3128 = vld [vmem:[#allocation14 + $0x130] sm:$0xff]
    %v3129 = vld [vmem:[#allocation14 + $0x138] sm:$0xff]
    %v3130 = vld [vmem:[#allocation14 + $0x140] sm:$0xff]
    %v3131 = vld [vmem:[#allocation14 + $0x148] sm:$0xff]
    %v3132 = vld [vmem:[#allocation14 + $0x150] sm:$0xff]
    %v3133 = vld [vmem:[#allocation14 + $0x158] sm:$0xff]
    %v3134 = vld [vmem:[#allocation14 + $0x160] sm:$0xff]
    %v3135 = vld [vmem:[#allocation14 + $0x168] sm:$0xff]
    %v3136 = vld [vmem:[#allocation14 + $0x170] sm:$0xff]
    %v3137 = vld [vmem:[#allocation14 + $0x178] sm:$0xff]
    %v3138 = vld [vmem:[#allocation14 + $0x180] sm:$0xff]
    %v3139 = vld [vmem:[#allocation14 + $0x188] sm:$0xff]
    %v3140 = vld [vmem:[#allocation14 + $0x190] sm:$0xff]
    %v3141 = vld [vmem:[#allocation14 + $0x198] sm:$0xff]
    %v3142 = vld [vmem:[#allocation14 + $0x1a0] sm:$0xff]
    %v3143 = vld [vmem:[#allocation14 + $0x1a8] sm:$0xff]
    %v3144 = vld [vmem:[#allocation14 + $0x1b0] sm:$0xff]
    %v3145 = vld [vmem:[#allocation14 + $0x1b8] sm:$0xff]
    %v3146 = vld [vmem:[#allocation14 + $0x1c0] sm:$0xff]
    %v3147 = vld [vmem:[#allocation14 + $0x1c8] sm:$0xff]
    %v3148 = vld [vmem:[#allocation14 + $0x1d0] sm:$0xff]
    %v3149 = vld [vmem:[#allocation14 + $0x1d8] sm:$0xff]
    %v3150 = vld [vmem:[#allocation14 + $0x1e0] sm:$0xff]
    %v3151 = vld [vmem:[#allocation14 + $0x1e8] sm:$0xff]
    %v3152 = vld [vmem:[#allocation14 + $0x1f0] sm:$0xff]
    %v3153 = vld [vmem:[#allocation14 + $0x1f8] sm:$0xff]
    %v3154 = vld [vmem:[#allocation14 + $0x200] sm:$0xff]
    %v3155 = vld [vmem:[#allocation14 + $0x208] sm:$0xff]
    %v3156 = vld [vmem:[#allocation14 + $0x210] sm:$0xff]
    %v3157 = vld [vmem:[#allocation14 + $0x218] sm:$0xff]
    %v3158 = vld [vmem:[#allocation14 + $0x220] sm:$0xff]
    %v3159 = vld [vmem:[#allocation14 + $0x228] sm:$0xff]
    %v3160 = vld [vmem:[#allocation14 + $0x230] sm:$0xff]
    %v3161 = vld [vmem:[#allocation14 + $0x238] sm:$0xff]
    %v3162 = vld [vmem:[#allocation14 + $0x240] sm:$0xff]
    %v3163 = vld [vmem:[#allocation14 + $0x248] sm:$0xff]
    %v3164 = vld [vmem:[#allocation14 + $0x250] sm:$0xff]
    %v3165 = vld [vmem:[#allocation14 + $0x258] sm:$0xff]
    %v3166 = vld [vmem:[#allocation14 + $0x260] sm:$0xff]
    %v3167 = vld [vmem:[#allocation14 + $0x268] sm:$0xff]
    %v3168 = vld [vmem:[#allocation14 + $0x270] sm:$0xff]
    %v3169 = vld [vmem:[#allocation14 + $0x278] sm:$0xff]
    %v3170 = vld [vmem:[#allocation14 + $0x280] sm:$0xff]
    %v3171 = vld [vmem:[#allocation14 + $0x288] sm:$0xff]
    %v3172 = vld [vmem:[#allocation14 + $0x290] sm:$0xff]
    %v3173 = vld [vmem:[#allocation14 + $0x298] sm:$0xff]
    %v3174 = vld [vmem:[#allocation14 + $0x2a0] sm:$0xff]
    %v3175 = vld [vmem:[#allocation14 + $0x2a8] sm:$0xff]
    %v3176 = vld [vmem:[#allocation14 + $0x2b0] sm:$0xff]
    %v3177 = vld [vmem:[#allocation14 + $0x2b8] sm:$0xff]
    %v3178 = vld [vmem:[#allocation14 + $0x2c0] sm:$0xff]
    %v3179 = vld [vmem:[#allocation14 + $0x2c8] sm:$0xff]
    %v3180 = vld [vmem:[#allocation14 + $0x2d0] sm:$0xff]
    %v3181 = vld [vmem:[#allocation14 + $0x2d8] sm:$0xff]
    %v3182 = vld [vmem:[#allocation14 + $0x2e0] sm:$0xff]
    %v3183 = vld [vmem:[#allocation14 + $0x2e8] sm:$0xff]
    %v3184 = vld [vmem:[#allocation14 + $0x2f0] sm:$0xff]
    %v3185 = vld [vmem:[#allocation14 + $0x2f8] sm:$0xff]
    %v3186 = vld [vmem:[#allocation14 + $0x300] sm:$0xff]
    %v3187 = vld [vmem:[#allocation14 + $0x308] sm:$0xff]
    %v3188 = vld [vmem:[#allocation14 + $0x310] sm:$0xff]
    %v3189 = vld [vmem:[#allocation14 + $0x318] sm:$0xff]
    %v3190 = vld [vmem:[#allocation14 + $0x320] sm:$0xff]
    %v3191 = vld [vmem:[#allocation14 + $0x328] sm:$0xff]
    %v3192 = vld [vmem:[#allocation14 + $0x330] sm:$0xff]
    %v3193 = vld [vmem:[#allocation14 + $0x338] sm:$0xff]
    %v3194 = vld [vmem:[#allocation14 + $0x340] sm:$0xff]
    %v3195 = vld [vmem:[#allocation14 + $0x348] sm:$0xff]
    %v3196 = vld [vmem:[#allocation14 + $0x350] sm:$0xff]
    %v3197 = vld [vmem:[#allocation14 + $0x358] sm:$0xff]
    %v3198 = vld [vmem:[#allocation14 + $0x360] sm:$0xff]
    %v3199 = vld [vmem:[#allocation14 + $0x368] sm:$0xff]
    %v3200 = vld [vmem:[#allocation14 + $0x370] sm:$0xff]
    %v3201 = vld [vmem:[#allocation14 + $0x378] sm:$0xff]
    %v3202 = vld [vmem:[#allocation14 + $0x380] sm:$0xff]
    %v3203 = vld [vmem:[#allocation14 + $0x388] sm:$0xff]
    %v3204 = vld [vmem:[#allocation14 + $0x390] sm:$0xff]
    %v3205 = vld [vmem:[#allocation14 + $0x398] sm:$0xff]
    %v3206 = vld [vmem:[#allocation14 + $0x3a0] sm:$0xff]
    %v3207 = vld [vmem:[#allocation14 + $0x3a8] sm:$0xff]
    %v3208 = vld [vmem:[#allocation14 + $0x3b0] sm:$0xff]
    %v3209 = vld [vmem:[#allocation14 + $0x3b8] sm:$0xff]
    %v3210 = vld [vmem:[#allocation14 + $0x3c0] sm:$0xff]
    %v3211 = vld [vmem:[#allocation14 + $0x3c8] sm:$0xff]
    %v3212 = vld [vmem:[#allocation14 + $0x3d0] sm:$0xff]
    %v3213 = vld [vmem:[#allocation14 + $0x3d8] sm:$0xff]
    %v3214 = vld [vmem:[#allocation14 + $0x3e0] sm:$0xff]
    %v3215 = vld [vmem:[#allocation14 + $0x3e8] sm:$0xff]
    %v3216 = vld [vmem:[#allocation14 + $0x3f0] sm:$0xff]
    %v3217 = vld [vmem:[#allocation14 + $0x3f8] sm:$0xff]
    %v3218 = vld [vmem:[%s10] sm:$0xf]
    %v3220 = vlaneseq
    %v3221 = vshrl.u32 %v3220, 7
    %v3222 = vsub.s32 0, %v3221
    %v3223 = vrot.slane %v3218, %v3222
    %v3224 = vlaneseq
    %v3225 = vshrl.u32 %v3224, 7
    %v3226 = vsub.s32 1, %v3225
    %v3227 = vrot.slane %v3218, %v3226
    %v3228 = vlaneseq
    %v3229 = vshrl.u32 %v3228, 7
    %v3230 = vsub.s32 2, %v3229
    %v3231 = vrot.slane %v3218, %v3230
    %v3232 = vlaneseq
    %v3233 = vshrl.u32 %v3232, 7
    %v3234 = vsub.s32 3, %v3233
    %v3235 = vrot.slane %v3218, %v3234
    %v3368 = vunpack.c.l.b16 %v3090
    %v3369 = vunpack.c.h.b16 %v3090
    %v3370 = vunpack.c.l.b16 %v3091
    %v3371 = vunpack.c.h.b16 %v3091
    %v3372 = vunpack.c.l.b16 %v3092
    %v3373 = vunpack.c.h.b16 %v3092
    %v3374 = vunpack.c.l.b16 %v3093
    %v3375 = vunpack.c.h.b16 %v3093
    %v3376 = vunpack.c.l.b16 %v3094
    %v3377 = vunpack.c.h.b16 %v3094
    %v3378 = vunpack.c.l.b16 %v3095
    %v3379 = vunpack.c.h.b16 %v3095
    %v3380 = vunpack.c.l.b16 %v3096
    %v3381 = vunpack.c.h.b16 %v3096
    %v3382 = vunpack.c.l.b16 %v3097
    %v3383 = vunpack.c.h.b16 %v3097
    %v3384 = vunpack.c.l.b16 %v3098
    %v3385 = vunpack.c.h.b16 %v3098
    %v3386 = vunpack.c.l.b16 %v3099
    %v3387 = vunpack.c.h.b16 %v3099
    %v3388 = vunpack.c.l.b16 %v3100
    %v3389 = vunpack.c.h.b16 %v3100
    %v3390 = vunpack.c.l.b16 %v3101
    %v3391 = vunpack.c.h.b16 %v3101
    %v3392 = vunpack.c.l.b16 %v3102
    %v3393 = vunpack.c.h.b16 %v3102
    %v3394 = vunpack.c.l.b16 %v3103
    %v3395 = vunpack.c.h.b16 %v3103
    %v3396 = vunpack.c.l.b16 %v3104
    %v3397 = vunpack.c.h.b16 %v3104
    %v3398 = vunpack.c.l.b16 %v3105
    %v3399 = vunpack.c.h.b16 %v3105
    %v3400 = vunpack.c.l.b16 %v3106
    %v3401 = vunpack.c.h.b16 %v3106
    %v3402 = vunpack.c.l.b16 %v3107
    %v3403 = vunpack.c.h.b16 %v3107
    %v3404 = vunpack.c.l.b16 %v3108
    %v3405 = vunpack.c.h.b16 %v3108
    %v3406 = vunpack.c.l.b16 %v3109
    %v3407 = vunpack.c.h.b16 %v3109
    %v3408 = vunpack.c.l.b16 %v3110
    %v3409 = vunpack.c.h.b16 %v3110
    %v3410 = vunpack.c.l.b16 %v3111
    %v3411 = vunpack.c.h.b16 %v3111
    %v3412 = vunpack.c.l.b16 %v3112
    %v3413 = vunpack.c.h.b16 %v3112
    %v3414 = vunpack.c.l.b16 %v3113
    %v3415 = vunpack.c.h.b16 %v3113
    %v3416 = vunpack.c.l.b16 %v3114
    %v3417 = vunpack.c.h.b16 %v3114
    %v3418 = vunpack.c.l.b16 %v3115
    %v3419 = vunpack.c.h.b16 %v3115
    %v3420 = vunpack.c.l.b16 %v3116
    %v3421 = vunpack.c.h.b16 %v3116
    %v3422 = vunpack.c.l.b16 %v3117
    %v3423 = vunpack.c.h.b16 %v3117
    %v3424 = vunpack.c.l.b16 %v3118
    %v3425 = vunpack.c.h.b16 %v3118
    %v3426 = vunpack.c.l.b16 %v3119
    %v3427 = vunpack.c.h.b16 %v3119
    %v3428 = vunpack.c.l.b16 %v3120
    %v3429 = vunpack.c.h.b16 %v3120
    %v3430 = vunpack.c.l.b16 %v3121
    %v3431 = vunpack.c.h.b16 %v3121
    %v3432 = vunpack.c.l.b16 %v3122
    %v3433 = vunpack.c.h.b16 %v3122
    %v3434 = vunpack.c.l.b16 %v3123
    %v3435 = vunpack.c.h.b16 %v3123
    %v3436 = vunpack.c.l.b16 %v3124
    %v3437 = vunpack.c.h.b16 %v3124
    %v3438 = vunpack.c.l.b16 %v3125
    %v3439 = vunpack.c.h.b16 %v3125
    %v3440 = vunpack.c.l.b16 %v3126
    %v3441 = vunpack.c.h.b16 %v3126
    %v3442 = vunpack.c.l.b16 %v3127
    %v3443 = vunpack.c.h.b16 %v3127
    %v3444 = vunpack.c.l.b16 %v3128
    %v3445 = vunpack.c.h.b16 %v3128
    %v3446 = vunpack.c.l.b16 %v3129
    %v3447 = vunpack.c.h.b16 %v3129
    %v3448 = vunpack.c.l.b16 %v3130
    %v3449 = vunpack.c.h.b16 %v3130
    %v3450 = vunpack.c.l.b16 %v3131
    %v3451 = vunpack.c.h.b16 %v3131
    %v3452 = vunpack.c.l.b16 %v3132
    %v3453 = vunpack.c.h.b16 %v3132
    %v3454 = vunpack.c.l.b16 %v3133
    %v3455 = vunpack.c.h.b16 %v3133
    %v3456 = vunpack.c.l.b16 %v3134
    %v3457 = vunpack.c.h.b16 %v3134
    %v3458 = vunpack.c.l.b16 %v3135
    %v3459 = vunpack.c.h.b16 %v3135
    %v3460 = vunpack.c.l.b16 %v3136
    %v3461 = vunpack.c.h.b16 %v3136
    %v3462 = vunpack.c.l.b16 %v3137
    %v3463 = vunpack.c.h.b16 %v3137
    %v3464 = vunpack.c.l.b16 %v3138
    %v3465 = vunpack.c.h.b16 %v3138
    %v3466 = vunpack.c.l.b16 %v3139
    %v3467 = vunpack.c.h.b16 %v3139
    %v3468 = vunpack.c.l.b16 %v3140
    %v3469 = vunpack.c.h.b16 %v3140
    %v3470 = vunpack.c.l.b16 %v3141
    %v3471 = vunpack.c.h.b16 %v3141
    %v3472 = vunpack.c.l.b16 %v3142
    %v3473 = vunpack.c.h.b16 %v3142
    %v3474 = vunpack.c.l.b16 %v3143
    %v3475 = vunpack.c.h.b16 %v3143
    %v3476 = vunpack.c.l.b16 %v3144
    %v3477 = vunpack.c.h.b16 %v3144
    %v3478 = vunpack.c.l.b16 %v3145
    %v3479 = vunpack.c.h.b16 %v3145
    %v3480 = vunpack.c.l.b16 %v3146
    %v3481 = vunpack.c.h.b16 %v3146
    %v3482 = vunpack.c.l.b16 %v3147
    %v3483 = vunpack.c.h.b16 %v3147
    %v3484 = vunpack.c.l.b16 %v3148
    %v3485 = vunpack.c.h.b16 %v3148
    %v3486 = vunpack.c.l.b16 %v3149
    %v3487 = vunpack.c.h.b16 %v3149
    %v3488 = vunpack.c.l.b16 %v3150
    %v3489 = vunpack.c.h.b16 %v3150
    %v3490 = vunpack.c.l.b16 %v3151
    %v3491 = vunpack.c.h.b16 %v3151
    %v3492 = vunpack.c.l.b16 %v3152
    %v3493 = vunpack.c.h.b16 %v3152
    %v3494 = vunpack.c.l.b16 %v3153
    %v3495 = vunpack.c.h.b16 %v3153
    %v3496 = vunpack.c.l.b16 %v3154
    %v3497 = vunpack.c.h.b16 %v3154
    %v3498 = vunpack.c.l.b16 %v3155
    %v3499 = vunpack.c.h.b16 %v3155
    %v3500 = vunpack.c.l.b16 %v3156
    %v3501 = vunpack.c.h.b16 %v3156
    %v3502 = vunpack.c.l.b16 %v3157
    %v3503 = vunpack.c.h.b16 %v3157
    %v3504 = vunpack.c.l.b16 %v3158
    %v3505 = vunpack.c.h.b16 %v3158
    %v3506 = vunpack.c.l.b16 %v3159
    %v3507 = vunpack.c.h.b16 %v3159
    %v3508 = vunpack.c.l.b16 %v3160
    %v3509 = vunpack.c.h.b16 %v3160
    %v3510 = vunpack.c.l.b16 %v3161
    %v3511 = vunpack.c.h.b16 %v3161
    %v3512 = vunpack.c.l.b16 %v3162
    %v3513 = vunpack.c.h.b16 %v3162
    %v3514 = vunpack.c.l.b16 %v3163
    %v3515 = vunpack.c.h.b16 %v3163
    %v3516 = vunpack.c.l.b16 %v3164
    %v3517 = vunpack.c.h.b16 %v3164
    %v3518 = vunpack.c.l.b16 %v3165
    %v3519 = vunpack.c.h.b16 %v3165
    %v3520 = vunpack.c.l.b16 %v3166
    %v3521 = vunpack.c.h.b16 %v3166
    %v3522 = vunpack.c.l.b16 %v3167
    %v3523 = vunpack.c.h.b16 %v3167
    %v3524 = vunpack.c.l.b16 %v3168
    %v3525 = vunpack.c.h.b16 %v3168
    %v3526 = vunpack.c.l.b16 %v3169
    %v3527 = vunpack.c.h.b16 %v3169
    %v3528 = vunpack.c.l.b16 %v3170
    %v3529 = vunpack.c.h.b16 %v3170
    %v3530 = vunpack.c.l.b16 %v3171
    %v3531 = vunpack.c.h.b16 %v3171
    %v3532 = vunpack.c.l.b16 %v3172
    %v3533 = vunpack.c.h.b16 %v3172
    %v3534 = vunpack.c.l.b16 %v3173
    %v3535 = vunpack.c.h.b16 %v3173
    %v3536 = vunpack.c.l.b16 %v3174
    %v3537 = vunpack.c.h.b16 %v3174
    %v3538 = vunpack.c.l.b16 %v3175
    %v3539 = vunpack.c.h.b16 %v3175
    %v3540 = vunpack.c.l.b16 %v3176
    %v3541 = vunpack.c.h.b16 %v3176
    %v3542 = vunpack.c.l.b16 %v3177
    %v3543 = vunpack.c.h.b16 %v3177
    %v3544 = vunpack.c.l.b16 %v3178
    %v3545 = vunpack.c.h.b16 %v3178
    %v3546 = vunpack.c.l.b16 %v3179
    %v3547 = vunpack.c.h.b16 %v3179
    %v3548 = vunpack.c.l.b16 %v3180
    %v3549 = vunpack.c.h.b16 %v3180
    %v3550 = vunpack.c.l.b16 %v3181
    %v3551 = vunpack.c.h.b16 %v3181
    %v3552 = vunpack.c.l.b16 %v3182
    %v3553 = vunpack.c.h.b16 %v3182
    %v3554 = vunpack.c.l.b16 %v3183
    %v3555 = vunpack.c.h.b16 %v3183
    %v3556 = vunpack.c.l.b16 %v3184
    %v3557 = vunpack.c.h.b16 %v3184
    %v3558 = vunpack.c.l.b16 %v3185
    %v3559 = vunpack.c.h.b16 %v3185
    %v3560 = vunpack.c.l.b16 %v3186
    %v3561 = vunpack.c.h.b16 %v3186
    %v3562 = vunpack.c.l.b16 %v3187
    %v3563 = vunpack.c.h.b16 %v3187
    %v3564 = vunpack.c.l.b16 %v3188
    %v3565 = vunpack.c.h.b16 %v3188
    %v3566 = vunpack.c.l.b16 %v3189
    %v3567 = vunpack.c.h.b16 %v3189
    %v3568 = vunpack.c.l.b16 %v3190
    %v3569 = vunpack.c.h.b16 %v3190
    %v3570 = vunpack.c.l.b16 %v3191
    %v3571 = vunpack.c.h.b16 %v3191
    %v3572 = vunpack.c.l.b16 %v3192
    %v3573 = vunpack.c.h.b16 %v3192
    %v3574 = vunpack.c.l.b16 %v3193
    %v3575 = vunpack.c.h.b16 %v3193
    %v3576 = vunpack.c.l.b16 %v3194
    %v3577 = vunpack.c.h.b16 %v3194
    %v3578 = vunpack.c.l.b16 %v3195
    %v3579 = vunpack.c.h.b16 %v3195
    %v3580 = vunpack.c.l.b16 %v3196
    %v3581 = vunpack.c.h.b16 %v3196
    %v3582 = vunpack.c.l.b16 %v3197
    %v3583 = vunpack.c.h.b16 %v3197
    %v3584 = vunpack.c.l.b16 %v3198
    %v3585 = vunpack.c.h.b16 %v3198
    %v3586 = vunpack.c.l.b16 %v3199
    %v3587 = vunpack.c.h.b16 %v3199
    %v3588 = vunpack.c.l.b16 %v3200
    %v3589 = vunpack.c.h.b16 %v3200
    %v3590 = vunpack.c.l.b16 %v3201
    %v3591 = vunpack.c.h.b16 %v3201
    %v3592 = vunpack.c.l.b16 %v3202
    %v3593 = vunpack.c.h.b16 %v3202
    %v3594 = vunpack.c.l.b16 %v3203
    %v3595 = vunpack.c.h.b16 %v3203
    %v3596 = vunpack.c.l.b16 %v3204
    %v3597 = vunpack.c.h.b16 %v3204
    %v3598 = vunpack.c.l.b16 %v3205
    %v3599 = vunpack.c.h.b16 %v3205
    %v3600 = vunpack.c.l.b16 %v3206
    %v3601 = vunpack.c.h.b16 %v3206
    %v3602 = vunpack.c.l.b16 %v3207
    %v3603 = vunpack.c.h.b16 %v3207
    %v3604 = vunpack.c.l.b16 %v3208
    %v3605 = vunpack.c.h.b16 %v3208
    %v3606 = vunpack.c.l.b16 %v3209
    %v3607 = vunpack.c.h.b16 %v3209
    %v3608 = vunpack.c.l.b16 %v3210
    %v3609 = vunpack.c.h.b16 %v3210
    %v3610 = vunpack.c.l.b16 %v3211
    %v3611 = vunpack.c.h.b16 %v3211
    %v3612 = vunpack.c.l.b16 %v3212
    %v3613 = vunpack.c.h.b16 %v3212
    %v3614 = vunpack.c.l.b16 %v3213
    %v3615 = vunpack.c.h.b16 %v3213
    %v3616 = vunpack.c.l.b16 %v3214
    %v3617 = vunpack.c.h.b16 %v3214
    %v3618 = vunpack.c.l.b16 %v3215
    %v3619 = vunpack.c.h.b16 %v3215
    %v3620 = vunpack.c.l.b16 %v3216
    %v3621 = vunpack.c.h.b16 %v3216
    %v3622 = vunpack.c.l.b16 %v3217
    %v3623 = vunpack.c.h.b16 %v3217
    %v3624 = vpack.c.b16 %v3372, %v3368
    %v3625 = vpack.c.b16 %v3373, %v3369
    %v3626 = vpack.c.b16 %v3374, %v3370
    %v3627 = vpack.c.b16 %v3375, %v3371
    %v3628 = vpack.c.b16 %v3380, %v3376
    %v3629 = vpack.c.b16 %v3381, %v3377
    %v3630 = vpack.c.b16 %v3382, %v3378
    %v3631 = vpack.c.b16 %v3383, %v3379
    %v3632 = vpack.c.b16 %v3388, %v3384
    %v3633 = vpack.c.b16 %v3389, %v3385
    %v3634 = vpack.c.b16 %v3390, %v3386
    %v3635 = vpack.c.b16 %v3391, %v3387
    %v3636 = vpack.c.b16 %v3396, %v3392
    %v3637 = vpack.c.b16 %v3397, %v3393
    %v3638 = vpack.c.b16 %v3398, %v3394
    %v3639 = vpack.c.b16 %v3399, %v3395
    %v3640 = vpack.c.b16 %v3404, %v3400
    %v3641 = vpack.c.b16 %v3405, %v3401
    %v3642 = vpack.c.b16 %v3406, %v3402
    %v3643 = vpack.c.b16 %v3407, %v3403
    %v3644 = vpack.c.b16 %v3412, %v3408
    %v3645 = vpack.c.b16 %v3413, %v3409
    %v3646 = vpack.c.b16 %v3414, %v3410
    %v3647 = vpack.c.b16 %v3415, %v3411
    %v3648 = vpack.c.b16 %v3420, %v3416
    %v3649 = vpack.c.b16 %v3421, %v3417
    %v3650 = vpack.c.b16 %v3422, %v3418
    %v3651 = vpack.c.b16 %v3423, %v3419
    %v3652 = vpack.c.b16 %v3428, %v3424
    %v3653 = vpack.c.b16 %v3429, %v3425
    %v3654 = vpack.c.b16 %v3430, %v3426
    %v3655 = vpack.c.b16 %v3431, %v3427
    %v3656 = vpack.c.b16 %v3436, %v3432
    %v3657 = vpack.c.b16 %v3437, %v3433
    %v3658 = vpack.c.b16 %v3438, %v3434
    %v3659 = vpack.c.b16 %v3439, %v3435
    %v3660 = vpack.c.b16 %v3444, %v3440
    %v3661 = vpack.c.b16 %v3445, %v3441
    %v3662 = vpack.c.b16 %v3446, %v3442
    %v3663 = vpack.c.b16 %v3447, %v3443
    %v3664 = vpack.c.b16 %v3452, %v3448
    %v3665 = vpack.c.b16 %v3453, %v3449
    %v3666 = vpack.c.b16 %v3454, %v3450
    %v3667 = vpack.c.b16 %v3455, %v3451
    %v3668 = vpack.c.b16 %v3460, %v3456
    %v3669 = vpack.c.b16 %v3461, %v3457
    %v3670 = vpack.c.b16 %v3462, %v3458
    %v3671 = vpack.c.b16 %v3463, %v3459
    %v3672 = vpack.c.b16 %v3468, %v3464
    %v3673 = vpack.c.b16 %v3469, %v3465
    %v3674 = vpack.c.b16 %v3470, %v3466
    %v3675 = vpack.c.b16 %v3471, %v3467
    %v3676 = vpack.c.b16 %v3476, %v3472
    %v3677 = vpack.c.b16 %v3477, %v3473
    %v3678 = vpack.c.b16 %v3478, %v3474
    %v3679 = vpack.c.b16 %v3479, %v3475
    %v3680 = vpack.c.b16 %v3484, %v3480
    %v3681 = vpack.c.b16 %v3485, %v3481
    %v3682 = vpack.c.b16 %v3486, %v3482
    %v3683 = vpack.c.b16 %v3487, %v3483
    %v3684 = vpack.c.b16 %v3492, %v3488
    %v3685 = vpack.c.b16 %v3493, %v3489
    %v3686 = vpack.c.b16 %v3494, %v3490
    %v3687 = vpack.c.b16 %v3495, %v3491
    %v3688 = vpack.c.b16 %v3500, %v3496
    %v3689 = vpack.c.b16 %v3501, %v3497
    %v3690 = vpack.c.b16 %v3502, %v3498
    %v3691 = vpack.c.b16 %v3503, %v3499
    %v3692 = vpack.c.b16 %v3508, %v3504
    %v3693 = vpack.c.b16 %v3509, %v3505
    %v3694 = vpack.c.b16 %v3510, %v3506
    %v3695 = vpack.c.b16 %v3511, %v3507
    %v3696 = vpack.c.b16 %v3516, %v3512
    %v3697 = vpack.c.b16 %v3517, %v3513
    %v3698 = vpack.c.b16 %v3518, %v3514
    %v3699 = vpack.c.b16 %v3519, %v3515
    %v3700 = vpack.c.b16 %v3524, %v3520
    %v3701 = vpack.c.b16 %v3525, %v3521
    %v3702 = vpack.c.b16 %v3526, %v3522
    %v3703 = vpack.c.b16 %v3527, %v3523
    %v3704 = vpack.c.b16 %v3532, %v3528
    %v3705 = vpack.c.b16 %v3533, %v3529
    %v3706 = vpack.c.b16 %v3534, %v3530
    %v3707 = vpack.c.b16 %v3535, %v3531
    %v3708 = vpack.c.b16 %v3540, %v3536
    %v3709 = vpack.c.b16 %v3541, %v3537
    %v3710 = vpack.c.b16 %v3542, %v3538
    %v3711 = vpack.c.b16 %v3543, %v3539
    %v3712 = vpack.c.b16 %v3548, %v3544
    %v3713 = vpack.c.b16 %v3549, %v3545
    %v3714 = vpack.c.b16 %v3550, %v3546
    %v3715 = vpack.c.b16 %v3551, %v3547
    %v3716 = vpack.c.b16 %v3556, %v3552
    %v3717 = vpack.c.b16 %v3557, %v3553
    %v3718 = vpack.c.b16 %v3558, %v3554
    %v3719 = vpack.c.b16 %v3559, %v3555
    %v3720 = vpack.c.b16 %v3564, %v3560
    %v3721 = vpack.c.b16 %v3565, %v3561
    %v3722 = vpack.c.b16 %v3566, %v3562
    %v3723 = vpack.c.b16 %v3567, %v3563
    %v3724 = vpack.c.b16 %v3572, %v3568
    %v3725 = vpack.c.b16 %v3573, %v3569
    %v3726 = vpack.c.b16 %v3574, %v3570
    %v3727 = vpack.c.b16 %v3575, %v3571
    %v3728 = vpack.c.b16 %v3580, %v3576
    %v3729 = vpack.c.b16 %v3581, %v3577
    %v3730 = vpack.c.b16 %v3582, %v3578
    %v3731 = vpack.c.b16 %v3583, %v3579
    %v3732 = vpack.c.b16 %v3588, %v3584
    %v3733 = vpack.c.b16 %v3589, %v3585
    %v3734 = vpack.c.b16 %v3590, %v3586
    %v3735 = vpack.c.b16 %v3591, %v3587
    %v3736 = vpack.c.b16 %v3596, %v3592
    %v3737 = vpack.c.b16 %v3597, %v3593
    %v3738 = vpack.c.b16 %v3598, %v3594
    %v3739 = vpack.c.b16 %v3599, %v3595
    %v3740 = vpack.c.b16 %v3604, %v3600
    %v3741 = vpack.c.b16 %v3605, %v3601
    %v3742 = vpack.c.b16 %v3606, %v3602
    %v3743 = vpack.c.b16 %v3607, %v3603
    %v3744 = vpack.c.b16 %v3612, %v3608
    %v3745 = vpack.c.b16 %v3613, %v3609
    %v3746 = vpack.c.b16 %v3614, %v3610
    %v3747 = vpack.c.b16 %v3615, %v3611
    %v3748 = vpack.c.b16 %v3620, %v3616
    %v3749 = vpack.c.b16 %v3621, %v3617
    %v3750 = vpack.c.b16 %v3622, %v3618
    %v3751 = vpack.c.b16 %v3623, %v3619
    %3880 = vmatprep.subr.bf16.mxu0 %v3653
    %3881 = vmatpush1.bf16.msra.mxu0 %v3652
    %3882 = vmatprep.subr.bf16.mxu0 %v3649
    %3883 = vmatpush1.bf16.msra.mxu0 %v3648
    %3884 = vmatprep.subr.bf16.mxu0 %v3645
    %3885 = vmatpush1.bf16.msra.mxu0 %v3644
    %3886 = vmatprep.subr.bf16.mxu0 %v3641
    %3887 = vmatpush1.bf16.msra.mxu0 %v3640
    %3888 = vmatprep.subr.bf16.mxu0 %v3637
    %3889 = vmatpush1.bf16.msra.mxu0 %v3636
    %3890 = vmatprep.subr.bf16.mxu0 %v3633
    %3891 = vmatpush1.bf16.msra.mxu0 %v3632
    %3892 = vmatprep.subr.bf16.mxu0 %v3629
    %3893 = vmatpush1.bf16.msra.mxu0 %v3628
    %3894 = vmatprep.subr.bf16.mxu0 %v3625
    %3895 = vmatpush1.bf16.msra.mxu0 %v3624
    %3896 = vmatprep.subr.bf16.mxu0 %v3685
    %3897 = vmatpush2.bf16.msra.mxu0 %v3684
    %3898 = vmatprep.subr.bf16.mxu0 %v3681
    %3899 = vmatpush2.bf16.msra.mxu0 %v3680
    %3900 = vmatprep.subr.bf16.mxu0 %v3677
    %3901 = vmatpush2.bf16.msra.mxu0 %v3676
    %3902 = vmatprep.subr.bf16.mxu0 %v3673
    %3903 = vmatpush2.bf16.msra.mxu0 %v3672
    %3904 = vmatprep.subr.bf16.mxu0 %v3669
    %3905 = vmatpush2.bf16.msra.mxu0 %v3668
    %3906 = vmatprep.subr.bf16.mxu0 %v3665
    %3907 = vmatpush2.bf16.msra.mxu0 %v3664
    %3908 = vmatprep.subr.bf16.mxu0 %v3661
    %3909 = vmatpush2.bf16.msra.mxu0 %v3660
    %3910 = vmatprep.subr.bf16.mxu0 %v3657
    %3911 = vmatpush2.bf16.msra.mxu0 %v3656
    %3912 = vmatprep.mubr.bf16.mxu0 %v3087
    %3913 = vmatmul.mubr.bf16.gmra.mxu0 %v3086
    %v3914 = vpop.f32.mrf.mxu0
    %v3915 = vadd.f32 %v3223, %v3914
    %v3916 = vpop.f32.mrf.mxu0
    %v3917 = vadd.f32 %v3227, %v3916
    %v3918 = vpop.f32.mrf.mxu0
    %v3919 = vadd.f32 %v3223, %v3918
    %v3920 = vpop.f32.mrf.mxu0
    %v3921 = vadd.f32 %v3227, %v3920
    %3922 = vdwg.mxu0
    %3923 = vmatprep.subr.bf16.mxu0 %v3717
    %3924 = vmatpush1.bf16.msra.mxu0 %v3716
    %3925 = vmatprep.subr.bf16.mxu0 %v3713
    %3926 = vmatpush1.bf16.msra.mxu0 %v3712
    %3927 = vmatprep.subr.bf16.mxu0 %v3709
    %3928 = vmatpush1.bf16.msra.mxu0 %v3708
    %3929 = vmatprep.subr.bf16.mxu0 %v3705
    %3930 = vmatpush1.bf16.msra.mxu0 %v3704
    %3931 = vmatprep.subr.bf16.mxu0 %v3701
    %3932 = vmatpush1.bf16.msra.mxu0 %v3700
    %3933 = vmatprep.subr.bf16.mxu0 %v3697
    %3934 = vmatpush1.bf16.msra.mxu0 %v3696
    %3935 = vmatprep.subr.bf16.mxu0 %v3693
    %3936 = vmatpush1.bf16.msra.mxu0 %v3692
    %3937 = vmatprep.subr.bf16.mxu0 %v3689
    %3938 = vmatpush1.bf16.msra.mxu0 %v3688
    %3939 = vmatprep.subr.bf16.mxu0 %v3749
    %3940 = vmatpush2.bf16.msra.mxu0 %v3748
    %3941 = vmatprep.subr.bf16.mxu0 %v3745
    %3942 = vmatpush2.bf16.msra.mxu0 %v3744
    %3943 = vmatprep.subr.bf16.mxu0 %v3741
    %3944 = vmatpush2.bf16.msra.mxu0 %v3740
    %3945 = vmatprep.subr.bf16.mxu0 %v3737
    %3946 = vmatpush2.bf16.msra.mxu0 %v3736
    %3947 = vmatprep.subr.bf16.mxu0 %v3733
    %3948 = vmatpush2.bf16.msra.mxu0 %v3732
    %3949 = vmatprep.subr.bf16.mxu0 %v3729
    %3950 = vmatpush2.bf16.msra.mxu0 %v3728
    %3951 = vmatprep.subr.bf16.mxu0 %v3725
    %3952 = vmatpush2.bf16.msra.mxu0 %v3724
    %3953 = vmatprep.subr.bf16.mxu0 %v3721
    %3954 = vmatpush2.bf16.msra.mxu0 %v3720
    %3955 = vmatprep.mubr.bf16.mxu0 %v3089
    %3956 = vmatmul.mubr.bf16.gmra.mxu0 %v3088
    %v3957 = vpop.f32.mrf.mxu0
    %v3958 = vadd.f32 %v3915, %v3957
    %v3959 = vpop.f32.mrf.mxu0
    %v3960 = vadd.f32 %v3917, %v3959
    %v3961 = vpop.f32.mrf.mxu0
    %v3962 = vadd.f32 %v3919, %v3961
    %v3963 = vpop.f32.mrf.mxu0
    %v3964 = vadd.f32 %v3921, %v3963
    %3965 = vdwg.mxu0
    %3966 = vmatprep.subr.bf16.mxu0 %v3655
    %3967 = vmatpush1.bf16.msra.mxu0 %v3654
    %3968 = vmatprep.subr.bf16.mxu0 %v3651
    %3969 = vmatpush1.bf16.msra.mxu0 %v3650
    %3970 = vmatprep.subr.bf16.mxu0 %v3647
    %3971 = vmatpush1.bf16.msra.mxu0 %v3646
    %3972 = vmatprep.subr.bf16.mxu0 %v3643
    %3973 = vmatpush1.bf16.msra.mxu0 %v3642
    %3974 = vmatprep.subr.bf16.mxu0 %v3639
    %3975 = vmatpush1.bf16.msra.mxu0 %v3638
    %3976 = vmatprep.subr.bf16.mxu0 %v3635
    %3977 = vmatpush1.bf16.msra.mxu0 %v3634
    %3978 = vmatprep.subr.bf16.mxu0 %v3631
    %3979 = vmatpush1.bf16.msra.mxu0 %v3630
    %3980 = vmatprep.subr.bf16.mxu0 %v3627
    %3981 = vmatpush1.bf16.msra.mxu0 %v3626
    %3982 = vmatprep.subr.bf16.mxu0 %v3687
    %3983 = vmatpush2.bf16.msra.mxu0 %v3686
    %3984 = vmatprep.subr.bf16.mxu0 %v3683
    %3985 = vmatpush2.bf16.msra.mxu0 %v3682
    %3986 = vmatprep.subr.bf16.mxu0 %v3679
    %3987 = vmatpush2.bf16.msra.mxu0 %v3678
    %3988 = vmatprep.subr.bf16.mxu0 %v3675
    %3989 = vmatpush2.bf16.msra.mxu0 %v3674
    %3990 = vmatprep.subr.bf16.mxu0 %v3671
    %3991 = vmatpush2.bf16.msra.mxu0 %v3670
    %3992 = vmatprep.subr.bf16.mxu0 %v3667
    %3993 = vmatpush2.bf16.msra.mxu0 %v3666
    %3994 = vmatprep.subr.bf16.mxu0 %v3663
    %3995 = vmatpush2.bf16.msra.mxu0 %v3662
    %3996 = vmatprep.subr.bf16.mxu0 %v3659
    %3997 = vmatpush2.bf16.msra.mxu0 %v3658
    %3998 = vmatprep.mubr.bf16.mxu0 %v3087
    %3999 = vmatmul.mubr.bf16.gmra.mxu0 %v3086
    %v4000 = vpop.f32.mrf.mxu0
    %v4001 = vadd.f32 %v3231, %v4000
    %v4002 = vpop.f32.mrf.mxu0
    %v4003 = vadd.f32 %v3235, %v4002
    %v4004 = vpop.f32.mrf.mxu0
    %v4005 = vadd.f32 %v3231, %v4004
    %v4006 = vpop.f32.mrf.mxu0
    %v4007 = vadd.f32 %v3235, %v4006
    %4008 = vdwg.mxu0
    %4009 = vmatprep.subr.bf16.mxu0 %v3719
    %4010 = vmatpush1.bf16.msra.mxu0 %v3718
    %4011 = vmatprep.subr.bf16.mxu0 %v3715
    %4012 = vmatpush1.bf16.msra.mxu0 %v3714
    %4013 = vmatprep.subr.bf16.mxu0 %v3711
    %4014 = vmatpush1.bf16.msra.mxu0 %v3710
    %4015 = vmatprep.subr.bf16.mxu0 %v3707
    %4016 = vmatpush1.bf16.msra.mxu0 %v3706
    %4017 = vmatprep.subr.bf16.mxu0 %v3703
    %4018 = vmatpush1.bf16.msra.mxu0 %v3702
    %4019 = vmatprep.subr.bf16.mxu0 %v3699
    %4020 = vmatpush1.bf16.msra.mxu0 %v3698
    %4021 = vmatprep.subr.bf16.mxu0 %v3695
    %4022 = vmatpush1.bf16.msra.mxu0 %v3694
    %4023 = vmatprep.subr.bf16.mxu0 %v3691
    %4024 = vmatpush1.bf16.msra.mxu0 %v3690
    %4025 = vmatprep.subr.bf16.mxu0 %v3751
    %4026 = vmatpush2.bf16.msra.mxu0 %v3750
    %4027 = vmatprep.subr.bf16.mxu0 %v3747
    %4028 = vmatpush2.bf16.msra.mxu0 %v3746
    %4029 = vmatprep.subr.bf16.mxu0 %v3743
    %4030 = vmatpush2.bf16.msra.mxu0 %v3742
    %4031 = vmatprep.subr.bf16.mxu0 %v3739
    %4032 = vmatpush2.bf16.msra.mxu0 %v3738
    %4033 = vmatprep.subr.bf16.mxu0 %v3735
    %4034 = vmatpush2.bf16.msra.mxu0 %v3734
    %4035 = vmatprep.subr.bf16.mxu0 %v3731
    %4036 = vmatpush2.bf16.msra.mxu0 %v3730
    %4037 = vmatprep.subr.bf16.mxu0 %v3727
    %4038 = vmatpush2.bf16.msra.mxu0 %v3726
    %4039 = vmatprep.subr.bf16.mxu0 %v3723
    %4040 = vmatpush2.bf16.msra.mxu0 %v3722
    %4041 = vmatprep.mubr.bf16.mxu0 %v3089
    %4042 = vmatmul.mubr.bf16.gmra.mxu0 %v3088
    %v4043 = vpop.f32.mrf.mxu0
    %v4044 = vadd.f32 %v4001, %v4043
    %v4045 = vpop.f32.mrf.mxu0
    %v4046 = vadd.f32 %v4003, %v4045
    %v4047 = vpop.f32.mrf.mxu0
    %v4048 = vadd.f32 %v4005, %v4047
    %v4049 = vpop.f32.mrf.mxu0
    %v4050 = vadd.f32 %v4007, %v4049
    %4051 = vdwg.mxu0
    %v4052 = vmax.f32 %v3958, 0.0
    %v4053 = vmax.f32 %v3960, 0.0
    %v4054 = vmax.f32 %v4044, 0.0
    %v4055 = vmax.f32 %v4046, 0.0
    %v4056 = vmax.f32 %v3962, 0.0
    %v4057 = vmax.f32 %v3964, 0.0
    %v4058 = vmax.f32 %v4048, 0.0
    %v4059 = vmax.f32 %v4050, 0.0
    %v4060 = vpack.c.bf16 %v4056, %v4052
    %v4061 = vpack.c.bf16 %v4057, %v4053
    %v4062 = vpack.c.bf16 %v4058, %v4054
    %v4063 = vpack.c.bf16 %v4059, %v4055
    %v4064 = vld [vmem:[#allocation16] sm:$0xf]
    %v4065 = vld [vmem:[#allocation16 + $0x4] sm:$0xf]
    %v4066 = vld [vmem:[#allocation16 + $0x8] sm:$0xf]
    %v4067 = vld [vmem:[#allocation16 + $0xc] sm:$0xf]
    %v4068 = vld [vmem:[#allocation16 + $0x10] sm:$0xf]
    %v4069 = vld [vmem:[#allocation16 + $0x14] sm:$0xf]
    %v4070 = vld [vmem:[#allocation16 + $0x18] sm:$0xf]
    %v4071 = vld [vmem:[#allocation16 + $0x1c] sm:$0xf]
    %v4072 = vld [vmem:[#allocation16 + $0x20] sm:$0xf]
    %v4073 = vld [vmem:[#allocation16 + $0x24] sm:$0xf]
    %v4074 = vld [vmem:[#allocation16 + $0x28] sm:$0xf]
    %v4075 = vld [vmem:[#allocation16 + $0x2c] sm:$0xf]
    %v4076 = vld [vmem:[#allocation16 + $0x30] sm:$0xf]
    %v4077 = vld [vmem:[#allocation16 + $0x34] sm:$0xf]
    %v4078 = vld [vmem:[#allocation16 + $0x38] sm:$0xf]
    %v4079 = vld [vmem:[#allocation16 + $0x3c] sm:$0xf]
    %v4080 = vld [vmem:[#allocation16 + $0x40] sm:$0xf]
    %v4081 = vld [vmem:[#allocation16 + $0x44] sm:$0xf]
    %v4082 = vld [vmem:[#allocation16 + $0x48] sm:$0xf]
    %v4083 = vld [vmem:[#allocation16 + $0x4c] sm:$0xf]
    %v4084 = vld [vmem:[#allocation16 + $0x50] sm:$0xf]
    %v4085 = vld [vmem:[#allocation16 + $0x54] sm:$0xf]
    %v4086 = vld [vmem:[#allocation16 + $0x58] sm:$0xf]
    %v4087 = vld [vmem:[#allocation16 + $0x5c] sm:$0xf]
    %v4088 = vld [vmem:[#allocation16 + $0x60] sm:$0xf]
    %v4089 = vld [vmem:[#allocation16 + $0x64] sm:$0xf]
    %v4090 = vld [vmem:[#allocation16 + $0x68] sm:$0xf]
    %v4091 = vld [vmem:[#allocation16 + $0x6c] sm:$0xf]
    %v4092 = vld [vmem:[#allocation16 + $0x70] sm:$0xf]
    %v4093 = vld [vmem:[#allocation16 + $0x74] sm:$0xf]
    %v4094 = vld [vmem:[#allocation16 + $0x78] sm:$0xf]
    %v4095 = vld [vmem:[#allocation16 + $0x7c] sm:$0xf]
    %v4096 = vld [vmem:[#allocation16 + $0x80] sm:$0xf]
    %v4097 = vld [vmem:[#allocation16 + $0x84] sm:$0xf]
    %v4098 = vld [vmem:[#allocation16 + $0x88] sm:$0xf]
    %v4099 = vld [vmem:[#allocation16 + $0x8c] sm:$0xf]
    %v4100 = vld [vmem:[#allocation16 + $0x90] sm:$0xf]
    %v4101 = vld [vmem:[#allocation16 + $0x94] sm:$0xf]
    %v4102 = vld [vmem:[#allocation16 + $0x98] sm:$0xf]
    %v4103 = vld [vmem:[#allocation16 + $0x9c] sm:$0xf]
    %v4104 = vld [vmem:[#allocation16 + $0xa0] sm:$0xf]
    %v4105 = vld [vmem:[#allocation16 + $0xa4] sm:$0xf]
    %v4106 = vld [vmem:[#allocation16 + $0xa8] sm:$0xf]
    %v4107 = vld [vmem:[#allocation16 + $0xac] sm:$0xf]
    %v4108 = vld [vmem:[#allocation16 + $0xb0] sm:$0xf]
    %v4109 = vld [vmem:[#allocation16 + $0xb4] sm:$0xf]
    %v4110 = vld [vmem:[#allocation16 + $0xb8] sm:$0xf]
    %v4111 = vld [vmem:[#allocation16 + $0xbc] sm:$0xf]
    %v4112 = vld [vmem:[#allocation16 + $0xc0] sm:$0xf]
    %v4113 = vld [vmem:[#allocation16 + $0xc4] sm:$0xf]
    %v4114 = vld [vmem:[#allocation16 + $0xc8] sm:$0xf]
    %v4115 = vld [vmem:[#allocation16 + $0xcc] sm:$0xf]
    %v4116 = vld [vmem:[#allocation16 + $0xd0] sm:$0xf]
    %v4117 = vld [vmem:[#allocation16 + $0xd4] sm:$0xf]
    %v4118 = vld [vmem:[#allocation16 + $0xd8] sm:$0xf]
    %v4119 = vld [vmem:[#allocation16 + $0xdc] sm:$0xf]
    %v4120 = vld [vmem:[#allocation16 + $0xe0] sm:$0xf]
    %v4121 = vld [vmem:[#allocation16 + $0xe4] sm:$0xf]
    %v4122 = vld [vmem:[#allocation16 + $0xe8] sm:$0xf]
    %v4123 = vld [vmem:[#allocation16 + $0xec] sm:$0xf]
    %v4124 = vld [vmem:[#allocation16 + $0xf0] sm:$0xf]
    %v4125 = vld [vmem:[#allocation16 + $0xf4] sm:$0xf]
    %v4126 = vld [vmem:[#allocation16 + $0xf8] sm:$0xf]
    %v4127 = vld [vmem:[#allocation16 + $0xfc] sm:$0xf]
    %v4128 = vld [vmem:[%s12] sm:$0x1]
    %v4130 = vlaneseq
    %v4131 = vshrl.u32 %v4130, 7
    %v4132 = vsub.s32 0, %v4131
    %v4133 = vrot.slane %v4128, %v4132
    %v4199 = vunpack.c.l.b16 %v4064
    %v4200 = vunpack.c.l.b16 %v4065
    %v4201 = vunpack.c.l.b16 %v4066
    %v4202 = vunpack.c.l.b16 %v4067
    %v4203 = vunpack.c.l.b16 %v4068
    %v4204 = vunpack.c.l.b16 %v4069
    %v4205 = vunpack.c.l.b16 %v4070
    %v4206 = vunpack.c.l.b16 %v4071
    %v4207 = vunpack.c.l.b16 %v4072
    %v4208 = vunpack.c.l.b16 %v4073
    %v4209 = vunpack.c.l.b16 %v4074
    %v4210 = vunpack.c.l.b16 %v4075
    %v4211 = vunpack.c.l.b16 %v4076
    %v4212 = vunpack.c.l.b16 %v4077
    %v4213 = vunpack.c.l.b16 %v4078
    %v4214 = vunpack.c.l.b16 %v4079
    %v4215 = vunpack.c.l.b16 %v4080
    %v4216 = vunpack.c.l.b16 %v4081
    %v4217 = vunpack.c.l.b16 %v4082
    %v4218 = vunpack.c.l.b16 %v4083
    %v4219 = vunpack.c.l.b16 %v4084
    %v4220 = vunpack.c.l.b16 %v4085
    %v4221 = vunpack.c.l.b16 %v4086
    %v4222 = vunpack.c.l.b16 %v4087
    %v4223 = vunpack.c.l.b16 %v4088
    %v4224 = vunpack.c.l.b16 %v4089
    %v4225 = vunpack.c.l.b16 %v4090
    %v4226 = vunpack.c.l.b16 %v4091
    %v4227 = vunpack.c.l.b16 %v4092
    %v4228 = vunpack.c.l.b16 %v4093
    %v4229 = vunpack.c.l.b16 %v4094
    %v4230 = vunpack.c.l.b16 %v4095
    %v4231 = vunpack.c.l.b16 %v4096
    %v4232 = vunpack.c.l.b16 %v4097
    %v4233 = vunpack.c.l.b16 %v4098
    %v4234 = vunpack.c.l.b16 %v4099
    %v4235 = vunpack.c.l.b16 %v4100
    %v4236 = vunpack.c.l.b16 %v4101
    %v4237 = vunpack.c.l.b16 %v4102
    %v4238 = vunpack.c.l.b16 %v4103
    %v4239 = vunpack.c.l.b16 %v4104
    %v4240 = vunpack.c.l.b16 %v4105
    %v4241 = vunpack.c.l.b16 %v4106
    %v4242 = vunpack.c.l.b16 %v4107
    %v4243 = vunpack.c.l.b16 %v4108
    %v4244 = vunpack.c.l.b16 %v4109
    %v4245 = vunpack.c.l.b16 %v4110
    %v4246 = vunpack.c.l.b16 %v4111
    %v4247 = vunpack.c.l.b16 %v4112
    %v4248 = vunpack.c.l.b16 %v4113
    %v4249 = vunpack.c.l.b16 %v4114
    %v4250 = vunpack.c.l.b16 %v4115
    %v4251 = vunpack.c.l.b16 %v4116
    %v4252 = vunpack.c.l.b16 %v4117
    %v4253 = vunpack.c.l.b16 %v4118
    %v4254 = vunpack.c.l.b16 %v4119
    %v4255 = vunpack.c.l.b16 %v4120
    %v4256 = vunpack.c.l.b16 %v4121
    %v4257 = vunpack.c.l.b16 %v4122
    %v4258 = vunpack.c.l.b16 %v4123
    %v4259 = vunpack.c.l.b16 %v4124
    %v4260 = vunpack.c.l.b16 %v4125
    %v4261 = vunpack.c.l.b16 %v4126
    %v4262 = vunpack.c.l.b16 %v4127
    %v4263 = vpack.c.b16 %v4200, %v4199
    %v4264 = vpack.c.b16 %v4202, %v4201
    %v4265 = vpack.c.b16 %v4204, %v4203
    %v4266 = vpack.c.b16 %v4206, %v4205
    %v4267 = vpack.c.b16 %v4208, %v4207
    %v4268 = vpack.c.b16 %v4210, %v4209
    %v4269 = vpack.c.b16 %v4212, %v4211
    %v4270 = vpack.c.b16 %v4214, %v4213
    %v4271 = vpack.c.b16 %v4216, %v4215
    %v4272 = vpack.c.b16 %v4218, %v4217
    %v4273 = vpack.c.b16 %v4220, %v4219
    %v4274 = vpack.c.b16 %v4222, %v4221
    %v4275 = vpack.c.b16 %v4224, %v4223
    %v4276 = vpack.c.b16 %v4226, %v4225
    %v4277 = vpack.c.b16 %v4228, %v4227
    %v4278 = vpack.c.b16 %v4230, %v4229
    %v4279 = vpack.c.b16 %v4232, %v4231
    %v4280 = vpack.c.b16 %v4234, %v4233
    %v4281 = vpack.c.b16 %v4236, %v4235
    %v4282 = vpack.c.b16 %v4238, %v4237
    %v4283 = vpack.c.b16 %v4240, %v4239
    %v4284 = vpack.c.b16 %v4242, %v4241
    %v4285 = vpack.c.b16 %v4244, %v4243
    %v4286 = vpack.c.b16 %v4246, %v4245
    %v4287 = vpack.c.b16 %v4248, %v4247
    %v4288 = vpack.c.b16 %v4250, %v4249
    %v4289 = vpack.c.b16 %v4252, %v4251
    %v4290 = vpack.c.b16 %v4254, %v4253
    %v4291 = vpack.c.b16 %v4256, %v4255
    %v4292 = vpack.c.b16 %v4258, %v4257
    %v4293 = vpack.c.b16 %v4260, %v4259
    %v4294 = vpack.c.b16 %v4262, %v4261
    %4327 = vmatprep.subr.bf16.mxu0 0
    %4328 = vmatpush1.bf16.msra.mxu0 %v4270
    %4329 = vmatprep.subr.bf16.mxu0 0
    %4330 = vmatpush1.bf16.msra.mxu0 %v4269
    %4331 = vmatprep.subr.bf16.mxu0 0
    %4332 = vmatpush1.bf16.msra.mxu0 %v4268
    %4333 = vmatprep.subr.bf16.mxu0 0
    %4334 = vmatpush1.bf16.msra.mxu0 %v4267
    %4335 = vmatprep.subr.bf16.mxu0 0
    %4336 = vmatpush1.bf16.msra.mxu0 %v4266
    %4337 = vmatprep.subr.bf16.mxu0 0
    %4338 = vmatpush1.bf16.msra.mxu0 %v4265
    %4339 = vmatprep.subr.bf16.mxu0 0
    %4340 = vmatpush1.bf16.msra.mxu0 %v4264
    %4341 = vmatprep.subr.bf16.mxu0 0
    %4342 = vmatpush1.bf16.msra.mxu0 %v4263
    %4343 = vmatprep.subr.bf16.mxu0 0
    %4344 = vmatpush2.bf16.msra.mxu0 %v4278
    %4345 = vmatprep.subr.bf16.mxu0 0
    %4346 = vmatpush2.bf16.msra.mxu0 %v4277
    %4347 = vmatprep.subr.bf16.mxu0 0
    %4348 = vmatpush2.bf16.msra.mxu0 %v4276
    %4349 = vmatprep.subr.bf16.mxu0 0
    %4350 = vmatpush2.bf16.msra.mxu0 %v4275
    %4351 = vmatprep.subr.bf16.mxu0 0
    %4352 = vmatpush2.bf16.msra.mxu0 %v4274
    %4353 = vmatprep.subr.bf16.mxu0 0
    %4354 = vmatpush2.bf16.msra.mxu0 %v4273
    %4355 = vmatprep.subr.bf16.mxu0 0
    %4356 = vmatpush2.bf16.msra.mxu0 %v4272
    %4357 = vmatprep.subr.bf16.mxu0 0
    %4358 = vmatpush2.bf16.msra.mxu0 %v4271
    %4359 = vmatprep.mubr.bf16.mxu0 %v4061
    %4360 = vmatmul.mubr.bf16.gmra.mxu0 %v4060
    %v4361 = vpop.f32.mrf.mxu0
    %v4362 = vadd.f32 %v4133, %v4361
    %v4363 = vpop.f32.mrf.mxu0
    %v4364 = vpop.f32.mrf.mxu0
    %v4365 = vadd.f32 %v4133, %v4364
    %v4366 = vpop.f32.mrf.mxu0
    %4367 = vdwg.mxu0
    %4368 = vmatprep.subr.bf16.mxu0 0
    %4369 = vmatpush1.bf16.msra.mxu0 %v4286
    %4370 = vmatprep.subr.bf16.mxu0 0
    %4371 = vmatpush1.bf16.msra.mxu0 %v4285
    %4372 = vmatprep.subr.bf16.mxu0 0
    %4373 = vmatpush1.bf16.msra.mxu0 %v4284
    %4374 = vmatprep.subr.bf16.mxu0 0
    %4375 = vmatpush1.bf16.msra.mxu0 %v4283
    %4376 = vmatprep.subr.bf16.mxu0 0
    %4377 = vmatpush1.bf16.msra.mxu0 %v4282
    %4378 = vmatprep.subr.bf16.mxu0 0
    %4379 = vmatpush1.bf16.msra.mxu0 %v4281
    %4380 = vmatprep.subr.bf16.mxu0 0
    %4381 = vmatpush1.bf16.msra.mxu0 %v4280
    %4382 = vmatprep.subr.bf16.mxu0 0
    %4383 = vmatpush1.bf16.msra.mxu0 %v4279
    %4384 = vmatprep.subr.bf16.mxu0 0
    %4385 = vmatpush2.bf16.msra.mxu0 %v4294
    %4386 = vmatprep.subr.bf16.mxu0 0
    %4387 = vmatpush2.bf16.msra.mxu0 %v4293
    %4388 = vmatprep.subr.bf16.mxu0 0
    %4389 = vmatpush2.bf16.msra.mxu0 %v4292
    %4390 = vmatprep.subr.bf16.mxu0 0
    %4391 = vmatpush2.bf16.msra.mxu0 %v4291
    %4392 = vmatprep.subr.bf16.mxu0 0
    %4393 = vmatpush2.bf16.msra.mxu0 %v4290
    %4394 = vmatprep.subr.bf16.mxu0 0
    %4395 = vmatpush2.bf16.msra.mxu0 %v4289
    %4396 = vmatprep.subr.bf16.mxu0 0
    %4397 = vmatpush2.bf16.msra.mxu0 %v4288
    %4398 = vmatprep.subr.bf16.mxu0 0
    %4399 = vmatpush2.bf16.msra.mxu0 %v4287
    %4400 = vmatprep.mubr.bf16.mxu0 %v4063
    %4401 = vmatmul.mubr.bf16.gmra.mxu0 %v4062
    %v4402 = vpop.f32.mrf.mxu0
    %v4403 = vadd.f32 %v4362, %v4402
    %v4404 = vpop.f32.mrf.mxu0
    %v4405 = vpop.f32.mrf.mxu0
    %v4406 = vadd.f32 %v4365, %v4405
    %v4407 = vpop.f32.mrf.mxu0
    %4408 = vdwg.mxu0
    %v4409 = vpack.c.bf16 %v4406, %v4403
    %v4411 = vunpack.c.l.b16 %v4409
    %v4412 = vunpack.c.h.b16 %v4409
    %v4413 = vpack.c.b16 %v4411, %v4411
    %v4414 = vpack.c.b16 %v4412, %v4412
    %4417 = vst [vmem:[#allocation17] sm:$0xf] %v4413
    %4418 = vst [vmem:[#allocation17 + $0x4] sm:$0xf] %v4414
    // Predicated region
    $region90: #{tpu_custom_call.1} parent=1 // pred_check
      _
    $region91: #{tpu_custom_call.1} parent=1 // pred_check_branch
      %4420 = sbr.rel (0) target = $region93
    $region92: #{tpu_custom_call.1} parent=1 // pred_region
      %s4422 = ssub.s32 128, 128
      %4423 = vsyncadd [#allocation4], %s4422
      %s4424 = sshll.u32 [#allocation17], 4
      %s4425 = int_to_ptr.vmem [resolvable:$true] %s4424
      %4430 = dma.vmem_to_hbm [thread:$0]  %s4425, 128, %s13, [#allocation4], 64, 64, 4
    $region93: #{tpu_custom_call.1} parent=1 // pred_fallthru
      _
    // Predicated region
    $region94: #{tpu_custom_call.1} parent=1 // pred_check
      _
    $region95: #{tpu_custom_call.1} parent=1 // pred_check_branch
      %4432 = sbr.rel (0) target = $region97
    $region96: #{tpu_custom_call.1} parent=1 // pred_region
      %4433 = dma.done [#allocation4], 128
    $region97: #{tpu_custom_call.1} parent=1 // pred_fallthru
      _
    %4434 = vsyncpa [#allocation3], 1
    %4435 = vsyncpa [#allocation6], 1
    %4436 = vsyncpa [#allocation9], 1
    %4437 = vsyncpa [#allocation12], 1
    %4438 = vsyncpa [#allocation15], 1
    %4439 = vsyncpa [#allocation4], 1

</llo_original>
